<compile_context>
chip_gen: v6e
topology: v6e:2x2x1
jax: 0.10.0
libtpu: 0.0.40
codegen_flags: <defaults>
</compile_context>

<pallas_src>
import numpy as np
import jax
import jax.numpy as jnp
from jax import lax
from jax.experimental import pallas as pl
from jax.experimental.pallas import tpu as pltpu


# ------------------------------- fused kernel --------------------------------

def _make_fused_kernel(num_layers, T, B, H):
    """Builds the fused forward kernel for a fixed (num_layers, T, B, H).

    Ref order: x, [w_ih_t, w_hh_t, b] * num_layers, w_fc_t, b_fc   (inputs)
               out                                                 (output)
               hseq_scr (T*B, H), xp_scr (T*B, 4H)                 (scratch)

    x is time-major and flattened: (T*B, D_in), row t*B+b = sample b at step t.
    Weights are pre-transposed: w_ih_t (D_in, 4H), w_hh_t (H, 4H), w_fc_t (H, C).
    Gate order matches PyTorch: [i, f, g, o]; b = b_ih + b_hh.
    """

    def kernel(*refs):
        x_ref = refs[0]
        lrefs = refs[1:1 + 3 * num_layers]
        wfc_ref = refs[1 + 3 * num_layers]
        bfc_ref = refs[2 + 3 * num_layers]
        out_ref = refs[3 + 3 * num_layers]
        hseq_scr = refs[4 + 3 * num_layers]
        xp_scr = refs[5 + 3 * num_layers]

        def run_layer(layer_idx, first_layer):
            wih_ref, whh_ref, b_ref = lrefs[3 * layer_idx:3 * layer_idx + 3]
            is_last = layer_idx == num_layers - 1

            # ---- hoisted input projection (+ bias) for ALL timesteps at once ----
            if first_layer:
                d_in = x_ref.shape[-1]
                if d_in == 1:
                    # (T*B,1) * (1,4H) broadcast == x @ W_ih^T for D_in == 1
                    xp = x_ref[...] * wih_ref[...] + b_ref[...]
                else:
                    xp = jnp.dot(x_ref[...], wih_ref[...],
                                 preferred_element_type=jnp.float32) + b_ref[...]
            else:
                xp = jnp.dot(hseq_scr[...], wih_ref[...],
                             preferred_element_type=jnp.float32) + b_ref[...]
            xp_scr[...] = xp                                   # (T*B, 4H)

            # ---- serial recurrence: only h_prev @ W_hh on the critical path ----
            h = jnp.zeros((B, H), jnp.float32)
            c = jnp.zeros((B, H), jnp.float32)
            for t in range(T):                                 # static full unroll
                gates = xp_scr[t * B:(t + 1) * B, :] + jnp.dot(
                    h, whh_ref[...], preferred_element_type=jnp.float32)
                i_g = jax.nn.sigmoid(gates[:, 0 * H:1 * H])
                f_g = jax.nn.sigmoid(gates[:, 1 * H:2 * H])
                g_g = jnp.tanh(gates[:, 2 * H:3 * H])
                o_g = jax.nn.sigmoid(gates[:, 3 * H:4 * H])
                c = f_g * c + i_g * g_g
                h = o_g * jnp.tanh(c)
                if not is_last:
                    hseq_scr[t * B:(t + 1) * B, :] = h         # feeds next layer
            return h

        h_last = run_layer(0, first_layer=True)
        for l in range(1, num_layers):
            h_last = run_layer(l, first_layer=False)

        # ---- fc + numerically-stable log_softmax on the final hidden state ----
        logits = jnp.dot(h_last, wfc_ref[...],
                         preferred_element_type=jnp.float32) + bfc_ref[...]
        m = jnp.max(logits, axis=-1, keepdims=True)
        shifted = logits - m
        lse = jnp.log(jnp.sum(jnp.exp(shifted), axis=-1, keepdims=True))
        out_ref[...] = shifted - lse

    return kernel


# --------------------------------- wrapper ------------------------------------

def _vmem_spec():
    return pl.BlockSpec(memory_space=pltpu.MemorySpace.VMEM)


def init_params(key, input_size, hidden_dim, num_layers, num_classes):
    """Deterministic parameter init matching nn.LSTM / nn.Linear shapes."""
    k = 1.0 / np.sqrt(hidden_dim)
    params = {"lstm": []}
    for layer in range(num_layers):
        d_in = input_size if layer == 0 else hidden_dim
        key, k1, k2, k3, k4 = jax.random.split(key, 5)
        w_ih = jax.random.uniform(k1, (4 * hidden_dim, d_in), jnp.float32, -k, k)
        w_hh = jax.random.uniform(k2, (4 * hidden_dim, hidden_dim), jnp.float32, -k, k)
        b_ih = jax.random.uniform(k3, (4 * hidden_dim,), jnp.float32, -k, k)
        b_hh = jax.random.uniform(k4, (4 * hidden_dim,), jnp.float32, -k, k)
        params["lstm"].append({
            "w_ih_t": w_ih.T,                 # (d_in, 4H)
            "w_hh_t": w_hh.T,                 # (H, 4H)
            "b": (b_ih + b_hh)[None, :],      # (1, 4H)
        })
    key, k5, k6 = jax.random.split(key, 3)
    w_fc = jax.random.uniform(k5, (num_classes, hidden_dim), jnp.float32, -k, k)
    b_fc = jax.random.uniform(k6, (num_classes,), jnp.float32, -k, k)
    params["fc"] = {"w_t": w_fc.T, "b": b_fc[None, :]}
    return params


@jax.jit
def lstm_classifier_forward(x, params):
    """x: (B, T, D_in) batch_first, like the PyTorch module."""
    B, T, D = x.shape
    H = params["lstm"][0]["w_hh_t"].shape[0]
    C = params["fc"]["w_t"].shape[1]
    num_layers = len(params["lstm"])

    # time-major + flattened (T*B, D): the hoisted projections become one matmul.
    x_flat = jnp.transpose(x, (1, 0, 2)).reshape(T * B, D).astype(jnp.float32)

    args = [x_flat]
    for lp in params["lstm"]:
        args += [lp["w_ih_t"], lp["w_hh_t"], lp["b"]]
    args += [params["fc"]["w_t"], params["fc"]["b"]]

    # nn.Dropout is the identity in eval/inference mode (deterministic forward).
    # TODO(synk): training-mode dropout (between LSTM layers + before fc) not applied.
    return pl.pallas_call(
        _make_fused_kernel(num_layers, T, B, H),
        out_shape=jax.ShapeDtypeStruct((B, C), jnp.float32),
        in_specs=[_vmem_spec()] * len(args),
        out_specs=_vmem_spec(),
        scratch_shapes=[pltpu.VMEM((T * B, H), jnp.float32),      # layer-l hidden seq
                        pltpu.VMEM((T * B, 4 * H), jnp.float32)], # hoisted gate proj
    )(*args)


# -------------------------------- reference -----------------------------------

def reference_forward(x, params):
    def layer(seq, lp):
        H = lp["w_hh_t"].shape[0]
        B = seq.shape[1]

        def step(carry, x_t):
            h, c = carry
            gates = x_t @ lp["w_ih_t"] + h @ lp["w_hh_t"] + lp["b"]
            i = jax.nn.sigmoid(gates[:, :H])
            f = jax.nn.sigmoid(gates[:, H:2 * H])
            g = jnp.tanh(gates[:, 2 * H:3 * H])
            o = jax.nn.sigmoid(gates[:, 3 * H:])
            c = f * c + i * g
            h = o * jnp.tanh(c)
            return (h, c), h

        h0 = jnp.zeros((B, H), jnp.float32)
        _, hs = lax.scan(step, (h0, h0), seq)
        return hs

    seq = jnp.transpose(x, (1, 0, 2)).astype(jnp.float32)
    for lp in params["lstm"]:
        seq = layer(seq, lp)
    logits = seq[-1] @ params["fc"]["w_t"] + params["fc"]["b"]
    return jax.nn.log_softmax(logits, axis=-1)


# ---------------------------------- main ---------------------------------------

if __name__ == "__main__":
    B, T, D_in = 8, 8, 1           # batch, seq_len, input_size (module default input_size=1)
    H, L, C = 128, 2, 3            # hidden_dim, num_layers, num_classes (module defaults)

    key = jax.random.PRNGKey(0)
    kx, kp = jax.random.split(key)
    x = jax.random.normal(kx, (B, T, D_in), jnp.float32)
    params = init_params(kp, D_in, H, L, C)

    out = lstm_classifier_forward(x, params)
    out = jax.block_until_ready(out)

    ref = reference_forward(x, params)
    np.testing.assert_allclose(np.asarray(out), np.asarray(ref),
                               atol=1e-5, rtol=1e-5)
    print("KERNEL_OK")
</pallas_src>

<mosaic_0001>
module attributes {stable_mosaic.version = 11 : i64} {
  func.func @kernel(%arg0: memref<64x1xf32, #tpu.memory_space<vmem>>, %arg1: memref<1x512xf32, #tpu.memory_space<vmem>>, %arg2: memref<128x512xf32, #tpu.memory_space<vmem>>, %arg3: memref<1x512xf32, #tpu.memory_space<vmem>>, %arg4: memref<128x512xf32, #tpu.memory_space<vmem>>, %arg5: memref<128x512xf32, #tpu.memory_space<vmem>>, %arg6: memref<1x512xf32, #tpu.memory_space<vmem>>, %arg7: memref<128x3xf32, #tpu.memory_space<vmem>>, %arg8: memref<1x3xf32, #tpu.memory_space<vmem>>, %arg9: memref<8x3xf32, #tpu.memory_space<vmem>>, %arg10: memref<64x128xf32, #tpu.memory_space<vmem>>, %arg11: memref<64x512xf32, #tpu.memory_space<vmem>>) attributes {dimension_semantics = [], scalar_prefetch = 0 : i64, scratch_operands = 2 : i64, tpu.core_type = #tpu.core_type<tc>} {
    %c0 = arith.constant 0 : index
    %c0_0 = arith.constant 0 : index
    %0 = vector.load %arg0[%c0, %c0_0] : memref<64x1xf32, #tpu.memory_space<vmem>>, vector<64x1xf32>
    %c0_1 = arith.constant 0 : index
    %c0_2 = arith.constant 0 : index
    %1 = vector.load %arg1[%c0_1, %c0_2] : memref<1x512xf32, #tpu.memory_space<vmem>>, vector<1x512xf32>
    %2 = vector.broadcast %0 : vector<64x1xf32> to vector<64x512xf32>
    %3 = vector.broadcast %1 : vector<1x512xf32> to vector<64x512xf32>
    %4 = arith.mulf %2, %3 : vector<64x512xf32>
    %c0_3 = arith.constant 0 : index
    %c0_4 = arith.constant 0 : index
    %5 = vector.load %arg3[%c0_3, %c0_4] : memref<1x512xf32, #tpu.memory_space<vmem>>, vector<1x512xf32>
    %6 = vector.broadcast %5 : vector<1x512xf32> to vector<64x512xf32>
    %7 = arith.addf %4, %6 : vector<64x512xf32>
    %c0_5 = arith.constant 0 : index
    %c0_6 = arith.constant 0 : index
    %8 = vector.load %arg11[%c0_5, %c0_6] : memref<64x512xf32, #tpu.memory_space<vmem>>, vector<64x512xf32>
    tpu.vector_store %arg11[%c0_5, %c0_6], %7 {strides = array<i32>} : memref<64x512xf32, #tpu.memory_space<vmem>>, vector<64x512xf32>,
    %cst = arith.constant 0.000000e+00 : f32
    %9 = vector.broadcast %cst : f32 to vector<8x128xf32>
    %cst_7 = arith.constant 0.000000e+00 : f32
    %10 = vector.broadcast %cst_7 : f32 to vector<8x128xf32>
    %c0_8 = arith.constant 0 : index
    %c0_9 = arith.constant 0 : index
    %11 = vector.load %arg11[%c0_8, %c0_9] : memref<64x512xf32, #tpu.memory_space<vmem>>, vector<8x512xf32>
    %c0_10 = arith.constant 0 : index
    %c0_11 = arith.constant 0 : index
    %12 = vector.load %arg2[%c0_10, %c0_11] : memref<128x512xf32, #tpu.memory_space<vmem>>, vector<128x512xf32>
    %cst_12 = arith.constant dense<0.000000e+00> : vector<8x512xf32>
    %13 = tpu.matmul %9, %12, %cst_12 {dimension_numbers = #tpu.dot_dimension_numbers<[1], [0], [0], [1], [0, 0, 1, 1], [], []>} : vector<8x128xf32>, vector<128x512xf32>, vector<8x512xf32> -> vector<8x512xf32>
    %14 = arith.addf %11, %13 : vector<8x512xf32>
    %15 = vector.extract_strided_slice %14 {offsets = [0, 0], sizes = [8, 128], strides = [1, 1]} : vector<8x512xf32> to vector<8x128xf32>
    %16 = arith.negf %15 : vector<8x128xf32>
    %17 = math.exp %16 : vector<8x128xf32>
    %cst_13 = arith.constant 1.000000e+00 : f32
    %18 = vector.broadcast %cst_13 : f32 to vector<8x128xf32>
    %19 = arith.addf %18, %17 : vector<8x128xf32>
    %20 = arith.divf %18, %19 : vector<8x128xf32>
    %21 = vector.extract_strided_slice %14 {offsets = [0, 128], sizes = [8, 128], strides = [1, 1]} : vector<8x512xf32> to vector<8x128xf32>
    %22 = arith.negf %21 : vector<8x128xf32>
    %23 = math.exp %22 : vector<8x128xf32>
    %cst_14 = arith.constant 1.000000e+00 : f32
    %24 = vector.broadcast %cst_14 : f32 to vector<8x128xf32>
    %25 = arith.addf %24, %23 : vector<8x128xf32>
    %26 = arith.divf %24, %25 : vector<8x128xf32>
    %27 = vector.extract_strided_slice %14 {offsets = [0, 256], sizes = [8, 128], strides = [1, 1]} : vector<8x512xf32> to vector<8x128xf32>
    %28 = math.tanh %27 : vector<8x128xf32>
    %29 = vector.extract_strided_slice %14 {offsets = [0, 384], sizes = [8, 128], strides = [1, 1]} : vector<8x512xf32> to vector<8x128xf32>
    %30 = arith.negf %29 : vector<8x128xf32>
    %31 = math.exp %30 : vector<8x128xf32>
    %cst_15 = arith.constant 1.000000e+00 : f32
    %32 = vector.broadcast %cst_15 : f32 to vector<8x128xf32>
    %33 = arith.addf %32, %31 : vector<8x128xf32>
    %34 = arith.divf %32, %33 : vector<8x128xf32>
    %35 = arith.mulf %26, %10 : vector<8x128xf32>
    %36 = arith.mulf %20, %28 : vector<8x128xf32>
    %37 = arith.addf %35, %36 : vector<8x128xf32>
    %38 = math.tanh %37 : vector<8x128xf32>
    %39 = arith.mulf %34, %38 : vector<8x128xf32>
    %c0_16 = arith.constant 0 : index
    %c0_17 = arith.constant 0 : index
    %40 = vector.load %arg10[%c0_16, %c0_17] : memref<64x128xf32, #tpu.memory_space<vmem>>, vector<8x128xf32>
    tpu.vector_store %arg10[%c0_16, %c0_17], %39 {strides = array<i32>} : memref<64x128xf32, #tpu.memory_space<vmem>>, vector<8x128xf32>,
    %c8 = arith.constant 8 : index
    %c0_18 = arith.constant 0 : index
    %41 = vector.load %arg11[%c8, %c0_18] : memref<64x512xf32, #tpu.memory_space<vmem>>, vector<8x512xf32>
    %c0_19 = arith.constant 0 : index
    %c0_20 = arith.constant 0 : index
    %42 = vector.load %arg2[%c0_19, %c0_20] : memref<128x512xf32, #tpu.memory_space<vmem>>, vector<128x512xf32>
    %cst_21 = arith.constant dense<0.000000e+00> : vector<8x512xf32>
    %43 = tpu.matmul %39, %42, %cst_21 {dimension_numbers = #tpu.dot_dimension_numbers<[1], [0], [0], [1], [0, 0, 1, 1], [], []>} : vector<8x128xf32>, vector<128x512xf32>, vector<8x512xf32> -> vector<8x512xf32>
    %44 = arith.addf %41, %43 : vector<8x512xf32>
    %45 = vector.extract_strided_slice %44 {offsets = [0, 0], sizes = [8, 128], strides = [1, 1]} : vector<8x512xf32> to vector<8x128xf32>
    %46 = arith.negf %45 : vector<8x128xf32>
    %47 = math.exp %46 : vector<8x128xf32>
    %cst_22 = arith.constant 1.000000e+00 : f32
    %48 = vector.broadcast %cst_22 : f32 to vector<8x128xf32>
    %49 = arith.addf %48, %47 : vector<8x128xf32>
    %50 = arith.divf %48, %49 : vector<8x128xf32>
    %51 = vector.extract_strided_slice %44 {offsets = [0, 128], sizes = [8, 128], strides = [1, 1]} : vector<8x512xf32> to vector<8x128xf32>
    %52 = arith.negf %51 : vector<8x128xf32>
    %53 = math.exp %52 : vector<8x128xf32>
    %cst_23 = arith.constant 1.000000e+00 : f32
    %54 = vector.broadcast %cst_23 : f32 to vector<8x128xf32>
    %55 = arith.addf %54, %53 : vector<8x128xf32>
    %56 = arith.divf %54, %55 : vector<8x128xf32>
    %57 = vector.extract_strided_slice %44 {offsets = [0, 256], sizes = [8, 128], strides = [1, 1]} : vector<8x512xf32> to vector<8x128xf32>
    %58 = math.tanh %57 : vector<8x128xf32>
    %59 = vector.extract_strided_slice %44 {offsets = [0, 384], sizes = [8, 128], strides = [1, 1]} : vector<8x512xf32> to vector<8x128xf32>
    %60 = arith.negf %59 : vector<8x128xf32>
    %61 = math.exp %60 : vector<8x128xf32>
    %cst_24 = arith.constant 1.000000e+00 : f32
    %62 = vector.broadcast %cst_24 : f32 to vector<8x128xf32>
    %63 = arith.addf %62, %61 : vector<8x128xf32>
    %64 = arith.divf %62, %63 : vector<8x128xf32>
    %65 = arith.mulf %56, %37 : vector<8x128xf32>
    %66 = arith.mulf %50, %58 : vector<8x128xf32>
    %67 = arith.addf %65, %66 : vector<8x128xf32>
    %68 = math.tanh %67 : vector<8x128xf32>
    %69 = arith.mulf %64, %68 : vector<8x128xf32>
    %c8_25 = arith.constant 8 : index
    %c0_26 = arith.constant 0 : index
    %70 = vector.load %arg10[%c8_25, %c0_26] : memref<64x128xf32, #tpu.memory_space<vmem>>, vector<8x128xf32>
    tpu.vector_store %arg10[%c8_25, %c0_26], %69 {strides = array<i32>} : memref<64x128xf32, #tpu.memory_space<vmem>>, vector<8x128xf32>,
    %c16 = arith.constant 16 : index
    %c0_27 = arith.constant 0 : index
    %71 = vector.load %arg11[%c16, %c0_27] : memref<64x512xf32, #tpu.memory_space<vmem>>, vector<8x512xf32>
    %c0_28 = arith.constant 0 : index
    %c0_29 = arith.constant 0 : index
    %72 = vector.load %arg2[%c0_28, %c0_29] : memref<128x512xf32, #tpu.memory_space<vmem>>, vector<128x512xf32>
    %cst_30 = arith.constant dense<0.000000e+00> : vector<8x512xf32>
    %73 = tpu.matmul %69, %72, %cst_30 {dimension_numbers = #tpu.dot_dimension_numbers<[1], [0], [0], [1], [0, 0, 1, 1], [], []>} : vector<8x128xf32>, vector<128x512xf32>, vector<8x512xf32> -> vector<8x512xf32>
    %74 = arith.addf %71, %73 : vector<8x512xf32>
    %75 = vector.extract_strided_slice %74 {offsets = [0, 0], sizes = [8, 128], strides = [1, 1]} : vector<8x512xf32> to vector<8x128xf32>
    %76 = arith.negf %75 : vector<8x128xf32>
    %77 = math.exp %76 : vector<8x128xf32>
    %cst_31 = arith.constant 1.000000e+00 : f32
    %78 = vector.broadcast %cst_31 : f32 to vector<8x128xf32>
    %79 = arith.addf %78, %77 : vector<8x128xf32>
    %80 = arith.divf %78, %79 : vector<8x128xf32>
    %81 = vector.extract_strided_slice %74 {offsets = [0, 128], sizes = [8, 128], strides = [1, 1]} : vector<8x512xf32> to vector<8x128xf32>
    %82 = arith.negf %81 : vector<8x128xf32>
    %83 = math.exp %82 : vector<8x128xf32>
    %cst_32 = arith.constant 1.000000e+00 : f32
    %84 = vector.broadcast %cst_32 : f32 to vector<8x128xf32>
    %85 = arith.addf %84, %83 : vector<8x128xf32>
    %86 = arith.divf %84, %85 : vector<8x128xf32>
    %87 = vector.extract_strided_slice %74 {offsets = [0, 256], sizes = [8, 128], strides = [1, 1]} : vector<8x512xf32> to vector<8x128xf32>
    %88 = math.tanh %87 : vector<8x128xf32>
    %89 = vector.extract_strided_slice %74 {offsets = [0, 384], sizes = [8, 128], strides = [1, 1]} : vector<8x512xf32> to vector<8x128xf32>
    %90 = arith.negf %89 : vector<8x128xf32>
    %91 = math.exp %90 : vector<8x128xf32>
    %cst_33 = arith.constant 1.000000e+00 : f32
    %92 = vector.broadcast %cst_33 : f32 to vector<8x128xf32>
    %93 = arith.addf %92, %91 : vector<8x128xf32>
    %94 = arith.divf %92, %93 : vector<8x128xf32>
    %95 = arith.mulf %86, %67 : vector<8x128xf32>
    %96 = arith.mulf %80, %88 : vector<8x128xf32>
    %97 = arith.addf %95, %96 : vector<8x128xf32>
    %98 = math.tanh %97 : vector<8x128xf32>
    %99 = arith.mulf %94, %98 : vector<8x128xf32>
    %c16_34 = arith.constant 16 : index
    %c0_35 = arith.constant 0 : index
    %100 = vector.load %arg10[%c16_34, %c0_35] : memref<64x128xf32, #tpu.memory_space<vmem>>, vector<8x128xf32>
    tpu.vector_store %arg10[%c16_34, %c0_35], %99 {strides = array<i32>} : memref<64x128xf32, #tpu.memory_space<vmem>>, vector<8x128xf32>,
    %c24 = arith.constant 24 : index
    %c0_36 = arith.constant 0 : index
    %101 = vector.load %arg11[%c24, %c0_36] : memref<64x512xf32, #tpu.memory_space<vmem>>, vector<8x512xf32>
    %c0_37 = arith.constant 0 : index
    %c0_38 = arith.constant 0 : index
    %102 = vector.load %arg2[%c0_37, %c0_38] : memref<128x512xf32, #tpu.memory_space<vmem>>, vector<128x512xf32>
    %cst_39 = arith.constant dense<0.000000e+00> : vector<8x512xf32>
    %103 = tpu.matmul %99, %102, %cst_39 {dimension_numbers = #tpu.dot_dimension_numbers<[1], [0], [0], [1], [0, 0, 1, 1], [], []>} : vector<8x128xf32>, vector<128x512xf32>, vector<8x512xf32> -> vector<8x512xf32>
    %104 = arith.addf %101, %103 : vector<8x512xf32>
    %105 = vector.extract_strided_slice %104 {offsets = [0, 0], sizes = [8, 128], strides = [1, 1]} : vector<8x512xf32> to vector<8x128xf32>
    %106 = arith.negf %105 : vector<8x128xf32>
    %107 = math.exp %106 : vector<8x128xf32>
    %cst_40 = arith.constant 1.000000e+00 : f32
    %108 = vector.broadcast %cst_40 : f32 to vector<8x128xf32>
    %109 = arith.addf %108, %107 : vector<8x128xf32>
    %110 = arith.divf %108, %109 : vector<8x128xf32>
    %111 = vector.extract_strided_slice %104 {offsets = [0, 128], sizes = [8, 128], strides = [1, 1]} : vector<8x512xf32> to vector<8x128xf32>
    %112 = arith.negf %111 : vector<8x128xf32>
    %113 = math.exp %112 : vector<8x128xf32>
    %cst_41 = arith.constant 1.000000e+00 : f32
    %114 = vector.broadcast %cst_41 : f32 to vector<8x128xf32>
    %115 = arith.addf %114, %113 : vector<8x128xf32>
    %116 = arith.divf %114, %115 : vector<8x128xf32>
    %117 = vector.extract_strided_slice %104 {offsets = [0, 256], sizes = [8, 128], strides = [1, 1]} : vector<8x512xf32> to vector<8x128xf32>
    %118 = math.tanh %117 : vector<8x128xf32>
    %119 = vector.extract_strided_slice %104 {offsets = [0, 384], sizes = [8, 128], strides = [1, 1]} : vector<8x512xf32> to vector<8x128xf32>
    %120 = arith.negf %119 : vector<8x128xf32>
    %121 = math.exp %120 : vector<8x128xf32>
    %cst_42 = arith.constant 1.000000e+00 : f32
    %122 = vector.broadcast %cst_42 : f32 to vector<8x128xf32>
    %123 = arith.addf %122, %121 : vector<8x128xf32>
    %124 = arith.divf %122, %123 : vector<8x128xf32>
    %125 = arith.mulf %116, %97 : vector<8x128xf32>
    %126 = arith.mulf %110, %118 : vector<8x128xf32>
    %127 = arith.addf %125, %126 : vector<8x128xf32>
    %128 = math.tanh %127 : vector<8x128xf32>
    %129 = arith.mulf %124, %128 : vector<8x128xf32>
    %c24_43 = arith.constant 24 : index
    %c0_44 = arith.constant 0 : index
    %130 = vector.load %arg10[%c24_43, %c0_44] : memref<64x128xf32, #tpu.memory_space<vmem>>, vector<8x128xf32>
    tpu.vector_store %arg10[%c24_43, %c0_44], %129 {strides = array<i32>} : memref<64x128xf32, #tpu.memory_space<vmem>>, vector<8x128xf32>,
    %c32 = arith.constant 32 : index
    %c0_45 = arith.constant 0 : index
    %131 = vector.load %arg11[%c32, %c0_45] : memref<64x512xf32, #tpu.memory_space<vmem>>, vector<8x512xf32>
    %c0_46 = arith.constant 0 : index
    %c0_47 = arith.constant 0 : index
    %132 = vector.load %arg2[%c0_46, %c0_47] : memref<128x512xf32, #tpu.memory_space<vmem>>, vector<128x512xf32>
    %cst_48 = arith.constant dense<0.000000e+00> : vector<8x512xf32>
    %133 = tpu.matmul %129, %132, %cst_48 {dimension_numbers = #tpu.dot_dimension_numbers<[1], [0], [0], [1], [0, 0, 1, 1], [], []>} : vector<8x128xf32>, vector<128x512xf32>, vector<8x512xf32> -> vector<8x512xf32>
    %134 = arith.addf %131, %133 : vector<8x512xf32>
    %135 = vector.extract_strided_slice %134 {offsets = [0, 0], sizes = [8, 128], strides = [1, 1]} : vector<8x512xf32> to vector<8x128xf32>
    %136 = arith.negf %135 : vector<8x128xf32>
    %137 = math.exp %136 : vector<8x128xf32>
    %cst_49 = arith.constant 1.000000e+00 : f32
    %138 = vector.broadcast %cst_49 : f32 to vector<8x128xf32>
    %139 = arith.addf %138, %137 : vector<8x128xf32>
    %140 = arith.divf %138, %139 : vector<8x128xf32>
    %141 = vector.extract_strided_slice %134 {offsets = [0, 128], sizes = [8, 128], strides = [1, 1]} : vector<8x512xf32> to vector<8x128xf32>
    %142 = arith.negf %141 : vector<8x128xf32>
    %143 = math.exp %142 : vector<8x128xf32>
    %cst_50 = arith.constant 1.000000e+00 : f32
    %144 = vector.broadcast %cst_50 : f32 to vector<8x128xf32>
    %145 = arith.addf %144, %143 : vector<8x128xf32>
    %146 = arith.divf %144, %145 : vector<8x128xf32>
    %147 = vector.extract_strided_slice %134 {offsets = [0, 256], sizes = [8, 128], strides = [1, 1]} : vector<8x512xf32> to vector<8x128xf32>
    %148 = math.tanh %147 : vector<8x128xf32>
    %149 = vector.extract_strided_slice %134 {offsets = [0, 384], sizes = [8, 128], strides = [1, 1]} : vector<8x512xf32> to vector<8x128xf32>
    %150 = arith.negf %149 : vector<8x128xf32>
    %151 = math.exp %150 : vector<8x128xf32>
    %cst_51 = arith.constant 1.000000e+00 : f32
    %152 = vector.broadcast %cst_51 : f32 to vector<8x128xf32>
    %153 = arith.addf %152, %151 : vector<8x128xf32>
    %154 = arith.divf %152, %153 : vector<8x128xf32>
    %155 = arith.mulf %146, %127 : vector<8x128xf32>
    %156 = arith.mulf %140, %148 : vector<8x128xf32>
    %157 = arith.addf %155, %156 : vector<8x128xf32>
    %158 = math.tanh %157 : vector<8x128xf32>
    %159 = arith.mulf %154, %158 : vector<8x128xf32>
    %c32_52 = arith.constant 32 : index
    %c0_53 = arith.constant 0 : index
    %160 = vector.load %arg10[%c32_52, %c0_53] : memref<64x128xf32, #tpu.memory_space<vmem>>, vector<8x128xf32>
    tpu.vector_store %arg10[%c32_52, %c0_53], %159 {strides = array<i32>} : memref<64x128xf32, #tpu.memory_space<vmem>>, vector<8x128xf32>,
    %c40 = arith.constant 40 : index
    %c0_54 = arith.constant 0 : index
    %161 = vector.load %arg11[%c40, %c0_54] : memref<64x512xf32, #tpu.memory_space<vmem>>, vector<8x512xf32>
    %c0_55 = arith.constant 0 : index
    %c0_56 = arith.constant 0 : index
    %162 = vector.load %arg2[%c0_55, %c0_56] : memref<128x512xf32, #tpu.memory_space<vmem>>, vector<128x512xf32>
    %cst_57 = arith.constant dense<0.000000e+00> : vector<8x512xf32>
    %163 = tpu.matmul %159, %162, %cst_57 {dimension_numbers = #tpu.dot_dimension_numbers<[1], [0], [0], [1], [0, 0, 1, 1], [], []>} : vector<8x128xf32>, vector<128x512xf32>, vector<8x512xf32> -> vector<8x512xf32>
    %164 = arith.addf %161, %163 : vector<8x512xf32>
    %165 = vector.extract_strided_slice %164 {offsets = [0, 0], sizes = [8, 128], strides = [1, 1]} : vector<8x512xf32> to vector<8x128xf32>
    %166 = arith.negf %165 : vector<8x128xf32>
    %167 = math.exp %166 : vector<8x128xf32>
    %cst_58 = arith.constant 1.000000e+00 : f32
    %168 = vector.broadcast %cst_58 : f32 to vector<8x128xf32>
    %169 = arith.addf %168, %167 : vector<8x128xf32>
    %170 = arith.divf %168, %169 : vector<8x128xf32>
    %171 = vector.extract_strided_slice %164 {offsets = [0, 128], sizes = [8, 128], strides = [1, 1]} : vector<8x512xf32> to vector<8x128xf32>
    %172 = arith.negf %171 : vector<8x128xf32>
    %173 = math.exp %172 : vector<8x128xf32>
    %cst_59 = arith.constant 1.000000e+00 : f32
    %174 = vector.broadcast %cst_59 : f32 to vector<8x128xf32>
    %175 = arith.addf %174, %173 : vector<8x128xf32>
    %176 = arith.divf %174, %175 : vector<8x128xf32>
    %177 = vector.extract_strided_slice %164 {offsets = [0, 256], sizes = [8, 128], strides = [1, 1]} : vector<8x512xf32> to vector<8x128xf32>
    %178 = math.tanh %177 : vector<8x128xf32>
    %179 = vector.extract_strided_slice %164 {offsets = [0, 384], sizes = [8, 128], strides = [1, 1]} : vector<8x512xf32> to vector<8x128xf32>
    %180 = arith.negf %179 : vector<8x128xf32>
    %181 = math.exp %180 : vector<8x128xf32>
    %cst_60 = arith.constant 1.000000e+00 : f32
    %182 = vector.broadcast %cst_60 : f32 to vector<8x128xf32>
    %183 = arith.addf %182, %181 : vector<8x128xf32>
    %184 = arith.divf %182, %183 : vector<8x128xf32>
    %185 = arith.mulf %176, %157 : vector<8x128xf32>
    %186 = arith.mulf %170, %178 : vector<8x128xf32>
    %187 = arith.addf %185, %186 : vector<8x128xf32>
    %188 = math.tanh %187 : vector<8x128xf32>
    %189 = arith.mulf %184, %188 : vector<8x128xf32>
    %c40_61 = arith.constant 40 : index
    %c0_62 = arith.constant 0 : index
    %190 = vector.load %arg10[%c40_61, %c0_62] : memref<64x128xf32, #tpu.memory_space<vmem>>, vector<8x128xf32>
    tpu.vector_store %arg10[%c40_61, %c0_62], %189 {strides = array<i32>} : memref<64x128xf32, #tpu.memory_space<vmem>>, vector<8x128xf32>,
    %c48 = arith.constant 48 : index
    %c0_63 = arith.constant 0 : index
    %191 = vector.load %arg11[%c48, %c0_63] : memref<64x512xf32, #tpu.memory_space<vmem>>, vector<8x512xf32>
    %c0_64 = arith.constant 0 : index
    %c0_65 = arith.constant 0 : index
    %192 = vector.load %arg2[%c0_64, %c0_65] : memref<128x512xf32, #tpu.memory_space<vmem>>, vector<128x512xf32>
    %cst_66 = arith.constant dense<0.000000e+00> : vector<8x512xf32>
    %193 = tpu.matmul %189, %192, %cst_66 {dimension_numbers = #tpu.dot_dimension_numbers<[1], [0], [0], [1], [0, 0, 1, 1], [], []>} : vector<8x128xf32>, vector<128x512xf32>, vector<8x512xf32> -> vector<8x512xf32>
    %194 = arith.addf %191, %193 : vector<8x512xf32>
    %195 = vector.extract_strided_slice %194 {offsets = [0, 0], sizes = [8, 128], strides = [1, 1]} : vector<8x512xf32> to vector<8x128xf32>
    %196 = arith.negf %195 : vector<8x128xf32>
    %197 = math.exp %196 : vector<8x128xf32>
    %cst_67 = arith.constant 1.000000e+00 : f32
    %198 = vector.broadcast %cst_67 : f32 to vector<8x128xf32>
    %199 = arith.addf %198, %197 : vector<8x128xf32>
    %200 = arith.divf %198, %199 : vector<8x128xf32>
    %201 = vector.extract_strided_slice %194 {offsets = [0, 128], sizes = [8, 128], strides = [1, 1]} : vector<8x512xf32> to vector<8x128xf32>
    %202 = arith.negf %201 : vector<8x128xf32>
    %203 = math.exp %202 : vector<8x128xf32>
    %cst_68 = arith.constant 1.000000e+00 : f32
    %204 = vector.broadcast %cst_68 : f32 to vector<8x128xf32>
    %205 = arith.addf %204, %203 : vector<8x128xf32>
    %206 = arith.divf %204, %205 : vector<8x128xf32>
    %207 = vector.extract_strided_slice %194 {offsets = [0, 256], sizes = [8, 128], strides = [1, 1]} : vector<8x512xf32> to vector<8x128xf32>
    %208 = math.tanh %207 : vector<8x128xf32>
    %209 = vector.extract_strided_slice %194 {offsets = [0, 384], sizes = [8, 128], strides = [1, 1]} : vector<8x512xf32> to vector<8x128xf32>
    %210 = arith.negf %209 : vector<8x128xf32>
    %211 = math.exp %210 : vector<8x128xf32>
    %cst_69 = arith.constant 1.000000e+00 : f32
    %212 = vector.broadcast %cst_69 : f32 to vector<8x128xf32>
    %213 = arith.addf %212, %211 : vector<8x128xf32>
    %214 = arith.divf %212, %213 : vector<8x128xf32>
    %215 = arith.mulf %206, %187 : vector<8x128xf32>
    %216 = arith.mulf %200, %208 : vector<8x128xf32>
    %217 = arith.addf %215, %216 : vector<8x128xf32>
    %218 = math.tanh %217 : vector<8x128xf32>
    %219 = arith.mulf %214, %218 : vector<8x128xf32>
    %c48_70 = arith.constant 48 : index
    %c0_71 = arith.constant 0 : index
    %220 = vector.load %arg10[%c48_70, %c0_71] : memref<64x128xf32, #tpu.memory_space<vmem>>, vector<8x128xf32>
    tpu.vector_store %arg10[%c48_70, %c0_71], %219 {strides = array<i32>} : memref<64x128xf32, #tpu.memory_space<vmem>>, vector<8x128xf32>,
    %c56 = arith.constant 56 : index
    %c0_72 = arith.constant 0 : index
    %221 = vector.load %arg11[%c56, %c0_72] : memref<64x512xf32, #tpu.memory_space<vmem>>, vector<8x512xf32>
    %c0_73 = arith.constant 0 : index
    %c0_74 = arith.constant 0 : index
    %222 = vector.load %arg2[%c0_73, %c0_74] : memref<128x512xf32, #tpu.memory_space<vmem>>, vector<128x512xf32>
    %cst_75 = arith.constant dense<0.000000e+00> : vector<8x512xf32>
    %223 = tpu.matmul %219, %222, %cst_75 {dimension_numbers = #tpu.dot_dimension_numbers<[1], [0], [0], [1], [0, 0, 1, 1], [], []>} : vector<8x128xf32>, vector<128x512xf32>, vector<8x512xf32> -> vector<8x512xf32>
    %224 = arith.addf %221, %223 : vector<8x512xf32>
    %225 = vector.extract_strided_slice %224 {offsets = [0, 0], sizes = [8, 128], strides = [1, 1]} : vector<8x512xf32> to vector<8x128xf32>
    %226 = arith.negf %225 : vector<8x128xf32>
    %227 = math.exp %226 : vector<8x128xf32>
    %cst_76 = arith.constant 1.000000e+00 : f32
    %228 = vector.broadcast %cst_76 : f32 to vector<8x128xf32>
    %229 = arith.addf %228, %227 : vector<8x128xf32>
    %230 = arith.divf %228, %229 : vector<8x128xf32>
    %231 = vector.extract_strided_slice %224 {offsets = [0, 128], sizes = [8, 128], strides = [1, 1]} : vector<8x512xf32> to vector<8x128xf32>
    %232 = arith.negf %231 : vector<8x128xf32>
    %233 = math.exp %232 : vector<8x128xf32>
    %cst_77 = arith.constant 1.000000e+00 : f32
    %234 = vector.broadcast %cst_77 : f32 to vector<8x128xf32>
    %235 = arith.addf %234, %233 : vector<8x128xf32>
    %236 = arith.divf %234, %235 : vector<8x128xf32>
    %237 = vector.extract_strided_slice %224 {offsets = [0, 256], sizes = [8, 128], strides = [1, 1]} : vector<8x512xf32> to vector<8x128xf32>
    %238 = math.tanh %237 : vector<8x128xf32>
    %239 = vector.extract_strided_slice %224 {offsets = [0, 384], sizes = [8, 128], strides = [1, 1]} : vector<8x512xf32> to vector<8x128xf32>
    %240 = arith.negf %239 : vector<8x128xf32>
    %241 = math.exp %240 : vector<8x128xf32>
    %cst_78 = arith.constant 1.000000e+00 : f32
    %242 = vector.broadcast %cst_78 : f32 to vector<8x128xf32>
    %243 = arith.addf %242, %241 : vector<8x128xf32>
    %244 = arith.divf %242, %243 : vector<8x128xf32>
    %245 = arith.mulf %236, %217 : vector<8x128xf32>
    %246 = arith.mulf %230, %238 : vector<8x128xf32>
    %247 = arith.addf %245, %246 : vector<8x128xf32>
    %248 = math.tanh %247 : vector<8x128xf32>
    %249 = arith.mulf %244, %248 : vector<8x128xf32>
    %c56_79 = arith.constant 56 : index
    %c0_80 = arith.constant 0 : index
    %250 = vector.load %arg10[%c56_79, %c0_80] : memref<64x128xf32, #tpu.memory_space<vmem>>, vector<8x128xf32>
    tpu.vector_store %arg10[%c56_79, %c0_80], %249 {strides = array<i32>} : memref<64x128xf32, #tpu.memory_space<vmem>>, vector<8x128xf32>,
    %c0_81 = arith.constant 0 : index
    %c0_82 = arith.constant 0 : index
    %251 = vector.load %arg10[%c0_81, %c0_82] : memref<64x128xf32, #tpu.memory_space<vmem>>, vector<64x128xf32>
    %c0_83 = arith.constant 0 : index
    %c0_84 = arith.constant 0 : index
    %252 = vector.load %arg4[%c0_83, %c0_84] : memref<128x512xf32, #tpu.memory_space<vmem>>, vector<128x512xf32>
    %cst_85 = arith.constant dense<0.000000e+00> : vector<64x512xf32>
    %253 = tpu.matmul %251, %252, %cst_85 {dimension_numbers = #tpu.dot_dimension_numbers<[1], [0], [0], [1], [0, 0, 1, 1], [], []>} : vector<64x128xf32>, vector<128x512xf32>, vector<64x512xf32> -> vector<64x512xf32>
    %c0_86 = arith.constant 0 : index
    %c0_87 = arith.constant 0 : index
    %254 = vector.load %arg6[%c0_86, %c0_87] : memref<1x512xf32, #tpu.memory_space<vmem>>, vector<1x512xf32>
    %255 = vector.broadcast %254 : vector<1x512xf32> to vector<64x512xf32>
    %256 = arith.addf %253, %255 : vector<64x512xf32>
    %c0_88 = arith.constant 0 : index
    %c0_89 = arith.constant 0 : index
    %257 = vector.load %arg11[%c0_88, %c0_89] : memref<64x512xf32, #tpu.memory_space<vmem>>, vector<64x512xf32>
    tpu.vector_store %arg11[%c0_88, %c0_89], %256 {strides = array<i32>} : memref<64x512xf32, #tpu.memory_space<vmem>>, vector<64x512xf32>,
    %cst_90 = arith.constant 0.000000e+00 : f32
    %258 = vector.broadcast %cst_90 : f32 to vector<8x128xf32>
    %cst_91 = arith.constant 0.000000e+00 : f32
    %259 = vector.broadcast %cst_91 : f32 to vector<8x128xf32>
    %c0_92 = arith.constant 0 : index
    %c0_93 = arith.constant 0 : index
    %260 = vector.load %arg11[%c0_92, %c0_93] : memref<64x512xf32, #tpu.memory_space<vmem>>, vector<8x512xf32>
    %c0_94 = arith.constant 0 : index
    %c0_95 = arith.constant 0 : index
    %261 = vector.load %arg5[%c0_94, %c0_95] : memref<128x512xf32, #tpu.memory_space<vmem>>, vector<128x512xf32>
    %cst_96 = arith.constant dense<0.000000e+00> : vector<8x512xf32>
    %262 = tpu.matmul %258, %261, %cst_96 {dimension_numbers = #tpu.dot_dimension_numbers<[1], [0], [0], [1], [0, 0, 1, 1], [], []>} : vector<8x128xf32>, vector<128x512xf32>, vector<8x512xf32> -> vector<8x512xf32>
    %263 = arith.addf %260, %262 : vector<8x512xf32>
    %264 = vector.extract_strided_slice %263 {offsets = [0, 0], sizes = [8, 128], strides = [1, 1]} : vector<8x512xf32> to vector<8x128xf32>
    %265 = arith.negf %264 : vector<8x128xf32>
    %266 = math.exp %265 : vector<8x128xf32>
    %cst_97 = arith.constant 1.000000e+00 : f32
    %267 = vector.broadcast %cst_97 : f32 to vector<8x128xf32>
    %268 = arith.addf %267, %266 : vector<8x128xf32>
    %269 = arith.divf %267, %268 : vector<8x128xf32>
    %270 = vector.extract_strided_slice %263 {offsets = [0, 128], sizes = [8, 128], strides = [1, 1]} : vector<8x512xf32> to vector<8x128xf32>
    %271 = arith.negf %270 : vector<8x128xf32>
    %272 = math.exp %271 : vector<8x128xf32>
    %cst_98 = arith.constant 1.000000e+00 : f32
    %273 = vector.broadcast %cst_98 : f32 to vector<8x128xf32>
    %274 = arith.addf %273, %272 : vector<8x128xf32>
    %275 = arith.divf %273, %274 : vector<8x128xf32>
    %276 = vector.extract_strided_slice %263 {offsets = [0, 256], sizes = [8, 128], strides = [1, 1]} : vector<8x512xf32> to vector<8x128xf32>
    %277 = math.tanh %276 : vector<8x128xf32>
    %278 = vector.extract_strided_slice %263 {offsets = [0, 384], sizes = [8, 128], strides = [1, 1]} : vector<8x512xf32> to vector<8x128xf32>
    %279 = arith.negf %278 : vector<8x128xf32>
    %280 = math.exp %279 : vector<8x128xf32>
    %cst_99 = arith.constant 1.000000e+00 : f32
    %281 = vector.broadcast %cst_99 : f32 to vector<8x128xf32>
    %282 = arith.addf %281, %280 : vector<8x128xf32>
    %283 = arith.divf %281, %282 : vector<8x128xf32>
    %284 = arith.mulf %275, %259 : vector<8x128xf32>
    %285 = arith.mulf %269, %277 : vector<8x128xf32>
    %286 = arith.addf %284, %285 : vector<8x128xf32>
    %287 = math.tanh %286 : vector<8x128xf32>
    %288 = arith.mulf %283, %287 : vector<8x128xf32>
    %c8_100 = arith.constant 8 : index
    %c0_101 = arith.constant 0 : index
    %289 = vector.load %arg11[%c8_100, %c0_101] : memref<64x512xf32, #tpu.memory_space<vmem>>, vector<8x512xf32>
    %c0_102 = arith.constant 0 : index
    %c0_103 = arith.constant 0 : index
    %290 = vector.load %arg5[%c0_102, %c0_103] : memref<128x512xf32, #tpu.memory_space<vmem>>, vector<128x512xf32>
    %cst_104 = arith.constant dense<0.000000e+00> : vector<8x512xf32>
    %291 = tpu.matmul %288, %290, %cst_104 {dimension_numbers = #tpu.dot_dimension_numbers<[1], [0], [0], [1], [0, 0, 1, 1], [], []>} : vector<8x128xf32>, vector<128x512xf32>, vector<8x512xf32> -> vector<8x512xf32>
    %292 = arith.addf %289, %291 : vector<8x512xf32>
    %293 = vector.extract_strided_slice %292 {offsets = [0, 0], sizes = [8, 128], strides = [1, 1]} : vector<8x512xf32> to vector<8x128xf32>
    %294 = arith.negf %293 : vector<8x128xf32>
    %295 = math.exp %294 : vector<8x128xf32>
    %cst_105 = arith.constant 1.000000e+00 : f32
    %296 = vector.broadcast %cst_105 : f32 to vector<8x128xf32>
    %297 = arith.addf %296, %295 : vector<8x128xf32>
    %298 = arith.divf %296, %297 : vector<8x128xf32>
    %299 = vector.extract_strided_slice %292 {offsets = [0, 128], sizes = [8, 128], strides = [1, 1]} : vector<8x512xf32> to vector<8x128xf32>
    %300 = arith.negf %299 : vector<8x128xf32>
    %301 = math.exp %300 : vector<8x128xf32>
    %cst_106 = arith.constant 1.000000e+00 : f32
    %302 = vector.broadcast %cst_106 : f32 to vector<8x128xf32>
    %303 = arith.addf %302, %301 : vector<8x128xf32>
    %304 = arith.divf %302, %303 : vector<8x128xf32>
    %305 = vector.extract_strided_slice %292 {offsets = [0, 256], sizes = [8, 128], strides = [1, 1]} : vector<8x512xf32> to vector<8x128xf32>
    %306 = math.tanh %305 : vector<8x128xf32>
    %307 = vector.extract_strided_slice %292 {offsets = [0, 384], sizes = [8, 128], strides = [1, 1]} : vector<8x512xf32> to vector<8x128xf32>
    %308 = arith.negf %307 : vector<8x128xf32>
    %309 = math.exp %308 : vector<8x128xf32>
    %cst_107 = arith.constant 1.000000e+00 : f32
    %310 = vector.broadcast %cst_107 : f32 to vector<8x128xf32>
    %311 = arith.addf %310, %309 : vector<8x128xf32>
    %312 = arith.divf %310, %311 : vector<8x128xf32>
    %313 = arith.mulf %304, %286 : vector<8x128xf32>
    %314 = arith.mulf %298, %306 : vector<8x128xf32>
    %315 = arith.addf %313, %314 : vector<8x128xf32>
    %316 = math.tanh %315 : vector<8x128xf32>
    %317 = arith.mulf %312, %316 : vector<8x128xf32>
    %c16_108 = arith.constant 16 : index
    %c0_109 = arith.constant 0 : index
    %318 = vector.load %arg11[%c16_108, %c0_109] : memref<64x512xf32, #tpu.memory_space<vmem>>, vector<8x512xf32>
    %c0_110 = arith.constant 0 : index
    %c0_111 = arith.constant 0 : index
    %319 = vector.load %arg5[%c0_110, %c0_111] : memref<128x512xf32, #tpu.memory_space<vmem>>, vector<128x512xf32>
    %cst_112 = arith.constant dense<0.000000e+00> : vector<8x512xf32>
    %320 = tpu.matmul %317, %319, %cst_112 {dimension_numbers = #tpu.dot_dimension_numbers<[1], [0], [0], [1], [0, 0, 1, 1], [], []>} : vector<8x128xf32>, vector<128x512xf32>, vector<8x512xf32> -> vector<8x512xf32>
    %321 = arith.addf %318, %320 : vector<8x512xf32>
    %322 = vector.extract_strided_slice %321 {offsets = [0, 0], sizes = [8, 128], strides = [1, 1]} : vector<8x512xf32> to vector<8x128xf32>
    %323 = arith.negf %322 : vector<8x128xf32>
    %324 = math.exp %323 : vector<8x128xf32>
    %cst_113 = arith.constant 1.000000e+00 : f32
    %325 = vector.broadcast %cst_113 : f32 to vector<8x128xf32>
    %326 = arith.addf %325, %324 : vector<8x128xf32>
    %327 = arith.divf %325, %326 : vector<8x128xf32>
    %328 = vector.extract_strided_slice %321 {offsets = [0, 128], sizes = [8, 128], strides = [1, 1]} : vector<8x512xf32> to vector<8x128xf32>
    %329 = arith.negf %328 : vector<8x128xf32>
    %330 = math.exp %329 : vector<8x128xf32>
    %cst_114 = arith.constant 1.000000e+00 : f32
    %331 = vector.broadcast %cst_114 : f32 to vector<8x128xf32>
    %332 = arith.addf %331, %330 : vector<8x128xf32>
    %333 = arith.divf %331, %332 : vector<8x128xf32>
    %334 = vector.extract_strided_slice %321 {offsets = [0, 256], sizes = [8, 128], strides = [1, 1]} : vector<8x512xf32> to vector<8x128xf32>
    %335 = math.tanh %334 : vector<8x128xf32>
    %336 = vector.extract_strided_slice %321 {offsets = [0, 384], sizes = [8, 128], strides = [1, 1]} : vector<8x512xf32> to vector<8x128xf32>
    %337 = arith.negf %336 : vector<8x128xf32>
    %338 = math.exp %337 : vector<8x128xf32>
    %cst_115 = arith.constant 1.000000e+00 : f32
    %339 = vector.broadcast %cst_115 : f32 to vector<8x128xf32>
    %340 = arith.addf %339, %338 : vector<8x128xf32>
    %341 = arith.divf %339, %340 : vector<8x128xf32>
    %342 = arith.mulf %333, %315 : vector<8x128xf32>
    %343 = arith.mulf %327, %335 : vector<8x128xf32>
    %344 = arith.addf %342, %343 : vector<8x128xf32>
    %345 = math.tanh %344 : vector<8x128xf32>
    %346 = arith.mulf %341, %345 : vector<8x128xf32>
    %c24_116 = arith.constant 24 : index
    %c0_117 = arith.constant 0 : index
    %347 = vector.load %arg11[%c24_116, %c0_117] : memref<64x512xf32, #tpu.memory_space<vmem>>, vector<8x512xf32>
    %c0_118 = arith.constant 0 : index
    %c0_119 = arith.constant 0 : index
    %348 = vector.load %arg5[%c0_118, %c0_119] : memref<128x512xf32, #tpu.memory_space<vmem>>, vector<128x512xf32>
    %cst_120 = arith.constant dense<0.000000e+00> : vector<8x512xf32>
    %349 = tpu.matmul %346, %348, %cst_120 {dimension_numbers = #tpu.dot_dimension_numbers<[1], [0], [0], [1], [0, 0, 1, 1], [], []>} : vector<8x128xf32>, vector<128x512xf32>, vector<8x512xf32> -> vector<8x512xf32>
    %350 = arith.addf %347, %349 : vector<8x512xf32>
    %351 = vector.extract_strided_slice %350 {offsets = [0, 0], sizes = [8, 128], strides = [1, 1]} : vector<8x512xf32> to vector<8x128xf32>
    %352 = arith.negf %351 : vector<8x128xf32>
    %353 = math.exp %352 : vector<8x128xf32>
    %cst_121 = arith.constant 1.000000e+00 : f32
    %354 = vector.broadcast %cst_121 : f32 to vector<8x128xf32>
    %355 = arith.addf %354, %353 : vector<8x128xf32>
    %356 = arith.divf %354, %355 : vector<8x128xf32>
    %357 = vector.extract_strided_slice %350 {offsets = [0, 128], sizes = [8, 128], strides = [1, 1]} : vector<8x512xf32> to vector<8x128xf32>
    %358 = arith.negf %357 : vector<8x128xf32>
    %359 = math.exp %358 : vector<8x128xf32>
    %cst_122 = arith.constant 1.000000e+00 : f32
    %360 = vector.broadcast %cst_122 : f32 to vector<8x128xf32>
    %361 = arith.addf %360, %359 : vector<8x128xf32>
    %362 = arith.divf %360, %361 : vector<8x128xf32>
    %363 = vector.extract_strided_slice %350 {offsets = [0, 256], sizes = [8, 128], strides = [1, 1]} : vector<8x512xf32> to vector<8x128xf32>
    %364 = math.tanh %363 : vector<8x128xf32>
    %365 = vector.extract_strided_slice %350 {offsets = [0, 384], sizes = [8, 128], strides = [1, 1]} : vector<8x512xf32> to vector<8x128xf32>
    %366 = arith.negf %365 : vector<8x128xf32>
    %367 = math.exp %366 : vector<8x128xf32>
    %cst_123 = arith.constant 1.000000e+00 : f32
    %368 = vector.broadcast %cst_123 : f32 to vector<8x128xf32>
    %369 = arith.addf %368, %367 : vector<8x128xf32>
    %370 = arith.divf %368, %369 : vector<8x128xf32>
    %371 = arith.mulf %362, %344 : vector<8x128xf32>
    %372 = arith.mulf %356, %364 : vector<8x128xf32>
    %373 = arith.addf %371, %372 : vector<8x128xf32>
    %374 = math.tanh %373 : vector<8x128xf32>
    %375 = arith.mulf %370, %374 : vector<8x128xf32>
    %c32_124 = arith.constant 32 : index
    %c0_125 = arith.constant 0 : index
    %376 = vector.load %arg11[%c32_124, %c0_125] : memref<64x512xf32, #tpu.memory_space<vmem>>, vector<8x512xf32>
    %c0_126 = arith.constant 0 : index
    %c0_127 = arith.constant 0 : index
    %377 = vector.load %arg5[%c0_126, %c0_127] : memref<128x512xf32, #tpu.memory_space<vmem>>, vector<128x512xf32>
    %cst_128 = arith.constant dense<0.000000e+00> : vector<8x512xf32>
    %378 = tpu.matmul %375, %377, %cst_128 {dimension_numbers = #tpu.dot_dimension_numbers<[1], [0], [0], [1], [0, 0, 1, 1], [], []>} : vector<8x128xf32>, vector<128x512xf32>, vector<8x512xf32> -> vector<8x512xf32>
    %379 = arith.addf %376, %378 : vector<8x512xf32>
    %380 = vector.extract_strided_slice %379 {offsets = [0, 0], sizes = [8, 128], strides = [1, 1]} : vector<8x512xf32> to vector<8x128xf32>
    %381 = arith.negf %380 : vector<8x128xf32>
    %382 = math.exp %381 : vector<8x128xf32>
    %cst_129 = arith.constant 1.000000e+00 : f32
    %383 = vector.broadcast %cst_129 : f32 to vector<8x128xf32>
    %384 = arith.addf %383, %382 : vector<8x128xf32>
    %385 = arith.divf %383, %384 : vector<8x128xf32>
    %386 = vector.extract_strided_slice %379 {offsets = [0, 128], sizes = [8, 128], strides = [1, 1]} : vector<8x512xf32> to vector<8x128xf32>
    %387 = arith.negf %386 : vector<8x128xf32>
    %388 = math.exp %387 : vector<8x128xf32>
    %cst_130 = arith.constant 1.000000e+00 : f32
    %389 = vector.broadcast %cst_130 : f32 to vector<8x128xf32>
    %390 = arith.addf %389, %388 : vector<8x128xf32>
    %391 = arith.divf %389, %390 : vector<8x128xf32>
    %392 = vector.extract_strided_slice %379 {offsets = [0, 256], sizes = [8, 128], strides = [1, 1]} : vector<8x512xf32> to vector<8x128xf32>
    %393 = math.tanh %392 : vector<8x128xf32>
    %394 = vector.extract_strided_slice %379 {offsets = [0, 384], sizes = [8, 128], strides = [1, 1]} : vector<8x512xf32> to vector<8x128xf32>
    %395 = arith.negf %394 : vector<8x128xf32>
    %396 = math.exp %395 : vector<8x128xf32>
    %cst_131 = arith.constant 1.000000e+00 : f32
    %397 = vector.broadcast %cst_131 : f32 to vector<8x128xf32>
    %398 = arith.addf %397, %396 : vector<8x128xf32>
    %399 = arith.divf %397, %398 : vector<8x128xf32>
    %400 = arith.mulf %391, %373 : vector<8x128xf32>
    %401 = arith.mulf %385, %393 : vector<8x128xf32>
    %402 = arith.addf %400, %401 : vector<8x128xf32>
    %403 = math.tanh %402 : vector<8x128xf32>
    %404 = arith.mulf %399, %403 : vector<8x128xf32>
    %c40_132 = arith.constant 40 : index
    %c0_133 = arith.constant 0 : index
    %405 = vector.load %arg11[%c40_132, %c0_133] : memref<64x512xf32, #tpu.memory_space<vmem>>, vector<8x512xf32>
    %c0_134 = arith.constant 0 : index
    %c0_135 = arith.constant 0 : index
    %406 = vector.load %arg5[%c0_134, %c0_135] : memref<128x512xf32, #tpu.memory_space<vmem>>, vector<128x512xf32>
    %cst_136 = arith.constant dense<0.000000e+00> : vector<8x512xf32>
    %407 = tpu.matmul %404, %406, %cst_136 {dimension_numbers = #tpu.dot_dimension_numbers<[1], [0], [0], [1], [0, 0, 1, 1], [], []>} : vector<8x128xf32>, vector<128x512xf32>, vector<8x512xf32> -> vector<8x512xf32>
    %408 = arith.addf %405, %407 : vector<8x512xf32>
    %409 = vector.extract_strided_slice %408 {offsets = [0, 0], sizes = [8, 128], strides = [1, 1]} : vector<8x512xf32> to vector<8x128xf32>
    %410 = arith.negf %409 : vector<8x128xf32>
    %411 = math.exp %410 : vector<8x128xf32>
    %cst_137 = arith.constant 1.000000e+00 : f32
    %412 = vector.broadcast %cst_137 : f32 to vector<8x128xf32>
    %413 = arith.addf %412, %411 : vector<8x128xf32>
    %414 = arith.divf %412, %413 : vector<8x128xf32>
    %415 = vector.extract_strided_slice %408 {offsets = [0, 128], sizes = [8, 128], strides = [1, 1]} : vector<8x512xf32> to vector<8x128xf32>
    %416 = arith.negf %415 : vector<8x128xf32>
    %417 = math.exp %416 : vector<8x128xf32>
    %cst_138 = arith.constant 1.000000e+00 : f32
    %418 = vector.broadcast %cst_138 : f32 to vector<8x128xf32>
    %419 = arith.addf %418, %417 : vector<8x128xf32>
    %420 = arith.divf %418, %419 : vector<8x128xf32>
    %421 = vector.extract_strided_slice %408 {offsets = [0, 256], sizes = [8, 128], strides = [1, 1]} : vector<8x512xf32> to vector<8x128xf32>
    %422 = math.tanh %421 : vector<8x128xf32>
    %423 = vector.extract_strided_slice %408 {offsets = [0, 384], sizes = [8, 128], strides = [1, 1]} : vector<8x512xf32> to vector<8x128xf32>
    %424 = arith.negf %423 : vector<8x128xf32>
    %425 = math.exp %424 : vector<8x128xf32>
    %cst_139 = arith.constant 1.000000e+00 : f32
    %426 = vector.broadcast %cst_139 : f32 to vector<8x128xf32>
    %427 = arith.addf %426, %425 : vector<8x128xf32>
    %428 = arith.divf %426, %427 : vector<8x128xf32>
    %429 = arith.mulf %420, %402 : vector<8x128xf32>
    %430 = arith.mulf %414, %422 : vector<8x128xf32>
    %431 = arith.addf %429, %430 : vector<8x128xf32>
    %432 = math.tanh %431 : vector<8x128xf32>
    %433 = arith.mulf %428, %432 : vector<8x128xf32>
    %c48_140 = arith.constant 48 : index
    %c0_141 = arith.constant 0 : index
    %434 = vector.load %arg11[%c48_140, %c0_141] : memref<64x512xf32, #tpu.memory_space<vmem>>, vector<8x512xf32>
    %c0_142 = arith.constant 0 : index
    %c0_143 = arith.constant 0 : index
    %435 = vector.load %arg5[%c0_142, %c0_143] : memref<128x512xf32, #tpu.memory_space<vmem>>, vector<128x512xf32>
    %cst_144 = arith.constant dense<0.000000e+00> : vector<8x512xf32>
    %436 = tpu.matmul %433, %435, %cst_144 {dimension_numbers = #tpu.dot_dimension_numbers<[1], [0], [0], [1], [0, 0, 1, 1], [], []>} : vector<8x128xf32>, vector<128x512xf32>, vector<8x512xf32> -> vector<8x512xf32>
    %437 = arith.addf %434, %436 : vector<8x512xf32>
    %438 = vector.extract_strided_slice %437 {offsets = [0, 0], sizes = [8, 128], strides = [1, 1]} : vector<8x512xf32> to vector<8x128xf32>
    %439 = arith.negf %438 : vector<8x128xf32>
    %440 = math.exp %439 : vector<8x128xf32>
    %cst_145 = arith.constant 1.000000e+00 : f32
    %441 = vector.broadcast %cst_145 : f32 to vector<8x128xf32>
    %442 = arith.addf %441, %440 : vector<8x128xf32>
    %443 = arith.divf %441, %442 : vector<8x128xf32>
    %444 = vector.extract_strided_slice %437 {offsets = [0, 128], sizes = [8, 128], strides = [1, 1]} : vector<8x512xf32> to vector<8x128xf32>
    %445 = arith.negf %444 : vector<8x128xf32>
    %446 = math.exp %445 : vector<8x128xf32>
    %cst_146 = arith.constant 1.000000e+00 : f32
    %447 = vector.broadcast %cst_146 : f32 to vector<8x128xf32>
    %448 = arith.addf %447, %446 : vector<8x128xf32>
    %449 = arith.divf %447, %448 : vector<8x128xf32>
    %450 = vector.extract_strided_slice %437 {offsets = [0, 256], sizes = [8, 128], strides = [1, 1]} : vector<8x512xf32> to vector<8x128xf32>
    %451 = math.tanh %450 : vector<8x128xf32>
    %452 = vector.extract_strided_slice %437 {offsets = [0, 384], sizes = [8, 128], strides = [1, 1]} : vector<8x512xf32> to vector<8x128xf32>
    %453 = arith.negf %452 : vector<8x128xf32>
    %454 = math.exp %453 : vector<8x128xf32>
    %cst_147 = arith.constant 1.000000e+00 : f32
    %455 = vector.broadcast %cst_147 : f32 to vector<8x128xf32>
    %456 = arith.addf %455, %454 : vector<8x128xf32>
    %457 = arith.divf %455, %456 : vector<8x128xf32>
    %458 = arith.mulf %449, %431 : vector<8x128xf32>
    %459 = arith.mulf %443, %451 : vector<8x128xf32>
    %460 = arith.addf %458, %459 : vector<8x128xf32>
    %461 = math.tanh %460 : vector<8x128xf32>
    %462 = arith.mulf %457, %461 : vector<8x128xf32>
    %c56_148 = arith.constant 56 : index
    %c0_149 = arith.constant 0 : index
    %463 = vector.load %arg11[%c56_148, %c0_149] : memref<64x512xf32, #tpu.memory_space<vmem>>, vector<8x512xf32>
    %c0_150 = arith.constant 0 : index
    %c0_151 = arith.constant 0 : index
    %464 = vector.load %arg5[%c0_150, %c0_151] : memref<128x512xf32, #tpu.memory_space<vmem>>, vector<128x512xf32>
    %cst_152 = arith.constant dense<0.000000e+00> : vector<8x512xf32>
    %465 = tpu.matmul %462, %464, %cst_152 {dimension_numbers = #tpu.dot_dimension_numbers<[1], [0], [0], [1], [0, 0, 1, 1], [], []>} : vector<8x128xf32>, vector<128x512xf32>, vector<8x512xf32> -> vector<8x512xf32>
    %466 = arith.addf %463, %465 : vector<8x512xf32>
    %467 = vector.extract_strided_slice %466 {offsets = [0, 0], sizes = [8, 128], strides = [1, 1]} : vector<8x512xf32> to vector<8x128xf32>
    %468 = arith.negf %467 : vector<8x128xf32>
    %469 = math.exp %468 : vector<8x128xf32>
    %cst_153 = arith.constant 1.000000e+00 : f32
    %470 = vector.broadcast %cst_153 : f32 to vector<8x128xf32>
    %471 = arith.addf %470, %469 : vector<8x128xf32>
    %472 = arith.divf %470, %471 : vector<8x128xf32>
    %473 = vector.extract_strided_slice %466 {offsets = [0, 128], sizes = [8, 128], strides = [1, 1]} : vector<8x512xf32> to vector<8x128xf32>
    %474 = arith.negf %473 : vector<8x128xf32>
    %475 = math.exp %474 : vector<8x128xf32>
    %cst_154 = arith.constant 1.000000e+00 : f32
    %476 = vector.broadcast %cst_154 : f32 to vector<8x128xf32>
    %477 = arith.addf %476, %475 : vector<8x128xf32>
    %478 = arith.divf %476, %477 : vector<8x128xf32>
    %479 = vector.extract_strided_slice %466 {offsets = [0, 256], sizes = [8, 128], strides = [1, 1]} : vector<8x512xf32> to vector<8x128xf32>
    %480 = math.tanh %479 : vector<8x128xf32>
    %481 = vector.extract_strided_slice %466 {offsets = [0, 384], sizes = [8, 128], strides = [1, 1]} : vector<8x512xf32> to vector<8x128xf32>
    %482 = arith.negf %481 : vector<8x128xf32>
    %483 = math.exp %482 : vector<8x128xf32>
    %cst_155 = arith.constant 1.000000e+00 : f32
    %484 = vector.broadcast %cst_155 : f32 to vector<8x128xf32>
    %485 = arith.addf %484, %483 : vector<8x128xf32>
    %486 = arith.divf %484, %485 : vector<8x128xf32>
    %487 = arith.mulf %478, %460 : vector<8x128xf32>
    %488 = arith.mulf %472, %480 : vector<8x128xf32>
    %489 = arith.addf %487, %488 : vector<8x128xf32>
    %490 = math.tanh %489 : vector<8x128xf32>
    %491 = arith.mulf %486, %490 : vector<8x128xf32>
    %c0_156 = arith.constant 0 : index
    %c0_157 = arith.constant 0 : index
    %492 = vector.load %arg7[%c0_156, %c0_157] : memref<128x3xf32, #tpu.memory_space<vmem>>, vector<128x3xf32>
    %cst_158 = arith.constant dense<0.000000e+00> : vector<8x3xf32>
    %493 = tpu.matmul %491, %492, %cst_158 {dimension_numbers = #tpu.dot_dimension_numbers<[1], [0], [0], [1], [0, 0, 1, 1], [], []>} : vector<8x128xf32>, vector<128x3xf32>, vector<8x3xf32> -> vector<8x3xf32>
    %c0_159 = arith.constant 0 : index
    %c0_160 = arith.constant 0 : index
    %494 = vector.load %arg8[%c0_159, %c0_160] : memref<1x3xf32, #tpu.memory_space<vmem>>, vector<1x3xf32>
    %495 = vector.broadcast %494 : vector<1x3xf32> to vector<8x3xf32>
    %496 = arith.addf %493, %495 : vector<8x3xf32>
    %cst_161 = arith.constant dense<0xFF800000> : vector<8xf32>
    %497 = vector.multi_reduction <maximumf>, %496, %cst_161 [1] : vector<8x3xf32> to vector<8xf32>
    %498 = vector.shape_cast %497 : vector<8xf32> to vector<8x1xf32>
    %499 = vector.broadcast %498 : vector<8x1xf32> to vector<8x3xf32>
    %500 = arith.subf %496, %499 : vector<8x3xf32>
    %501 = math.exp %500 : vector<8x3xf32>
    %cst_162 = arith.constant dense<0.000000e+00> : vector<8xf32>
    %502 = vector.multi_reduction <add>, %501, %cst_162 [1] : vector<8x3xf32> to vector<8xf32>
    %503 = vector.shape_cast %502 : vector<8xf32> to vector<8x1xf32>
    %504 = math.log %503 : vector<8x1xf32>
    %505 = vector.broadcast %504 : vector<8x1xf32> to vector<8x3xf32>
    %506 = arith.subf %500, %505 : vector<8x3xf32>
    %c0_163 = arith.constant 0 : index
    %c0_164 = arith.constant 0 : index
    %507 = vector.load %arg9[%c0_163, %c0_164] : memref<8x3xf32, #tpu.memory_space<vmem>>, vector<8x3xf32>
    tpu.vector_store %arg9[%c0_163, %c0_164], %506 {strides = array<i32>} : memref<8x3xf32, #tpu.memory_space<vmem>>, vector<8x3xf32>,
    return
  }
}

</mosaic_0001>

<llo_original>
// kernel: lstm_classifier_forward.1
$region0: #{lstm_classifier_forward.1}
  #allocation0 [shape = 'u32[]', space=smem, size = 0x4, offset = 0x4, fixed_abs, tag = 'smem constant byte address 0x4 - core index']
  #allocation1 [shape = 'u32[144,128]{1,0:T(1,128)}', space=vmem, size = 0x12000, scoped, tag = 'internal scratch']
  #allocation2 [shape = 'f32[64,128]{1,0:T(8,128)}', space=vmem, size = 0x8000, scoped, tag = 'scratch operand']
  #allocation3 [shape = 'f32[64,512]{1,0:T(8,128)}', space=vmem, size = 0x20000, scoped, tag = 'scratch operand']
  %s0 = inlined_call_operand.vmem [shape: f32[64,1], index: 0, kind: input, shape index: {}]
  %s1 = inlined_call_operand.vmem [shape: f32[1,512], index: 1, kind: input, shape index: {}]
  %s2 = inlined_call_operand.hbm [shape: f32[128,512], index: 2, kind: input, shape index: {}]
  %s3 = inlined_call_operand.vmem [shape: f32[1,512], index: 3, kind: input, shape index: {}]
  %s4 = inlined_call_operand.hbm [shape: f32[128,512], index: 4, kind: input, shape index: {}]
  %s5 = inlined_call_operand.hbm [shape: f32[128,512], index: 5, kind: input, shape index: {}]
  %s6 = inlined_call_operand.vmem [shape: f32[1,512], index: 6, kind: input, shape index: {}]
  %s7 = inlined_call_operand.vmem [shape: f32[128,3], index: 7, kind: input, shape index: {}]
  %s8 = inlined_call_operand.vmem [shape: f32[1,3], index: 8, kind: input, shape index: {}]
  %s9 = inlined_call_operand.vmem [shape: f32[8,3], index: 9, kind: output, shape index: {}]
  %s10 = sld [smem:[#allocation0]]
  $region58: #{lstm_classifier_forward.1} parent=0
    _
  %s12 = ssub.s32 1, %s10
  %s13 = scalar_select 0, %s12, %s10
  $region1: #{lstm_classifier_forward.1} parent=0
    #allocation4 [shape = 'u8[262144]{0}', space=vmem, size = 0x40000, scoped, tag = 'input window, operand 2, single buffered']
    #allocation5 [shape = 's32[1]{0}', space=sflag, size = 0x4, scoped, tag = 'scoped memory for lstm_classifier_forward.1']
    #allocation6 [shape = 'u8[262144]{0}', space=vmem, size = 0x40000, scoped, tag = 'input window, operand 4, single buffered']
    #allocation7 [shape = 's32[1]{0}', space=sflag, size = 0x4, scoped, tag = 'scoped memory for lstm_classifier_forward.1']
    #allocation8 [shape = 'u8[262144]{0}', space=vmem, size = 0x40000, scoped, tag = 'input window, operand 5, single buffered']
    %14 = vsyncpa [#allocation5], 0
    %15 = vsyncpa [#allocation7], 0
    // Predicated region
    $region2: #{lstm_classifier_forward.1} parent=1 // pred_check
      _
    $region3: #{lstm_classifier_forward.1} parent=1 // pred_check_branch
      %17 = sbr.rel (0) target = $region5
    $region4: #{lstm_classifier_forward.1} parent=1 // pred_region
      _
    $region5: #{lstm_classifier_forward.1} parent=1 // pred_fallthru
      _
    // Predicated region
    $region6: #{lstm_classifier_forward.1} parent=1 // pred_check
      _
    $region7: #{lstm_classifier_forward.1} parent=1 // pred_check_branch
      %19 = sbr.rel (0) target = $region9
    $region8: #{lstm_classifier_forward.1} parent=1 // pred_region
      _
    $region9: #{lstm_classifier_forward.1} parent=1 // pred_fallthru
      _
    // Predicated region
    $region10: #{lstm_classifier_forward.1} parent=1 // pred_check
      _
    $region11: #{lstm_classifier_forward.1} parent=1 // pred_check_branch
      %21 = sbr.rel (0) target = $region13
    $region12: #{lstm_classifier_forward.1} parent=1 // pred_region
      %s23 = ssub.s32 8192, 8192
      %24 = vsyncadd [#allocation5], %s23
      %s25 = sshll.u32 [#allocation4], 4
      %s26 = int_to_ptr.vmem [resolvable:$true] %s25
      %31 = dma.hbm_to_vmem [thread:$0]  %s2, 8192, %s26, [#allocation5], 512, 512, 32
    $region13: #{lstm_classifier_forward.1} parent=1 // pred_fallthru
      _
    // Predicated region
    $region14: #{lstm_classifier_forward.1} parent=1 // pred_check
      _
    $region15: #{lstm_classifier_forward.1} parent=1 // pred_check_branch
      %33 = sbr.rel (0) target = $region17
    $region16: #{lstm_classifier_forward.1} parent=1 // pred_region
      _
    $region17: #{lstm_classifier_forward.1} parent=1 // pred_fallthru
      _
    // Predicated region
    $region18: #{lstm_classifier_forward.1} parent=1 // pred_check
      _
    $region19: #{lstm_classifier_forward.1} parent=1 // pred_check_branch
      %35 = sbr.rel (0) target = $region21
    $region20: #{lstm_classifier_forward.1} parent=1 // pred_region
      %s37 = ssub.s32 8192, 8192
      %38 = vsyncadd [#allocation7], %s37
      %s39 = sshll.u32 [#allocation6], 4
      %s40 = int_to_ptr.vmem [resolvable:$true] %s39
      %45 = dma.hbm_to_vmem [thread:$0]  %s4, 8192, %s40, [#allocation7], 512, 512, 32
    $region21: #{lstm_classifier_forward.1} parent=1 // pred_fallthru
      _
    // Predicated region
    $region22: #{lstm_classifier_forward.1} parent=1 // pred_check
      _
    $region23: #{lstm_classifier_forward.1} parent=1 // pred_check_branch
      %47 = sbr.rel (0) target = $region25
    $region24: #{lstm_classifier_forward.1} parent=1 // pred_region
      %s49 = ssub.s32 8192, 8192
      %50 = vsyncadd [#allocation7], %s49
      %s51 = sshll.u32 [#allocation8], 4
      %s52 = int_to_ptr.vmem [resolvable:$true] %s51
      %57 = dma.hbm_to_vmem [thread:$0]  %s5, 8192, %s52, [#allocation7], 512, 512, 32
    $region25: #{lstm_classifier_forward.1} parent=1 // pred_fallthru
      _
    // Predicated region
    $region26: #{lstm_classifier_forward.1} parent=1 // pred_check
      _
    $region27: #{lstm_classifier_forward.1} parent=1 // pred_check_branch
      %59 = sbr.rel (0) target = $region29
    $region28: #{lstm_classifier_forward.1} parent=1 // pred_region
      _
    $region29: #{lstm_classifier_forward.1} parent=1 // pred_fallthru
      _
    // Predicated region
    $region30: #{lstm_classifier_forward.1} parent=1 // pred_check
      _
    $region31: #{lstm_classifier_forward.1} parent=1 // pred_check_branch
      %61 = sbr.rel (0) target = $region33
    $region32: #{lstm_classifier_forward.1} parent=1 // pred_region
      _
    $region33: #{lstm_classifier_forward.1} parent=1 // pred_fallthru
      _
    // Predicated region
    $region34: #{lstm_classifier_forward.1} parent=1 // pred_check
      _
    $region35: #{lstm_classifier_forward.1} parent=1 // pred_check_branch
      %63 = sbr.rel (0) target = $region37
    $region36: #{lstm_classifier_forward.1} parent=1 // pred_region
      _
    $region37: #{lstm_classifier_forward.1} parent=1 // pred_fallthru
      _
    // Predicated region
    $region38: #{lstm_classifier_forward.1} parent=1 // pred_check
      _
    $region39: #{lstm_classifier_forward.1} parent=1 // pred_check_branch
      %65 = sbr.rel (0) target = $region41
    $region40: #{lstm_classifier_forward.1} parent=1 // pred_region
      %66 = dma.done [#allocation5], 8192
    $region41: #{lstm_classifier_forward.1} parent=1 // pred_fallthru
      _
    // Predicated region
    $region42: #{lstm_classifier_forward.1} parent=1 // pred_check
      _
    $region43: #{lstm_classifier_forward.1} parent=1 // pred_check_branch
      %68 = sbr.rel (0) target = $region45
    $region44: #{lstm_classifier_forward.1} parent=1 // pred_region
      %69 = dma.done [#allocation7], 8192
    $region45: #{lstm_classifier_forward.1} parent=1 // pred_fallthru
      _
    // Predicated region
    $region46: #{lstm_classifier_forward.1} parent=1 // pred_check
      _
    $region47: #{lstm_classifier_forward.1} parent=1 // pred_check_branch
      %71 = sbr.rel (0) target = $region49
    $region48: #{lstm_classifier_forward.1} parent=1 // pred_region
      %72 = dma.done [#allocation7], 8192
    $region49: #{lstm_classifier_forward.1} parent=1 // pred_fallthru
      _
    %v73 = vld [vmem:[%s0] sm:$0xff]
    %v74 = vld [vmem:[%s0 + $0x8] sm:$0xff]
    %v75 = vld [vmem:[%s0 + $0x10] sm:$0xff]
    %v76 = vld [vmem:[%s0 + $0x18] sm:$0xff]
    %v77 = vld [vmem:[%s0 + $0x20] sm:$0xff]
    %v78 = vld [vmem:[%s0 + $0x28] sm:$0xff]
    %v79 = vld [vmem:[%s0 + $0x30] sm:$0xff]
    %v80 = vld [vmem:[%s0 + $0x38] sm:$0xff]
    %v81 = vld [vmem:[%s1] sm:$0xf]
    %83 = vset.pattern.permute.xlu0 0
    %84 = vperm.xlu0 %83, %v73
    %v85 = vpop.permute.xlu0 %84
    %88 = vset.pattern.permute.xlu0 0
    %89 = vperm.xlu0 %88, %v74
    %v90 = vpop.permute.xlu0 %89
    %93 = vset.pattern.permute.xlu0 0
    %94 = vperm.xlu0 %93, %v75
    %v95 = vpop.permute.xlu0 %94
    %98 = vset.pattern.permute.xlu0 0
    %99 = vperm.xlu0 %98, %v76
    %v100 = vpop.permute.xlu0 %99
    %103 = vset.pattern.permute.xlu0 0
    %104 = vperm.xlu0 %103, %v77
    %v105 = vpop.permute.xlu0 %104
    %108 = vset.pattern.permute.xlu0 0
    %109 = vperm.xlu0 %108, %v78
    %v110 = vpop.permute.xlu0 %109
    %113 = vset.pattern.permute.xlu0 0
    %114 = vperm.xlu0 %113, %v79
    %v115 = vpop.permute.xlu0 %114
    %118 = vset.pattern.permute.xlu0 0
    %119 = vperm.xlu0 %118, %v80
    %v120 = vpop.permute.xlu0 %119
    %v123 = vlaneseq
    %v124 = vshrl.u32 %v123, 7
    %v125 = vsub.s32 0, %v124
    %v126 = vrot.slane %v81, %v125
    %v127 = vlaneseq
    %v128 = vshrl.u32 %v127, 7
    %v129 = vsub.s32 1, %v128
    %v130 = vrot.slane %v81, %v129
    %v131 = vlaneseq
    %v132 = vshrl.u32 %v131, 7
    %v133 = vsub.s32 2, %v132
    %v134 = vrot.slane %v81, %v133
    %v135 = vlaneseq
    %v136 = vshrl.u32 %v135, 7
    %v137 = vsub.s32 3, %v136
    %v138 = vrot.slane %v81, %v137
    %v143 = vmul.f32 %v85, %v126
    %v144 = vmul.f32 %v85, %v130
    %v145 = vmul.f32 %v85, %v134
    %v146 = vmul.f32 %v85, %v138
    %v147 = vmul.f32 %v90, %v126
    %v148 = vmul.f32 %v90, %v130
    %v149 = vmul.f32 %v90, %v134
    %v150 = vmul.f32 %v90, %v138
    %v151 = vmul.f32 %v95, %v126
    %v152 = vmul.f32 %v95, %v130
    %v153 = vmul.f32 %v95, %v134
    %v154 = vmul.f32 %v95, %v138
    %v155 = vmul.f32 %v100, %v126
    %v156 = vmul.f32 %v100, %v130
    %v157 = vmul.f32 %v100, %v134
    %v158 = vmul.f32 %v100, %v138
    %v159 = vmul.f32 %v105, %v126
    %v160 = vmul.f32 %v105, %v130
    %v161 = vmul.f32 %v105, %v134
    %v162 = vmul.f32 %v105, %v138
    %v163 = vmul.f32 %v110, %v126
    %v164 = vmul.f32 %v110, %v130
    %v165 = vmul.f32 %v110, %v134
    %v166 = vmul.f32 %v110, %v138
    %v167 = vmul.f32 %v115, %v126
    %v168 = vmul.f32 %v115, %v130
    %v169 = vmul.f32 %v115, %v134
    %v170 = vmul.f32 %v115, %v138
    %v171 = vmul.f32 %v120, %v126
    %v172 = vmul.f32 %v120, %v130
    %v173 = vmul.f32 %v120, %v134
    %v174 = vmul.f32 %v120, %v138
    %v175 = vld [vmem:[%s3] sm:$0xf]
    %v177 = vlaneseq
    %v178 = vshrl.u32 %v177, 7
    %v179 = vsub.s32 0, %v178
    %v180 = vrot.slane %v175, %v179
    %v181 = vlaneseq
    %v182 = vshrl.u32 %v181, 7
    %v183 = vsub.s32 1, %v182
    %v184 = vrot.slane %v175, %v183
    %v185 = vlaneseq
    %v186 = vshrl.u32 %v185, 7
    %v187 = vsub.s32 2, %v186
    %v188 = vrot.slane %v175, %v187
    %v189 = vlaneseq
    %v190 = vshrl.u32 %v189, 7
    %v191 = vsub.s32 3, %v190
    %v192 = vrot.slane %v175, %v191
    %v197 = vadd.f32 %v143, %v180
    %v198 = vadd.f32 %v144, %v184
    %v199 = vadd.f32 %v145, %v188
    %v200 = vadd.f32 %v146, %v192
    %v201 = vadd.f32 %v147, %v180
    %v202 = vadd.f32 %v148, %v184
    %v203 = vadd.f32 %v149, %v188
    %v204 = vadd.f32 %v150, %v192
    %v205 = vadd.f32 %v151, %v180
    %v206 = vadd.f32 %v152, %v184
    %v207 = vadd.f32 %v153, %v188
    %v208 = vadd.f32 %v154, %v192
    %v209 = vadd.f32 %v155, %v180
    %v210 = vadd.f32 %v156, %v184
    %v211 = vadd.f32 %v157, %v188
    %v212 = vadd.f32 %v158, %v192
    %v213 = vadd.f32 %v159, %v180
    %v214 = vadd.f32 %v160, %v184
    %v215 = vadd.f32 %v161, %v188
    %v216 = vadd.f32 %v162, %v192
    %v217 = vadd.f32 %v163, %v180
    %v218 = vadd.f32 %v164, %v184
    %v219 = vadd.f32 %v165, %v188
    %v220 = vadd.f32 %v166, %v192
    %v221 = vadd.f32 %v167, %v180
    %v222 = vadd.f32 %v168, %v184
    %v223 = vadd.f32 %v169, %v188
    %v224 = vadd.f32 %v170, %v192
    %v225 = vadd.f32 %v171, %v180
    %v226 = vadd.f32 %v172, %v184
    %v227 = vadd.f32 %v173, %v188
    %v228 = vadd.f32 %v174, %v192
    %229 = vst [vmem:[#allocation3] sm:$0xff] %v197
    %230 = vst [vmem:[#allocation3 + $0x8] sm:$0xff] %v198
    %231 = vst [vmem:[#allocation3 + $0x10] sm:$0xff] %v199
    %232 = vst [vmem:[#allocation3 + $0x18] sm:$0xff] %v200
    %233 = vst [vmem:[#allocation3 + $0x20] sm:$0xff] %v201
    %234 = vst [vmem:[#allocation3 + $0x28] sm:$0xff] %v202
    %235 = vst [vmem:[#allocation3 + $0x30] sm:$0xff] %v203
    %236 = vst [vmem:[#allocation3 + $0x38] sm:$0xff] %v204
    %237 = vst [vmem:[#allocation3 + $0x40] sm:$0xff] %v205
    %238 = vst [vmem:[#allocation3 + $0x48] sm:$0xff] %v206
    %239 = vst [vmem:[#allocation3 + $0x50] sm:$0xff] %v207
    %240 = vst [vmem:[#allocation3 + $0x58] sm:$0xff] %v208
    %241 = vst [vmem:[#allocation3 + $0x60] sm:$0xff] %v209
    %242 = vst [vmem:[#allocation3 + $0x68] sm:$0xff] %v210
    %243 = vst [vmem:[#allocation3 + $0x70] sm:$0xff] %v211
    %244 = vst [vmem:[#allocation3 + $0x78] sm:$0xff] %v212
    %245 = vst [vmem:[#allocation3 + $0x80] sm:$0xff] %v213
    %246 = vst [vmem:[#allocation3 + $0x88] sm:$0xff] %v214
    %247 = vst [vmem:[#allocation3 + $0x90] sm:$0xff] %v215
    %248 = vst [vmem:[#allocation3 + $0x98] sm:$0xff] %v216
    %249 = vst [vmem:[#allocation3 + $0xa0] sm:$0xff] %v217
    %250 = vst [vmem:[#allocation3 + $0xa8] sm:$0xff] %v218
    %251 = vst [vmem:[#allocation3 + $0xb0] sm:$0xff] %v219
    %252 = vst [vmem:[#allocation3 + $0xb8] sm:$0xff] %v220
    %253 = vst [vmem:[#allocation3 + $0xc0] sm:$0xff] %v221
    %254 = vst [vmem:[#allocation3 + $0xc8] sm:$0xff] %v222
    %255 = vst [vmem:[#allocation3 + $0xd0] sm:$0xff] %v223
    %256 = vst [vmem:[#allocation3 + $0xd8] sm:$0xff] %v224
    %257 = vst [vmem:[#allocation3 + $0xe0] sm:$0xff] %v225
    %258 = vst [vmem:[#allocation3 + $0xe8] sm:$0xff] %v226
    %259 = vst [vmem:[#allocation3 + $0xf0] sm:$0xff] %v227
    %260 = vst [vmem:[#allocation3 + $0xf8] sm:$0xff] %v228
    %v261 = vld [vmem:[#allocation3] sm:$0xff]
    %v262 = vld [vmem:[#allocation3 + $0x8] sm:$0xff]
    %v263 = vld [vmem:[#allocation3 + $0x10] sm:$0xff]
    %v264 = vld [vmem:[#allocation3 + $0x18] sm:$0xff]
    %v265 = vld [vmem:[#allocation4] sm:$0xff]
    %v266 = vld [vmem:[#allocation4 + $0x8] sm:$0xff]
    %v267 = vld [vmem:[#allocation4 + $0x10] sm:$0xff]
    %v268 = vld [vmem:[#allocation4 + $0x18] sm:$0xff]
    %v269 = vld [vmem:[#allocation4 + $0x20] sm:$0xff]
    %v270 = vld [vmem:[#allocation4 + $0x28] sm:$0xff]
    %v271 = vld [vmem:[#allocation4 + $0x30] sm:$0xff]
    %v272 = vld [vmem:[#allocation4 + $0x38] sm:$0xff]
    %v273 = vld [vmem:[#allocation4 + $0x40] sm:$0xff]
    %v274 = vld [vmem:[#allocation4 + $0x48] sm:$0xff]
    %v275 = vld [vmem:[#allocation4 + $0x50] sm:$0xff]
    %v276 = vld [vmem:[#allocation4 + $0x58] sm:$0xff]
    %v277 = vld [vmem:[#allocation4 + $0x60] sm:$0xff]
    %v278 = vld [vmem:[#allocation4 + $0x68] sm:$0xff]
    %v279 = vld [vmem:[#allocation4 + $0x70] sm:$0xff]
    %v280 = vld [vmem:[#allocation4 + $0x78] sm:$0xff]
    %v281 = vld [vmem:[#allocation4 + $0x80] sm:$0xff]
    %v282 = vld [vmem:[#allocation4 + $0x88] sm:$0xff]
    %v283 = vld [vmem:[#allocation4 + $0x90] sm:$0xff]
    %v284 = vld [vmem:[#allocation4 + $0x98] sm:$0xff]
    %v285 = vld [vmem:[#allocation4 + $0xa0] sm:$0xff]
    %v286 = vld [vmem:[#allocation4 + $0xa8] sm:$0xff]
    %v287 = vld [vmem:[#allocation4 + $0xb0] sm:$0xff]
    %v288 = vld [vmem:[#allocation4 + $0xb8] sm:$0xff]
    %v289 = vld [vmem:[#allocation4 + $0xc0] sm:$0xff]
    %v290 = vld [vmem:[#allocation4 + $0xc8] sm:$0xff]
    %v291 = vld [vmem:[#allocation4 + $0xd0] sm:$0xff]
    %v292 = vld [vmem:[#allocation4 + $0xd8] sm:$0xff]
    %v293 = vld [vmem:[#allocation4 + $0xe0] sm:$0xff]
    %v294 = vld [vmem:[#allocation4 + $0xe8] sm:$0xff]
    %v295 = vld [vmem:[#allocation4 + $0xf0] sm:$0xff]
    %v296 = vld [vmem:[#allocation4 + $0xf8] sm:$0xff]
    %v297 = vld [vmem:[#allocation4 + $0x100] sm:$0xff]
    %v298 = vld [vmem:[#allocation4 + $0x108] sm:$0xff]
    %v299 = vld [vmem:[#allocation4 + $0x110] sm:$0xff]
    %v300 = vld [vmem:[#allocation4 + $0x118] sm:$0xff]
    %v301 = vld [vmem:[#allocation4 + $0x120] sm:$0xff]
    %v302 = vld [vmem:[#allocation4 + $0x128] sm:$0xff]
    %v303 = vld [vmem:[#allocation4 + $0x130] sm:$0xff]
    %v304 = vld [vmem:[#allocation4 + $0x138] sm:$0xff]
    %v305 = vld [vmem:[#allocation4 + $0x140] sm:$0xff]
    %v306 = vld [vmem:[#allocation4 + $0x148] sm:$0xff]
    %v307 = vld [vmem:[#allocation4 + $0x150] sm:$0xff]
    %v308 = vld [vmem:[#allocation4 + $0x158] sm:$0xff]
    %v309 = vld [vmem:[#allocation4 + $0x160] sm:$0xff]
    %v310 = vld [vmem:[#allocation4 + $0x168] sm:$0xff]
    %v311 = vld [vmem:[#allocation4 + $0x170] sm:$0xff]
    %v312 = vld [vmem:[#allocation4 + $0x178] sm:$0xff]
    %v313 = vld [vmem:[#allocation4 + $0x180] sm:$0xff]
    %v314 = vld [vmem:[#allocation4 + $0x188] sm:$0xff]
    %v315 = vld [vmem:[#allocation4 + $0x190] sm:$0xff]
    %v316 = vld [vmem:[#allocation4 + $0x198] sm:$0xff]
    %v317 = vld [vmem:[#allocation4 + $0x1a0] sm:$0xff]
    %v318 = vld [vmem:[#allocation4 + $0x1a8] sm:$0xff]
    %v319 = vld [vmem:[#allocation4 + $0x1b0] sm:$0xff]
    %v320 = vld [vmem:[#allocation4 + $0x1b8] sm:$0xff]
    %v321 = vld [vmem:[#allocation4 + $0x1c0] sm:$0xff]
    %v322 = vld [vmem:[#allocation4 + $0x1c8] sm:$0xff]
    %v323 = vld [vmem:[#allocation4 + $0x1d0] sm:$0xff]
    %v324 = vld [vmem:[#allocation4 + $0x1d8] sm:$0xff]
    %v325 = vld [vmem:[#allocation4 + $0x1e0] sm:$0xff]
    %v326 = vld [vmem:[#allocation4 + $0x1e8] sm:$0xff]
    %v327 = vld [vmem:[#allocation4 + $0x1f0] sm:$0xff]
    %v328 = vld [vmem:[#allocation4 + $0x1f8] sm:$0xff]
    %329 = vmatprep.subr.mxu0 %v326
    %330 = vmatpush1.msra.mxu0 %v325
    %331 = vmatprep.subr.mxu0 %v322
    %332 = vmatpush1.msra.mxu0 %v321
    %333 = vmatprep.subr.mxu0 %v318
    %334 = vmatpush1.msra.mxu0 %v317
    %335 = vmatprep.subr.mxu0 %v314
    %336 = vmatpush1.msra.mxu0 %v313
    %337 = vmatprep.subr.mxu0 %v310
    %338 = vmatpush1.msra.mxu0 %v309
    %339 = vmatprep.subr.mxu0 %v306
    %340 = vmatpush1.msra.mxu0 %v305
    %341 = vmatprep.subr.mxu0 %v302
    %342 = vmatpush1.msra.mxu0 %v301
    %343 = vmatprep.subr.mxu0 %v298
    %344 = vmatpush1.msra.mxu0 %v297
    %345 = vmatprep.subr.mxu0 %v294
    %346 = vmatpush1.msra.mxu0 %v293
    %347 = vmatprep.subr.mxu0 %v290
    %348 = vmatpush1.msra.mxu0 %v289
    %349 = vmatprep.subr.mxu0 %v286
    %350 = vmatpush1.msra.mxu0 %v285
    %351 = vmatprep.subr.mxu0 %v282
    %352 = vmatpush1.msra.mxu0 %v281
    %353 = vmatprep.subr.mxu0 %v278
    %354 = vmatpush1.msra.mxu0 %v277
    %355 = vmatprep.subr.mxu0 %v274
    %356 = vmatpush1.msra.mxu0 %v273
    %357 = vmatprep.subr.mxu0 %v270
    %358 = vmatpush1.msra.mxu0 %v269
    %359 = vmatprep.subr.mxu0 %v266
    %360 = vmatpush1.msra.mxu0 %v265
    %361 = vmatprep.subr.mxu0 0.0
    %362 = vmatpush2.msra.mxu0 0.0
    %363 = vmatprep.subr.mxu0 0.0
    %364 = vmatpush2.msra.mxu0 0.0
    %365 = vmatprep.subr.mxu0 0.0
    %366 = vmatpush2.msra.mxu0 0.0
    %367 = vmatprep.subr.mxu0 0.0
    %368 = vmatpush2.msra.mxu0 0.0
    %369 = vmatprep.subr.mxu0 0.0
    %370 = vmatpush2.msra.mxu0 0.0
    %371 = vmatprep.subr.mxu0 0.0
    %372 = vmatpush2.msra.mxu0 0.0
    %373 = vmatprep.subr.mxu0 0.0
    %374 = vmatpush2.msra.mxu0 0.0
    %375 = vmatprep.subr.mxu0 0.0
    %376 = vmatpush2.msra.mxu0 0.0
    %377 = vmatprep.subr.mxu0 0.0
    %378 = vmatpush2.msra.mxu0 0.0
    %379 = vmatprep.subr.mxu0 0.0
    %380 = vmatpush2.msra.mxu0 0.0
    %381 = vmatprep.subr.mxu0 0.0
    %382 = vmatpush2.msra.mxu0 0.0
    %383 = vmatprep.subr.mxu0 0.0
    %384 = vmatpush2.msra.mxu0 0.0
    %385 = vmatprep.subr.mxu0 0.0
    %386 = vmatpush2.msra.mxu0 0.0
    %387 = vmatprep.subr.mxu0 0.0
    %388 = vmatpush2.msra.mxu0 0.0
    %389 = vmatprep.subr.mxu0 0.0
    %390 = vmatpush2.msra.mxu0 0.0
    %391 = vmatprep.subr.mxu0 0.0
    %392 = vmatpush2.msra.mxu0 0.0
    %393 = vmatprep.mubr.f32.mxu0 0.0
    %394 = vmatmul.mubr.f32.gmra.mxu0 0.0
    %v395 = vpop.f32.mrf.mxu0
    %v396 = vadd.f32 0.0, %v395
    %v397 = vpop.f32.mrf.mxu0
    %v398 = vadd.f32 0.0, %v397
    %399 = vdwg.mxu0
    %400 = vmatprep.subr.mxu0 %v328
    %401 = vmatpush1.msra.mxu0 %v327
    %402 = vmatprep.subr.mxu0 %v324
    %403 = vmatpush1.msra.mxu0 %v323
    %404 = vmatprep.subr.mxu0 %v320
    %405 = vmatpush1.msra.mxu0 %v319
    %406 = vmatprep.subr.mxu0 %v316
    %407 = vmatpush1.msra.mxu0 %v315
    %408 = vmatprep.subr.mxu0 %v312
    %409 = vmatpush1.msra.mxu0 %v311
    %410 = vmatprep.subr.mxu0 %v308
    %411 = vmatpush1.msra.mxu0 %v307
    %412 = vmatprep.subr.mxu0 %v304
    %413 = vmatpush1.msra.mxu0 %v303
    %414 = vmatprep.subr.mxu0 %v300
    %415 = vmatpush1.msra.mxu0 %v299
    %416 = vmatprep.subr.mxu0 %v296
    %417 = vmatpush1.msra.mxu0 %v295
    %418 = vmatprep.subr.mxu0 %v292
    %419 = vmatpush1.msra.mxu0 %v291
    %420 = vmatprep.subr.mxu0 %v288
    %421 = vmatpush1.msra.mxu0 %v287
    %422 = vmatprep.subr.mxu0 %v284
    %423 = vmatpush1.msra.mxu0 %v283
    %424 = vmatprep.subr.mxu0 %v280
    %425 = vmatpush1.msra.mxu0 %v279
    %426 = vmatprep.subr.mxu0 %v276
    %427 = vmatpush1.msra.mxu0 %v275
    %428 = vmatprep.subr.mxu0 %v272
    %429 = vmatpush1.msra.mxu0 %v271
    %430 = vmatprep.subr.mxu0 %v268
    %431 = vmatpush1.msra.mxu0 %v267
    %432 = vmatprep.subr.mxu0 0.0
    %433 = vmatpush2.msra.mxu0 0.0
    %434 = vmatprep.subr.mxu0 0.0
    %435 = vmatpush2.msra.mxu0 0.0
    %436 = vmatprep.subr.mxu0 0.0
    %437 = vmatpush2.msra.mxu0 0.0
    %438 = vmatprep.subr.mxu0 0.0
    %439 = vmatpush2.msra.mxu0 0.0
    %440 = vmatprep.subr.mxu0 0.0
    %441 = vmatpush2.msra.mxu0 0.0
    %442 = vmatprep.subr.mxu0 0.0
    %443 = vmatpush2.msra.mxu0 0.0
    %444 = vmatprep.subr.mxu0 0.0
    %445 = vmatpush2.msra.mxu0 0.0
    %446 = vmatprep.subr.mxu0 0.0
    %447 = vmatpush2.msra.mxu0 0.0
    %448 = vmatprep.subr.mxu0 0.0
    %449 = vmatpush2.msra.mxu0 0.0
    %450 = vmatprep.subr.mxu0 0.0
    %451 = vmatpush2.msra.mxu0 0.0
    %452 = vmatprep.subr.mxu0 0.0
    %453 = vmatpush2.msra.mxu0 0.0
    %454 = vmatprep.subr.mxu0 0.0
    %455 = vmatpush2.msra.mxu0 0.0
    %456 = vmatprep.subr.mxu0 0.0
    %457 = vmatpush2.msra.mxu0 0.0
    %458 = vmatprep.subr.mxu0 0.0
    %459 = vmatpush2.msra.mxu0 0.0
    %460 = vmatprep.subr.mxu0 0.0
    %461 = vmatpush2.msra.mxu0 0.0
    %462 = vmatprep.subr.mxu0 0.0
    %463 = vmatpush2.msra.mxu0 0.0
    %464 = vmatprep.mubr.f32.mxu0 0.0
    %465 = vmatmul.mubr.f32.gmra.mxu0 0.0
    %v466 = vpop.f32.mrf.mxu0
    %v467 = vadd.f32 0.0, %v466
    %v468 = vpop.f32.mrf.mxu0
    %v469 = vadd.f32 0.0, %v468
    %470 = vdwg.mxu0
    %v471 = vadd.f32 %v261, %v396
    %v472 = vadd.f32 %v262, %v398
    %v473 = vadd.f32 %v263, %v467
    %v474 = vadd.f32 %v264, %v469
    %v475 = vxor.u32 %v471, 2147483648
    %v476 = vmul.f32 %v475, 1.442695
    %v477 = vpow.pop %v476
    %v478 = vadd.f32 %v477, 1.0
    %v479 = vrcp.pop %v478
    %v480 = vmul.f32 1.0, %v479
    %v481 = vxor.u32 %v472, 2147483648
    %v482 = vmul.f32 %v481, 1.442695
    %v483 = vpow.pop %v482
    %v484 = vadd.f32 %v483, 1.0
    %v485 = vrcp.pop %v484
    %v486 = vmul.f32 1.0, %v485
    %v487 = vtanh.pop %v473
    %v488 = vxor.u32 %v474, 2147483648
    %v489 = vmul.f32 %v488, 1.442695
    %v490 = vpow.pop %v489
    %v491 = vadd.f32 %v490, 1.0
    %v492 = vrcp.pop %v491
    %v493 = vmul.f32 1.0, %v492
    %v494 = vmul.f32 %v486, 0.0
    %v495 = vmul.f32 %v480, %v487
    %v496 = vadd.f32 %v494, %v495
    %v497 = vtanh.pop %v496
    %v498 = vmul.f32 %v493, %v497
    %499 = vst [vmem:[#allocation2] sm:$0xff] %v498
    %v500 = vld [vmem:[#allocation3 + $0x20] sm:$0xff]
    %v501 = vld [vmem:[#allocation3 + $0x28] sm:$0xff]
    %v502 = vld [vmem:[#allocation3 + $0x30] sm:$0xff]
    %v503 = vld [vmem:[#allocation3 + $0x38] sm:$0xff]
    %v504 = vld [vmem:[#allocation4] sm:$0xff]
    %v505 = vld [vmem:[#allocation4 + $0x8] sm:$0xff]
    %v506 = vld [vmem:[#allocation4 + $0x10] sm:$0xff]
    %v507 = vld [vmem:[#allocation4 + $0x18] sm:$0xff]
    %v508 = vld [vmem:[#allocation4 + $0x20] sm:$0xff]
    %v509 = vld [vmem:[#allocation4 + $0x28] sm:$0xff]
    %v510 = vld [vmem:[#allocation4 + $0x30] sm:$0xff]
    %v511 = vld [vmem:[#allocation4 + $0x38] sm:$0xff]
    %v512 = vld [vmem:[#allocation4 + $0x40] sm:$0xff]
    %v513 = vld [vmem:[#allocation4 + $0x48] sm:$0xff]
    %v514 = vld [vmem:[#allocation4 + $0x50] sm:$0xff]
    %v515 = vld [vmem:[#allocation4 + $0x58] sm:$0xff]
    %v516 = vld [vmem:[#allocation4 + $0x60] sm:$0xff]
    %v517 = vld [vmem:[#allocation4 + $0x68] sm:$0xff]
    %v518 = vld [vmem:[#allocation4 + $0x70] sm:$0xff]
    %v519 = vld [vmem:[#allocation4 + $0x78] sm:$0xff]
    %v520 = vld [vmem:[#allocation4 + $0x80] sm:$0xff]
    %v521 = vld [vmem:[#allocation4 + $0x88] sm:$0xff]
    %v522 = vld [vmem:[#allocation4 + $0x90] sm:$0xff]
    %v523 = vld [vmem:[#allocation4 + $0x98] sm:$0xff]
    %v524 = vld [vmem:[#allocation4 + $0xa0] sm:$0xff]
    %v525 = vld [vmem:[#allocation4 + $0xa8] sm:$0xff]
    %v526 = vld [vmem:[#allocation4 + $0xb0] sm:$0xff]
    %v527 = vld [vmem:[#allocation4 + $0xb8] sm:$0xff]
    %v528 = vld [vmem:[#allocation4 + $0xc0] sm:$0xff]
    %v529 = vld [vmem:[#allocation4 + $0xc8] sm:$0xff]
    %v530 = vld [vmem:[#allocation4 + $0xd0] sm:$0xff]
    %v531 = vld [vmem:[#allocation4 + $0xd8] sm:$0xff]
    %v532 = vld [vmem:[#allocation4 + $0xe0] sm:$0xff]
    %v533 = vld [vmem:[#allocation4 + $0xe8] sm:$0xff]
    %v534 = vld [vmem:[#allocation4 + $0xf0] sm:$0xff]
    %v535 = vld [vmem:[#allocation4 + $0xf8] sm:$0xff]
    %v536 = vld [vmem:[#allocation4 + $0x100] sm:$0xff]
    %v537 = vld [vmem:[#allocation4 + $0x108] sm:$0xff]
    %v538 = vld [vmem:[#allocation4 + $0x110] sm:$0xff]
    %v539 = vld [vmem:[#allocation4 + $0x118] sm:$0xff]
    %v540 = vld [vmem:[#allocation4 + $0x120] sm:$0xff]
    %v541 = vld [vmem:[#allocation4 + $0x128] sm:$0xff]
    %v542 = vld [vmem:[#allocation4 + $0x130] sm:$0xff]
    %v543 = vld [vmem:[#allocation4 + $0x138] sm:$0xff]
    %v544 = vld [vmem:[#allocation4 + $0x140] sm:$0xff]
    %v545 = vld [vmem:[#allocation4 + $0x148] sm:$0xff]
    %v546 = vld [vmem:[#allocation4 + $0x150] sm:$0xff]
    %v547 = vld [vmem:[#allocation4 + $0x158] sm:$0xff]
    %v548 = vld [vmem:[#allocation4 + $0x160] sm:$0xff]
    %v549 = vld [vmem:[#allocation4 + $0x168] sm:$0xff]
    %v550 = vld [vmem:[#allocation4 + $0x170] sm:$0xff]
    %v551 = vld [vmem:[#allocation4 + $0x178] sm:$0xff]
    %v552 = vld [vmem:[#allocation4 + $0x180] sm:$0xff]
    %v553 = vld [vmem:[#allocation4 + $0x188] sm:$0xff]
    %v554 = vld [vmem:[#allocation4 + $0x190] sm:$0xff]
    %v555 = vld [vmem:[#allocation4 + $0x198] sm:$0xff]
    %v556 = vld [vmem:[#allocation4 + $0x1a0] sm:$0xff]
    %v557 = vld [vmem:[#allocation4 + $0x1a8] sm:$0xff]
    %v558 = vld [vmem:[#allocation4 + $0x1b0] sm:$0xff]
    %v559 = vld [vmem:[#allocation4 + $0x1b8] sm:$0xff]
    %v560 = vld [vmem:[#allocation4 + $0x1c0] sm:$0xff]
    %v561 = vld [vmem:[#allocation4 + $0x1c8] sm:$0xff]
    %v562 = vld [vmem:[#allocation4 + $0x1d0] sm:$0xff]
    %v563 = vld [vmem:[#allocation4 + $0x1d8] sm:$0xff]
    %v564 = vld [vmem:[#allocation4 + $0x1e0] sm:$0xff]
    %v565 = vld [vmem:[#allocation4 + $0x1e8] sm:$0xff]
    %v566 = vld [vmem:[#allocation4 + $0x1f0] sm:$0xff]
    %v567 = vld [vmem:[#allocation4 + $0x1f8] sm:$0xff]
    %568 = vmatprep.subr.mxu0 %v565
    %569 = vmatpush1.msra.mxu0 %v564
    %570 = vmatprep.subr.mxu0 %v561
    %571 = vmatpush1.msra.mxu0 %v560
    %572 = vmatprep.subr.mxu0 %v557
    %573 = vmatpush1.msra.mxu0 %v556
    %574 = vmatprep.subr.mxu0 %v553
    %575 = vmatpush1.msra.mxu0 %v552
    %576 = vmatprep.subr.mxu0 %v549
    %577 = vmatpush1.msra.mxu0 %v548
    %578 = vmatprep.subr.mxu0 %v545
    %579 = vmatpush1.msra.mxu0 %v544
    %580 = vmatprep.subr.mxu0 %v541
    %581 = vmatpush1.msra.mxu0 %v540
    %582 = vmatprep.subr.mxu0 %v537
    %583 = vmatpush1.msra.mxu0 %v536
    %584 = vmatprep.subr.mxu0 %v533
    %585 = vmatpush1.msra.mxu0 %v532
    %586 = vmatprep.subr.mxu0 %v529
    %587 = vmatpush1.msra.mxu0 %v528
    %588 = vmatprep.subr.mxu0 %v525
    %589 = vmatpush1.msra.mxu0 %v524
    %590 = vmatprep.subr.mxu0 %v521
    %591 = vmatpush1.msra.mxu0 %v520
    %592 = vmatprep.subr.mxu0 %v517
    %593 = vmatpush1.msra.mxu0 %v516
    %594 = vmatprep.subr.mxu0 %v513
    %595 = vmatpush1.msra.mxu0 %v512
    %596 = vmatprep.subr.mxu0 %v509
    %597 = vmatpush1.msra.mxu0 %v508
    %598 = vmatprep.subr.mxu0 %v505
    %599 = vmatpush1.msra.mxu0 %v504
    %600 = vmatprep.subr.mxu0 0.0
    %601 = vmatpush2.msra.mxu0 0.0
    %602 = vmatprep.subr.mxu0 0.0
    %603 = vmatpush2.msra.mxu0 0.0
    %604 = vmatprep.subr.mxu0 0.0
    %605 = vmatpush2.msra.mxu0 0.0
    %606 = vmatprep.subr.mxu0 0.0
    %607 = vmatpush2.msra.mxu0 0.0
    %608 = vmatprep.subr.mxu0 0.0
    %609 = vmatpush2.msra.mxu0 0.0
    %610 = vmatprep.subr.mxu0 0.0
    %611 = vmatpush2.msra.mxu0 0.0
    %612 = vmatprep.subr.mxu0 0.0
    %613 = vmatpush2.msra.mxu0 0.0
    %614 = vmatprep.subr.mxu0 0.0
    %615 = vmatpush2.msra.mxu0 0.0
    %616 = vmatprep.subr.mxu0 0.0
    %617 = vmatpush2.msra.mxu0 0.0
    %618 = vmatprep.subr.mxu0 0.0
    %619 = vmatpush2.msra.mxu0 0.0
    %620 = vmatprep.subr.mxu0 0.0
    %621 = vmatpush2.msra.mxu0 0.0
    %622 = vmatprep.subr.mxu0 0.0
    %623 = vmatpush2.msra.mxu0 0.0
    %624 = vmatprep.subr.mxu0 0.0
    %625 = vmatpush2.msra.mxu0 0.0
    %626 = vmatprep.subr.mxu0 0.0
    %627 = vmatpush2.msra.mxu0 0.0
    %628 = vmatprep.subr.mxu0 0.0
    %629 = vmatpush2.msra.mxu0 0.0
    %630 = vmatprep.subr.mxu0 0.0
    %631 = vmatpush2.msra.mxu0 0.0
    %632 = vmatprep.mubr.f32.mxu0 0.0
    %633 = vmatmul.mubr.f32.gmra.mxu0 %v498
    %v634 = vpop.f32.mrf.mxu0
    %v635 = vadd.f32 0.0, %v634
    %v636 = vpop.f32.mrf.mxu0
    %v637 = vadd.f32 0.0, %v636
    %638 = vdwg.mxu0
    %639 = vmatprep.subr.mxu0 %v567
    %640 = vmatpush1.msra.mxu0 %v566
    %641 = vmatprep.subr.mxu0 %v563
    %642 = vmatpush1.msra.mxu0 %v562
    %643 = vmatprep.subr.mxu0 %v559
    %644 = vmatpush1.msra.mxu0 %v558
    %645 = vmatprep.subr.mxu0 %v555
    %646 = vmatpush1.msra.mxu0 %v554
    %647 = vmatprep.subr.mxu0 %v551
    %648 = vmatpush1.msra.mxu0 %v550
    %649 = vmatprep.subr.mxu0 %v547
    %650 = vmatpush1.msra.mxu0 %v546
    %651 = vmatprep.subr.mxu0 %v543
    %652 = vmatpush1.msra.mxu0 %v542
    %653 = vmatprep.subr.mxu0 %v539
    %654 = vmatpush1.msra.mxu0 %v538
    %655 = vmatprep.subr.mxu0 %v535
    %656 = vmatpush1.msra.mxu0 %v534
    %657 = vmatprep.subr.mxu0 %v531
    %658 = vmatpush1.msra.mxu0 %v530
    %659 = vmatprep.subr.mxu0 %v527
    %660 = vmatpush1.msra.mxu0 %v526
    %661 = vmatprep.subr.mxu0 %v523
    %662 = vmatpush1.msra.mxu0 %v522
    %663 = vmatprep.subr.mxu0 %v519
    %664 = vmatpush1.msra.mxu0 %v518
    %665 = vmatprep.subr.mxu0 %v515
    %666 = vmatpush1.msra.mxu0 %v514
    %667 = vmatprep.subr.mxu0 %v511
    %668 = vmatpush1.msra.mxu0 %v510
    %669 = vmatprep.subr.mxu0 %v507
    %670 = vmatpush1.msra.mxu0 %v506
    %671 = vmatprep.subr.mxu0 0.0
    %672 = vmatpush2.msra.mxu0 0.0
    %673 = vmatprep.subr.mxu0 0.0
    %674 = vmatpush2.msra.mxu0 0.0
    %675 = vmatprep.subr.mxu0 0.0
    %676 = vmatpush2.msra.mxu0 0.0
    %677 = vmatprep.subr.mxu0 0.0
    %678 = vmatpush2.msra.mxu0 0.0
    %679 = vmatprep.subr.mxu0 0.0
    %680 = vmatpush2.msra.mxu0 0.0
    %681 = vmatprep.subr.mxu0 0.0
    %682 = vmatpush2.msra.mxu0 0.0
    %683 = vmatprep.subr.mxu0 0.0
    %684 = vmatpush2.msra.mxu0 0.0
    %685 = vmatprep.subr.mxu0 0.0
    %686 = vmatpush2.msra.mxu0 0.0
    %687 = vmatprep.subr.mxu0 0.0
    %688 = vmatpush2.msra.mxu0 0.0
    %689 = vmatprep.subr.mxu0 0.0
    %690 = vmatpush2.msra.mxu0 0.0
    %691 = vmatprep.subr.mxu0 0.0
    %692 = vmatpush2.msra.mxu0 0.0
    %693 = vmatprep.subr.mxu0 0.0
    %694 = vmatpush2.msra.mxu0 0.0
    %695 = vmatprep.subr.mxu0 0.0
    %696 = vmatpush2.msra.mxu0 0.0
    %697 = vmatprep.subr.mxu0 0.0
    %698 = vmatpush2.msra.mxu0 0.0
    %699 = vmatprep.subr.mxu0 0.0
    %700 = vmatpush2.msra.mxu0 0.0
    %701 = vmatprep.subr.mxu0 0.0
    %702 = vmatpush2.msra.mxu0 0.0
    %703 = vmatprep.mubr.f32.mxu0 0.0
    %704 = vmatmul.mubr.f32.gmra.mxu0 %v498
    %v705 = vpop.f32.mrf.mxu0
    %v706 = vadd.f32 0.0, %v705
    %v707 = vpop.f32.mrf.mxu0
    %v708 = vadd.f32 0.0, %v707
    %709 = vdwg.mxu0
    %v710 = vadd.f32 %v500, %v635
    %v711 = vadd.f32 %v501, %v637
    %v712 = vadd.f32 %v502, %v706
    %v713 = vadd.f32 %v503, %v708
    %v714 = vxor.u32 %v710, 2147483648
    %v715 = vmul.f32 %v714, 1.442695
    %v716 = vpow.pop %v715
    %v717 = vadd.f32 %v716, 1.0
    %v718 = vrcp.pop %v717
    %v719 = vmul.f32 1.0, %v718
    %v720 = vxor.u32 %v711, 2147483648
    %v721 = vmul.f32 %v720, 1.442695
    %v722 = vpow.pop %v721
    %v723 = vadd.f32 %v722, 1.0
    %v724 = vrcp.pop %v723
    %v725 = vmul.f32 1.0, %v724
    %v726 = vtanh.pop %v712
    %v727 = vxor.u32 %v713, 2147483648
    %v728 = vmul.f32 %v727, 1.442695
    %v729 = vpow.pop %v728
    %v730 = vadd.f32 %v729, 1.0
    %v731 = vrcp.pop %v730
    %v732 = vmul.f32 1.0, %v731
    %v733 = vmul.f32 %v725, %v496
    %v734 = vmul.f32 %v719, %v726
    %v735 = vadd.f32 %v733, %v734
    %v736 = vtanh.pop %v735
    %v737 = vmul.f32 %v732, %v736
    %738 = vst [vmem:[#allocation2 + $0x8] sm:$0xff] %v737
    %v739 = vld [vmem:[#allocation3 + $0x40] sm:$0xff]
    %v740 = vld [vmem:[#allocation3 + $0x48] sm:$0xff]
    %v741 = vld [vmem:[#allocation3 + $0x50] sm:$0xff]
    %v742 = vld [vmem:[#allocation3 + $0x58] sm:$0xff]
    %v743 = vld [vmem:[#allocation4] sm:$0xff]
    %v744 = vld [vmem:[#allocation4 + $0x8] sm:$0xff]
    %v745 = vld [vmem:[#allocation4 + $0x10] sm:$0xff]
    %v746 = vld [vmem:[#allocation4 + $0x18] sm:$0xff]
    %v747 = vld [vmem:[#allocation4 + $0x20] sm:$0xff]
    %v748 = vld [vmem:[#allocation4 + $0x28] sm:$0xff]
    %v749 = vld [vmem:[#allocation4 + $0x30] sm:$0xff]
    %v750 = vld [vmem:[#allocation4 + $0x38] sm:$0xff]
    %v751 = vld [vmem:[#allocation4 + $0x40] sm:$0xff]
    %v752 = vld [vmem:[#allocation4 + $0x48] sm:$0xff]
    %v753 = vld [vmem:[#allocation4 + $0x50] sm:$0xff]
    %v754 = vld [vmem:[#allocation4 + $0x58] sm:$0xff]
    %v755 = vld [vmem:[#allocation4 + $0x60] sm:$0xff]
    %v756 = vld [vmem:[#allocation4 + $0x68] sm:$0xff]
    %v757 = vld [vmem:[#allocation4 + $0x70] sm:$0xff]
    %v758 = vld [vmem:[#allocation4 + $0x78] sm:$0xff]
    %v759 = vld [vmem:[#allocation4 + $0x80] sm:$0xff]
    %v760 = vld [vmem:[#allocation4 + $0x88] sm:$0xff]
    %v761 = vld [vmem:[#allocation4 + $0x90] sm:$0xff]
    %v762 = vld [vmem:[#allocation4 + $0x98] sm:$0xff]
    %v763 = vld [vmem:[#allocation4 + $0xa0] sm:$0xff]
    %v764 = vld [vmem:[#allocation4 + $0xa8] sm:$0xff]
    %v765 = vld [vmem:[#allocation4 + $0xb0] sm:$0xff]
    %v766 = vld [vmem:[#allocation4 + $0xb8] sm:$0xff]
    %v767 = vld [vmem:[#allocation4 + $0xc0] sm:$0xff]
    %v768 = vld [vmem:[#allocation4 + $0xc8] sm:$0xff]
    %v769 = vld [vmem:[#allocation4 + $0xd0] sm:$0xff]
    %v770 = vld [vmem:[#allocation4 + $0xd8] sm:$0xff]
    %v771 = vld [vmem:[#allocation4 + $0xe0] sm:$0xff]
    %v772 = vld [vmem:[#allocation4 + $0xe8] sm:$0xff]
    %v773 = vld [vmem:[#allocation4 + $0xf0] sm:$0xff]
    %v774 = vld [vmem:[#allocation4 + $0xf8] sm:$0xff]
    %v775 = vld [vmem:[#allocation4 + $0x100] sm:$0xff]
    %v776 = vld [vmem:[#allocation4 + $0x108] sm:$0xff]
    %v777 = vld [vmem:[#allocation4 + $0x110] sm:$0xff]
    %v778 = vld [vmem:[#allocation4 + $0x118] sm:$0xff]
    %v779 = vld [vmem:[#allocation4 + $0x120] sm:$0xff]
    %v780 = vld [vmem:[#allocation4 + $0x128] sm:$0xff]
    %v781 = vld [vmem:[#allocation4 + $0x130] sm:$0xff]
    %v782 = vld [vmem:[#allocation4 + $0x138] sm:$0xff]
    %v783 = vld [vmem:[#allocation4 + $0x140] sm:$0xff]
    %v784 = vld [vmem:[#allocation4 + $0x148] sm:$0xff]
    %v785 = vld [vmem:[#allocation4 + $0x150] sm:$0xff]
    %v786 = vld [vmem:[#allocation4 + $0x158] sm:$0xff]
    %v787 = vld [vmem:[#allocation4 + $0x160] sm:$0xff]
    %v788 = vld [vmem:[#allocation4 + $0x168] sm:$0xff]
    %v789 = vld [vmem:[#allocation4 + $0x170] sm:$0xff]
    %v790 = vld [vmem:[#allocation4 + $0x178] sm:$0xff]
    %v791 = vld [vmem:[#allocation4 + $0x180] sm:$0xff]
    %v792 = vld [vmem:[#allocation4 + $0x188] sm:$0xff]
    %v793 = vld [vmem:[#allocation4 + $0x190] sm:$0xff]
    %v794 = vld [vmem:[#allocation4 + $0x198] sm:$0xff]
    %v795 = vld [vmem:[#allocation4 + $0x1a0] sm:$0xff]
    %v796 = vld [vmem:[#allocation4 + $0x1a8] sm:$0xff]
    %v797 = vld [vmem:[#allocation4 + $0x1b0] sm:$0xff]
    %v798 = vld [vmem:[#allocation4 + $0x1b8] sm:$0xff]
    %v799 = vld [vmem:[#allocation4 + $0x1c0] sm:$0xff]
    %v800 = vld [vmem:[#allocation4 + $0x1c8] sm:$0xff]
    %v801 = vld [vmem:[#allocation4 + $0x1d0] sm:$0xff]
    %v802 = vld [vmem:[#allocation4 + $0x1d8] sm:$0xff]
    %v803 = vld [vmem:[#allocation4 + $0x1e0] sm:$0xff]
    %v804 = vld [vmem:[#allocation4 + $0x1e8] sm:$0xff]
    %v805 = vld [vmem:[#allocation4 + $0x1f0] sm:$0xff]
    %v806 = vld [vmem:[#allocation4 + $0x1f8] sm:$0xff]
    %807 = vmatprep.subr.mxu0 %v804
    %808 = vmatpush1.msra.mxu0 %v803
    %809 = vmatprep.subr.mxu0 %v800
    %810 = vmatpush1.msra.mxu0 %v799
    %811 = vmatprep.subr.mxu0 %v796
    %812 = vmatpush1.msra.mxu0 %v795
    %813 = vmatprep.subr.mxu0 %v792
    %814 = vmatpush1.msra.mxu0 %v791
    %815 = vmatprep.subr.mxu0 %v788
    %816 = vmatpush1.msra.mxu0 %v787
    %817 = vmatprep.subr.mxu0 %v784
    %818 = vmatpush1.msra.mxu0 %v783
    %819 = vmatprep.subr.mxu0 %v780
    %820 = vmatpush1.msra.mxu0 %v779
    %821 = vmatprep.subr.mxu0 %v776
    %822 = vmatpush1.msra.mxu0 %v775
    %823 = vmatprep.subr.mxu0 %v772
    %824 = vmatpush1.msra.mxu0 %v771
    %825 = vmatprep.subr.mxu0 %v768
    %826 = vmatpush1.msra.mxu0 %v767
    %827 = vmatprep.subr.mxu0 %v764
    %828 = vmatpush1.msra.mxu0 %v763
    %829 = vmatprep.subr.mxu0 %v760
    %830 = vmatpush1.msra.mxu0 %v759
    %831 = vmatprep.subr.mxu0 %v756
    %832 = vmatpush1.msra.mxu0 %v755
    %833 = vmatprep.subr.mxu0 %v752
    %834 = vmatpush1.msra.mxu0 %v751
    %835 = vmatprep.subr.mxu0 %v748
    %836 = vmatpush1.msra.mxu0 %v747
    %837 = vmatprep.subr.mxu0 %v744
    %838 = vmatpush1.msra.mxu0 %v743
    %839 = vmatprep.subr.mxu0 0.0
    %840 = vmatpush2.msra.mxu0 0.0
    %841 = vmatprep.subr.mxu0 0.0
    %842 = vmatpush2.msra.mxu0 0.0
    %843 = vmatprep.subr.mxu0 0.0
    %844 = vmatpush2.msra.mxu0 0.0
    %845 = vmatprep.subr.mxu0 0.0
    %846 = vmatpush2.msra.mxu0 0.0
    %847 = vmatprep.subr.mxu0 0.0
    %848 = vmatpush2.msra.mxu0 0.0
    %849 = vmatprep.subr.mxu0 0.0
    %850 = vmatpush2.msra.mxu0 0.0
    %851 = vmatprep.subr.mxu0 0.0
    %852 = vmatpush2.msra.mxu0 0.0
    %853 = vmatprep.subr.mxu0 0.0
    %854 = vmatpush2.msra.mxu0 0.0
    %855 = vmatprep.subr.mxu0 0.0
    %856 = vmatpush2.msra.mxu0 0.0
    %857 = vmatprep.subr.mxu0 0.0
    %858 = vmatpush2.msra.mxu0 0.0
    %859 = vmatprep.subr.mxu0 0.0
    %860 = vmatpush2.msra.mxu0 0.0
    %861 = vmatprep.subr.mxu0 0.0
    %862 = vmatpush2.msra.mxu0 0.0
    %863 = vmatprep.subr.mxu0 0.0
    %864 = vmatpush2.msra.mxu0 0.0
    %865 = vmatprep.subr.mxu0 0.0
    %866 = vmatpush2.msra.mxu0 0.0
    %867 = vmatprep.subr.mxu0 0.0
    %868 = vmatpush2.msra.mxu0 0.0
    %869 = vmatprep.subr.mxu0 0.0
    %870 = vmatpush2.msra.mxu0 0.0
    %871 = vmatprep.mubr.f32.mxu0 0.0
    %872 = vmatmul.mubr.f32.gmra.mxu0 %v737
    %v873 = vpop.f32.mrf.mxu0
    %v874 = vadd.f32 0.0, %v873
    %v875 = vpop.f32.mrf.mxu0
    %v876 = vadd.f32 0.0, %v875
    %877 = vdwg.mxu0
    %878 = vmatprep.subr.mxu0 %v806
    %879 = vmatpush1.msra.mxu0 %v805
    %880 = vmatprep.subr.mxu0 %v802
    %881 = vmatpush1.msra.mxu0 %v801
    %882 = vmatprep.subr.mxu0 %v798
    %883 = vmatpush1.msra.mxu0 %v797
    %884 = vmatprep.subr.mxu0 %v794
    %885 = vmatpush1.msra.mxu0 %v793
    %886 = vmatprep.subr.mxu0 %v790
    %887 = vmatpush1.msra.mxu0 %v789
    %888 = vmatprep.subr.mxu0 %v786
    %889 = vmatpush1.msra.mxu0 %v785
    %890 = vmatprep.subr.mxu0 %v782
    %891 = vmatpush1.msra.mxu0 %v781
    %892 = vmatprep.subr.mxu0 %v778
    %893 = vmatpush1.msra.mxu0 %v777
    %894 = vmatprep.subr.mxu0 %v774
    %895 = vmatpush1.msra.mxu0 %v773
    %896 = vmatprep.subr.mxu0 %v770
    %897 = vmatpush1.msra.mxu0 %v769
    %898 = vmatprep.subr.mxu0 %v766
    %899 = vmatpush1.msra.mxu0 %v765
    %900 = vmatprep.subr.mxu0 %v762
    %901 = vmatpush1.msra.mxu0 %v761
    %902 = vmatprep.subr.mxu0 %v758
    %903 = vmatpush1.msra.mxu0 %v757
    %904 = vmatprep.subr.mxu0 %v754
    %905 = vmatpush1.msra.mxu0 %v753
    %906 = vmatprep.subr.mxu0 %v750
    %907 = vmatpush1.msra.mxu0 %v749
    %908 = vmatprep.subr.mxu0 %v746
    %909 = vmatpush1.msra.mxu0 %v745
    %910 = vmatprep.subr.mxu0 0.0
    %911 = vmatpush2.msra.mxu0 0.0
    %912 = vmatprep.subr.mxu0 0.0
    %913 = vmatpush2.msra.mxu0 0.0
    %914 = vmatprep.subr.mxu0 0.0
    %915 = vmatpush2.msra.mxu0 0.0
    %916 = vmatprep.subr.mxu0 0.0
    %917 = vmatpush2.msra.mxu0 0.0
    %918 = vmatprep.subr.mxu0 0.0
    %919 = vmatpush2.msra.mxu0 0.0
    %920 = vmatprep.subr.mxu0 0.0
    %921 = vmatpush2.msra.mxu0 0.0
    %922 = vmatprep.subr.mxu0 0.0
    %923 = vmatpush2.msra.mxu0 0.0
    %924 = vmatprep.subr.mxu0 0.0
    %925 = vmatpush2.msra.mxu0 0.0
    %926 = vmatprep.subr.mxu0 0.0
    %927 = vmatpush2.msra.mxu0 0.0
    %928 = vmatprep.subr.mxu0 0.0
    %929 = vmatpush2.msra.mxu0 0.0
    %930 = vmatprep.subr.mxu0 0.0
    %931 = vmatpush2.msra.mxu0 0.0
    %932 = vmatprep.subr.mxu0 0.0
    %933 = vmatpush2.msra.mxu0 0.0
    %934 = vmatprep.subr.mxu0 0.0
    %935 = vmatpush2.msra.mxu0 0.0
    %936 = vmatprep.subr.mxu0 0.0
    %937 = vmatpush2.msra.mxu0 0.0
    %938 = vmatprep.subr.mxu0 0.0
    %939 = vmatpush2.msra.mxu0 0.0
    %940 = vmatprep.subr.mxu0 0.0
    %941 = vmatpush2.msra.mxu0 0.0
    %942 = vmatprep.mubr.f32.mxu0 0.0
    %943 = vmatmul.mubr.f32.gmra.mxu0 %v737
    %v944 = vpop.f32.mrf.mxu0
    %v945 = vadd.f32 0.0, %v944
    %v946 = vpop.f32.mrf.mxu0
    %v947 = vadd.f32 0.0, %v946
    %948 = vdwg.mxu0
    %v949 = vadd.f32 %v739, %v874
    %v950 = vadd.f32 %v740, %v876
    %v951 = vadd.f32 %v741, %v945
    %v952 = vadd.f32 %v742, %v947
    %v953 = vxor.u32 %v949, 2147483648
    %v954 = vmul.f32 %v953, 1.442695
    %v955 = vpow.pop %v954
    %v956 = vadd.f32 %v955, 1.0
    %v957 = vrcp.pop %v956
    %v958 = vmul.f32 1.0, %v957
    %v959 = vxor.u32 %v950, 2147483648
    %v960 = vmul.f32 %v959, 1.442695
    %v961 = vpow.pop %v960
    %v962 = vadd.f32 %v961, 1.0
    %v963 = vrcp.pop %v962
    %v964 = vmul.f32 1.0, %v963
    %v965 = vtanh.pop %v951
    %v966 = vxor.u32 %v952, 2147483648
    %v967 = vmul.f32 %v966, 1.442695
    %v968 = vpow.pop %v967
    %v969 = vadd.f32 %v968, 1.0
    %v970 = vrcp.pop %v969
    %v971 = vmul.f32 1.0, %v970
    %v972 = vmul.f32 %v964, %v735
    %v973 = vmul.f32 %v958, %v965
    %v974 = vadd.f32 %v972, %v973
    %v975 = vtanh.pop %v974
    %v976 = vmul.f32 %v971, %v975
    %977 = vst [vmem:[#allocation2 + $0x10] sm:$0xff] %v976
    %v978 = vld [vmem:[#allocation3 + $0x60] sm:$0xff]
    %v979 = vld [vmem:[#allocation3 + $0x68] sm:$0xff]
    %v980 = vld [vmem:[#allocation3 + $0x70] sm:$0xff]
    %v981 = vld [vmem:[#allocation3 + $0x78] sm:$0xff]
    %v982 = vld [vmem:[#allocation4] sm:$0xff]
    %v983 = vld [vmem:[#allocation4 + $0x8] sm:$0xff]
    %v984 = vld [vmem:[#allocation4 + $0x10] sm:$0xff]
    %v985 = vld [vmem:[#allocation4 + $0x18] sm:$0xff]
    %v986 = vld [vmem:[#allocation4 + $0x20] sm:$0xff]
    %v987 = vld [vmem:[#allocation4 + $0x28] sm:$0xff]
    %v988 = vld [vmem:[#allocation4 + $0x30] sm:$0xff]
    %v989 = vld [vmem:[#allocation4 + $0x38] sm:$0xff]
    %v990 = vld [vmem:[#allocation4 + $0x40] sm:$0xff]
    %v991 = vld [vmem:[#allocation4 + $0x48] sm:$0xff]
    %v992 = vld [vmem:[#allocation4 + $0x50] sm:$0xff]
    %v993 = vld [vmem:[#allocation4 + $0x58] sm:$0xff]
    %v994 = vld [vmem:[#allocation4 + $0x60] sm:$0xff]
    %v995 = vld [vmem:[#allocation4 + $0x68] sm:$0xff]
    %v996 = vld [vmem:[#allocation4 + $0x70] sm:$0xff]
    %v997 = vld [vmem:[#allocation4 + $0x78] sm:$0xff]
    %v998 = vld [vmem:[#allocation4 + $0x80] sm:$0xff]
    %v999 = vld [vmem:[#allocation4 + $0x88] sm:$0xff]
    %v1000 = vld [vmem:[#allocation4 + $0x90] sm:$0xff]
    %v1001 = vld [vmem:[#allocation4 + $0x98] sm:$0xff]
    %v1002 = vld [vmem:[#allocation4 + $0xa0] sm:$0xff]
    %v1003 = vld [vmem:[#allocation4 + $0xa8] sm:$0xff]
    %v1004 = vld [vmem:[#allocation4 + $0xb0] sm:$0xff]
    %v1005 = vld [vmem:[#allocation4 + $0xb8] sm:$0xff]
    %v1006 = vld [vmem:[#allocation4 + $0xc0] sm:$0xff]
    %v1007 = vld [vmem:[#allocation4 + $0xc8] sm:$0xff]
    %v1008 = vld [vmem:[#allocation4 + $0xd0] sm:$0xff]
    %v1009 = vld [vmem:[#allocation4 + $0xd8] sm:$0xff]
    %v1010 = vld [vmem:[#allocation4 + $0xe0] sm:$0xff]
    %v1011 = vld [vmem:[#allocation4 + $0xe8] sm:$0xff]
    %v1012 = vld [vmem:[#allocation4 + $0xf0] sm:$0xff]
    %v1013 = vld [vmem:[#allocation4 + $0xf8] sm:$0xff]
    %v1014 = vld [vmem:[#allocation4 + $0x100] sm:$0xff]
    %v1015 = vld [vmem:[#allocation4 + $0x108] sm:$0xff]
    %v1016 = vld [vmem:[#allocation4 + $0x110] sm:$0xff]
    %v1017 = vld [vmem:[#allocation4 + $0x118] sm:$0xff]
    %v1018 = vld [vmem:[#allocation4 + $0x120] sm:$0xff]
    %v1019 = vld [vmem:[#allocation4 + $0x128] sm:$0xff]
    %v1020 = vld [vmem:[#allocation4 + $0x130] sm:$0xff]
    %v1021 = vld [vmem:[#allocation4 + $0x138] sm:$0xff]
    %v1022 = vld [vmem:[#allocation4 + $0x140] sm:$0xff]
    %v1023 = vld [vmem:[#allocation4 + $0x148] sm:$0xff]
    %v1024 = vld [vmem:[#allocation4 + $0x150] sm:$0xff]
    %v1025 = vld [vmem:[#allocation4 + $0x158] sm:$0xff]
    %v1026 = vld [vmem:[#allocation4 + $0x160] sm:$0xff]
    %v1027 = vld [vmem:[#allocation4 + $0x168] sm:$0xff]
    %v1028 = vld [vmem:[#allocation4 + $0x170] sm:$0xff]
    %v1029 = vld [vmem:[#allocation4 + $0x178] sm:$0xff]
    %v1030 = vld [vmem:[#allocation4 + $0x180] sm:$0xff]
    %v1031 = vld [vmem:[#allocation4 + $0x188] sm:$0xff]
    %v1032 = vld [vmem:[#allocation4 + $0x190] sm:$0xff]
    %v1033 = vld [vmem:[#allocation4 + $0x198] sm:$0xff]
    %v1034 = vld [vmem:[#allocation4 + $0x1a0] sm:$0xff]
    %v1035 = vld [vmem:[#allocation4 + $0x1a8] sm:$0xff]
    %v1036 = vld [vmem:[#allocation4 + $0x1b0] sm:$0xff]
    %v1037 = vld [vmem:[#allocation4 + $0x1b8] sm:$0xff]
    %v1038 = vld [vmem:[#allocation4 + $0x1c0] sm:$0xff]
    %v1039 = vld [vmem:[#allocation4 + $0x1c8] sm:$0xff]
    %v1040 = vld [vmem:[#allocation4 + $0x1d0] sm:$0xff]
    %v1041 = vld [vmem:[#allocation4 + $0x1d8] sm:$0xff]
    %v1042 = vld [vmem:[#allocation4 + $0x1e0] sm:$0xff]
    %v1043 = vld [vmem:[#allocation4 + $0x1e8] sm:$0xff]
    %v1044 = vld [vmem:[#allocation4 + $0x1f0] sm:$0xff]
    %v1045 = vld [vmem:[#allocation4 + $0x1f8] sm:$0xff]
    %1046 = vmatprep.subr.mxu0 %v1043
    %1047 = vmatpush1.msra.mxu0 %v1042
    %1048 = vmatprep.subr.mxu0 %v1039
    %1049 = vmatpush1.msra.mxu0 %v1038
    %1050 = vmatprep.subr.mxu0 %v1035
    %1051 = vmatpush1.msra.mxu0 %v1034
    %1052 = vmatprep.subr.mxu0 %v1031
    %1053 = vmatpush1.msra.mxu0 %v1030
    %1054 = vmatprep.subr.mxu0 %v1027
    %1055 = vmatpush1.msra.mxu0 %v1026
    %1056 = vmatprep.subr.mxu0 %v1023
    %1057 = vmatpush1.msra.mxu0 %v1022
    %1058 = vmatprep.subr.mxu0 %v1019
    %1059 = vmatpush1.msra.mxu0 %v1018
    %1060 = vmatprep.subr.mxu0 %v1015
    %1061 = vmatpush1.msra.mxu0 %v1014
    %1062 = vmatprep.subr.mxu0 %v1011
    %1063 = vmatpush1.msra.mxu0 %v1010
    %1064 = vmatprep.subr.mxu0 %v1007
    %1065 = vmatpush1.msra.mxu0 %v1006
    %1066 = vmatprep.subr.mxu0 %v1003
    %1067 = vmatpush1.msra.mxu0 %v1002
    %1068 = vmatprep.subr.mxu0 %v999
    %1069 = vmatpush1.msra.mxu0 %v998
    %1070 = vmatprep.subr.mxu0 %v995
    %1071 = vmatpush1.msra.mxu0 %v994
    %1072 = vmatprep.subr.mxu0 %v991
    %1073 = vmatpush1.msra.mxu0 %v990
    %1074 = vmatprep.subr.mxu0 %v987
    %1075 = vmatpush1.msra.mxu0 %v986
    %1076 = vmatprep.subr.mxu0 %v983
    %1077 = vmatpush1.msra.mxu0 %v982
    %1078 = vmatprep.subr.mxu0 0.0
    %1079 = vmatpush2.msra.mxu0 0.0
    %1080 = vmatprep.subr.mxu0 0.0
    %1081 = vmatpush2.msra.mxu0 0.0
    %1082 = vmatprep.subr.mxu0 0.0
    %1083 = vmatpush2.msra.mxu0 0.0
    %1084 = vmatprep.subr.mxu0 0.0
    %1085 = vmatpush2.msra.mxu0 0.0
    %1086 = vmatprep.subr.mxu0 0.0
    %1087 = vmatpush2.msra.mxu0 0.0
    %1088 = vmatprep.subr.mxu0 0.0
    %1089 = vmatpush2.msra.mxu0 0.0
    %1090 = vmatprep.subr.mxu0 0.0
    %1091 = vmatpush2.msra.mxu0 0.0
    %1092 = vmatprep.subr.mxu0 0.0
    %1093 = vmatpush2.msra.mxu0 0.0
    %1094 = vmatprep.subr.mxu0 0.0
    %1095 = vmatpush2.msra.mxu0 0.0
    %1096 = vmatprep.subr.mxu0 0.0
    %1097 = vmatpush2.msra.mxu0 0.0
    %1098 = vmatprep.subr.mxu0 0.0
    %1099 = vmatpush2.msra.mxu0 0.0
    %1100 = vmatprep.subr.mxu0 0.0
    %1101 = vmatpush2.msra.mxu0 0.0
    %1102 = vmatprep.subr.mxu0 0.0
    %1103 = vmatpush2.msra.mxu0 0.0
    %1104 = vmatprep.subr.mxu0 0.0
    %1105 = vmatpush2.msra.mxu0 0.0
    %1106 = vmatprep.subr.mxu0 0.0
    %1107 = vmatpush2.msra.mxu0 0.0
    %1108 = vmatprep.subr.mxu0 0.0
    %1109 = vmatpush2.msra.mxu0 0.0
    %1110 = vmatprep.mubr.f32.mxu0 0.0
    %1111 = vmatmul.mubr.f32.gmra.mxu0 %v976
    %v1112 = vpop.f32.mrf.mxu0
    %v1113 = vadd.f32 0.0, %v1112
    %v1114 = vpop.f32.mrf.mxu0
    %v1115 = vadd.f32 0.0, %v1114
    %1116 = vdwg.mxu0
    %1117 = vmatprep.subr.mxu0 %v1045
    %1118 = vmatpush1.msra.mxu0 %v1044
    %1119 = vmatprep.subr.mxu0 %v1041
    %1120 = vmatpush1.msra.mxu0 %v1040
    %1121 = vmatprep.subr.mxu0 %v1037
    %1122 = vmatpush1.msra.mxu0 %v1036
    %1123 = vmatprep.subr.mxu0 %v1033
    %1124 = vmatpush1.msra.mxu0 %v1032
    %1125 = vmatprep.subr.mxu0 %v1029
    %1126 = vmatpush1.msra.mxu0 %v1028
    %1127 = vmatprep.subr.mxu0 %v1025
    %1128 = vmatpush1.msra.mxu0 %v1024
    %1129 = vmatprep.subr.mxu0 %v1021
    %1130 = vmatpush1.msra.mxu0 %v1020
    %1131 = vmatprep.subr.mxu0 %v1017
    %1132 = vmatpush1.msra.mxu0 %v1016
    %1133 = vmatprep.subr.mxu0 %v1013
    %1134 = vmatpush1.msra.mxu0 %v1012
    %1135 = vmatprep.subr.mxu0 %v1009
    %1136 = vmatpush1.msra.mxu0 %v1008
    %1137 = vmatprep.subr.mxu0 %v1005
    %1138 = vmatpush1.msra.mxu0 %v1004
    %1139 = vmatprep.subr.mxu0 %v1001
    %1140 = vmatpush1.msra.mxu0 %v1000
    %1141 = vmatprep.subr.mxu0 %v997
    %1142 = vmatpush1.msra.mxu0 %v996
    %1143 = vmatprep.subr.mxu0 %v993
    %1144 = vmatpush1.msra.mxu0 %v992
    %1145 = vmatprep.subr.mxu0 %v989
    %1146 = vmatpush1.msra.mxu0 %v988
    %1147 = vmatprep.subr.mxu0 %v985
    %1148 = vmatpush1.msra.mxu0 %v984
    %1149 = vmatprep.subr.mxu0 0.0
    %1150 = vmatpush2.msra.mxu0 0.0
    %1151 = vmatprep.subr.mxu0 0.0
    %1152 = vmatpush2.msra.mxu0 0.0
    %1153 = vmatprep.subr.mxu0 0.0
    %1154 = vmatpush2.msra.mxu0 0.0
    %1155 = vmatprep.subr.mxu0 0.0
    %1156 = vmatpush2.msra.mxu0 0.0
    %1157 = vmatprep.subr.mxu0 0.0
    %1158 = vmatpush2.msra.mxu0 0.0
    %1159 = vmatprep.subr.mxu0 0.0
    %1160 = vmatpush2.msra.mxu0 0.0
    %1161 = vmatprep.subr.mxu0 0.0
    %1162 = vmatpush2.msra.mxu0 0.0
    %1163 = vmatprep.subr.mxu0 0.0
    %1164 = vmatpush2.msra.mxu0 0.0
    %1165 = vmatprep.subr.mxu0 0.0
    %1166 = vmatpush2.msra.mxu0 0.0
    %1167 = vmatprep.subr.mxu0 0.0
    %1168 = vmatpush2.msra.mxu0 0.0
    %1169 = vmatprep.subr.mxu0 0.0
    %1170 = vmatpush2.msra.mxu0 0.0
    %1171 = vmatprep.subr.mxu0 0.0
    %1172 = vmatpush2.msra.mxu0 0.0
    %1173 = vmatprep.subr.mxu0 0.0
    %1174 = vmatpush2.msra.mxu0 0.0
    %1175 = vmatprep.subr.mxu0 0.0
    %1176 = vmatpush2.msra.mxu0 0.0
    %1177 = vmatprep.subr.mxu0 0.0
    %1178 = vmatpush2.msra.mxu0 0.0
    %1179 = vmatprep.subr.mxu0 0.0
    %1180 = vmatpush2.msra.mxu0 0.0
    %1181 = vmatprep.mubr.f32.mxu0 0.0
    %1182 = vmatmul.mubr.f32.gmra.mxu0 %v976
    %v1183 = vpop.f32.mrf.mxu0
    %v1184 = vadd.f32 0.0, %v1183
    %v1185 = vpop.f32.mrf.mxu0
    %v1186 = vadd.f32 0.0, %v1185
    %1187 = vdwg.mxu0
    %v1188 = vadd.f32 %v978, %v1113
    %v1189 = vadd.f32 %v979, %v1115
    %v1190 = vadd.f32 %v980, %v1184
    %v1191 = vadd.f32 %v981, %v1186
    %v1192 = vxor.u32 %v1188, 2147483648
    %v1193 = vmul.f32 %v1192, 1.442695
    %v1194 = vpow.pop %v1193
    %v1195 = vadd.f32 %v1194, 1.0
    %v1196 = vrcp.pop %v1195
    %v1197 = vmul.f32 1.0, %v1196
    %v1198 = vxor.u32 %v1189, 2147483648
    %v1199 = vmul.f32 %v1198, 1.442695
    %v1200 = vpow.pop %v1199
    %v1201 = vadd.f32 %v1200, 1.0
    %v1202 = vrcp.pop %v1201
    %v1203 = vmul.f32 1.0, %v1202
    %v1204 = vtanh.pop %v1190
    %v1205 = vxor.u32 %v1191, 2147483648
    %v1206 = vmul.f32 %v1205, 1.442695
    %v1207 = vpow.pop %v1206
    %v1208 = vadd.f32 %v1207, 1.0
    %v1209 = vrcp.pop %v1208
    %v1210 = vmul.f32 1.0, %v1209
    %v1211 = vmul.f32 %v1203, %v974
    %v1212 = vmul.f32 %v1197, %v1204
    %v1213 = vadd.f32 %v1211, %v1212
    %v1214 = vtanh.pop %v1213
    %v1215 = vmul.f32 %v1210, %v1214
    %1216 = vst [vmem:[#allocation2 + $0x18] sm:$0xff] %v1215
    %v1217 = vld [vmem:[#allocation3 + $0x80] sm:$0xff]
    %v1218 = vld [vmem:[#allocation3 + $0x88] sm:$0xff]
    %v1219 = vld [vmem:[#allocation3 + $0x90] sm:$0xff]
    %v1220 = vld [vmem:[#allocation3 + $0x98] sm:$0xff]
    %v1221 = vld [vmem:[#allocation4] sm:$0xff]
    %v1222 = vld [vmem:[#allocation4 + $0x8] sm:$0xff]
    %v1223 = vld [vmem:[#allocation4 + $0x10] sm:$0xff]
    %v1224 = vld [vmem:[#allocation4 + $0x18] sm:$0xff]
    %v1225 = vld [vmem:[#allocation4 + $0x20] sm:$0xff]
    %v1226 = vld [vmem:[#allocation4 + $0x28] sm:$0xff]
    %v1227 = vld [vmem:[#allocation4 + $0x30] sm:$0xff]
    %v1228 = vld [vmem:[#allocation4 + $0x38] sm:$0xff]
    %v1229 = vld [vmem:[#allocation4 + $0x40] sm:$0xff]
    %v1230 = vld [vmem:[#allocation4 + $0x48] sm:$0xff]
    %v1231 = vld [vmem:[#allocation4 + $0x50] sm:$0xff]
    %v1232 = vld [vmem:[#allocation4 + $0x58] sm:$0xff]
    %v1233 = vld [vmem:[#allocation4 + $0x60] sm:$0xff]
    %v1234 = vld [vmem:[#allocation4 + $0x68] sm:$0xff]
    %v1235 = vld [vmem:[#allocation4 + $0x70] sm:$0xff]
    %v1236 = vld [vmem:[#allocation4 + $0x78] sm:$0xff]
    %v1237 = vld [vmem:[#allocation4 + $0x80] sm:$0xff]
    %v1238 = vld [vmem:[#allocation4 + $0x88] sm:$0xff]
    %v1239 = vld [vmem:[#allocation4 + $0x90] sm:$0xff]
    %v1240 = vld [vmem:[#allocation4 + $0x98] sm:$0xff]
    %v1241 = vld [vmem:[#allocation4 + $0xa0] sm:$0xff]
    %v1242 = vld [vmem:[#allocation4 + $0xa8] sm:$0xff]
    %v1243 = vld [vmem:[#allocation4 + $0xb0] sm:$0xff]
    %v1244 = vld [vmem:[#allocation4 + $0xb8] sm:$0xff]
    %v1245 = vld [vmem:[#allocation4 + $0xc0] sm:$0xff]
    %v1246 = vld [vmem:[#allocation4 + $0xc8] sm:$0xff]
    %v1247 = vld [vmem:[#allocation4 + $0xd0] sm:$0xff]
    %v1248 = vld [vmem:[#allocation4 + $0xd8] sm:$0xff]
    %v1249 = vld [vmem:[#allocation4 + $0xe0] sm:$0xff]
    %v1250 = vld [vmem:[#allocation4 + $0xe8] sm:$0xff]
    %v1251 = vld [vmem:[#allocation4 + $0xf0] sm:$0xff]
    %v1252 = vld [vmem:[#allocation4 + $0xf8] sm:$0xff]
    %v1253 = vld [vmem:[#allocation4 + $0x100] sm:$0xff]
    %v1254 = vld [vmem:[#allocation4 + $0x108] sm:$0xff]
    %v1255 = vld [vmem:[#allocation4 + $0x110] sm:$0xff]
    %v1256 = vld [vmem:[#allocation4 + $0x118] sm:$0xff]
    %v1257 = vld [vmem:[#allocation4 + $0x120] sm:$0xff]
    %v1258 = vld [vmem:[#allocation4 + $0x128] sm:$0xff]
    %v1259 = vld [vmem:[#allocation4 + $0x130] sm:$0xff]
    %v1260 = vld [vmem:[#allocation4 + $0x138] sm:$0xff]
    %v1261 = vld [vmem:[#allocation4 + $0x140] sm:$0xff]
    %v1262 = vld [vmem:[#allocation4 + $0x148] sm:$0xff]
    %v1263 = vld [vmem:[#allocation4 + $0x150] sm:$0xff]
    %v1264 = vld [vmem:[#allocation4 + $0x158] sm:$0xff]
    %v1265 = vld [vmem:[#allocation4 + $0x160] sm:$0xff]
    %v1266 = vld [vmem:[#allocation4 + $0x168] sm:$0xff]
    %v1267 = vld [vmem:[#allocation4 + $0x170] sm:$0xff]
    %v1268 = vld [vmem:[#allocation4 + $0x178] sm:$0xff]
    %v1269 = vld [vmem:[#allocation4 + $0x180] sm:$0xff]
    %v1270 = vld [vmem:[#allocation4 + $0x188] sm:$0xff]
    %v1271 = vld [vmem:[#allocation4 + $0x190] sm:$0xff]
    %v1272 = vld [vmem:[#allocation4 + $0x198] sm:$0xff]
    %v1273 = vld [vmem:[#allocation4 + $0x1a0] sm:$0xff]
    %v1274 = vld [vmem:[#allocation4 + $0x1a8] sm:$0xff]
    %v1275 = vld [vmem:[#allocation4 + $0x1b0] sm:$0xff]
    %v1276 = vld [vmem:[#allocation4 + $0x1b8] sm:$0xff]
    %v1277 = vld [vmem:[#allocation4 + $0x1c0] sm:$0xff]
    %v1278 = vld [vmem:[#allocation4 + $0x1c8] sm:$0xff]
    %v1279 = vld [vmem:[#allocation4 + $0x1d0] sm:$0xff]
    %v1280 = vld [vmem:[#allocation4 + $0x1d8] sm:$0xff]
    %v1281 = vld [vmem:[#allocation4 + $0x1e0] sm:$0xff]
    %v1282 = vld [vmem:[#allocation4 + $0x1e8] sm:$0xff]
    %v1283 = vld [vmem:[#allocation4 + $0x1f0] sm:$0xff]
    %v1284 = vld [vmem:[#allocation4 + $0x1f8] sm:$0xff]
    %1285 = vmatprep.subr.mxu0 %v1282
    %1286 = vmatpush1.msra.mxu0 %v1281
    %1287 = vmatprep.subr.mxu0 %v1278
    %1288 = vmatpush1.msra.mxu0 %v1277
    %1289 = vmatprep.subr.mxu0 %v1274
    %1290 = vmatpush1.msra.mxu0 %v1273
    %1291 = vmatprep.subr.mxu0 %v1270
    %1292 = vmatpush1.msra.mxu0 %v1269
    %1293 = vmatprep.subr.mxu0 %v1266
    %1294 = vmatpush1.msra.mxu0 %v1265
    %1295 = vmatprep.subr.mxu0 %v1262
    %1296 = vmatpush1.msra.mxu0 %v1261
    %1297 = vmatprep.subr.mxu0 %v1258
    %1298 = vmatpush1.msra.mxu0 %v1257
    %1299 = vmatprep.subr.mxu0 %v1254
    %1300 = vmatpush1.msra.mxu0 %v1253
    %1301 = vmatprep.subr.mxu0 %v1250
    %1302 = vmatpush1.msra.mxu0 %v1249
    %1303 = vmatprep.subr.mxu0 %v1246
    %1304 = vmatpush1.msra.mxu0 %v1245
    %1305 = vmatprep.subr.mxu0 %v1242
    %1306 = vmatpush1.msra.mxu0 %v1241
    %1307 = vmatprep.subr.mxu0 %v1238
    %1308 = vmatpush1.msra.mxu0 %v1237
    %1309 = vmatprep.subr.mxu0 %v1234
    %1310 = vmatpush1.msra.mxu0 %v1233
    %1311 = vmatprep.subr.mxu0 %v1230
    %1312 = vmatpush1.msra.mxu0 %v1229
    %1313 = vmatprep.subr.mxu0 %v1226
    %1314 = vmatpush1.msra.mxu0 %v1225
    %1315 = vmatprep.subr.mxu0 %v1222
    %1316 = vmatpush1.msra.mxu0 %v1221
    %1317 = vmatprep.subr.mxu0 0.0
    %1318 = vmatpush2.msra.mxu0 0.0
    %1319 = vmatprep.subr.mxu0 0.0
    %1320 = vmatpush2.msra.mxu0 0.0
    %1321 = vmatprep.subr.mxu0 0.0
    %1322 = vmatpush2.msra.mxu0 0.0
    %1323 = vmatprep.subr.mxu0 0.0
    %1324 = vmatpush2.msra.mxu0 0.0
    %1325 = vmatprep.subr.mxu0 0.0
    %1326 = vmatpush2.msra.mxu0 0.0
    %1327 = vmatprep.subr.mxu0 0.0
    %1328 = vmatpush2.msra.mxu0 0.0
    %1329 = vmatprep.subr.mxu0 0.0
    %1330 = vmatpush2.msra.mxu0 0.0
    %1331 = vmatprep.subr.mxu0 0.0
    %1332 = vmatpush2.msra.mxu0 0.0
    %1333 = vmatprep.subr.mxu0 0.0
    %1334 = vmatpush2.msra.mxu0 0.0
    %1335 = vmatprep.subr.mxu0 0.0
    %1336 = vmatpush2.msra.mxu0 0.0
    %1337 = vmatprep.subr.mxu0 0.0
    %1338 = vmatpush2.msra.mxu0 0.0
    %1339 = vmatprep.subr.mxu0 0.0
    %1340 = vmatpush2.msra.mxu0 0.0
    %1341 = vmatprep.subr.mxu0 0.0
    %1342 = vmatpush2.msra.mxu0 0.0
    %1343 = vmatprep.subr.mxu0 0.0
    %1344 = vmatpush2.msra.mxu0 0.0
    %1345 = vmatprep.subr.mxu0 0.0
    %1346 = vmatpush2.msra.mxu0 0.0
    %1347 = vmatprep.subr.mxu0 0.0
    %1348 = vmatpush2.msra.mxu0 0.0
    %1349 = vmatprep.mubr.f32.mxu0 0.0
    %1350 = vmatmul.mubr.f32.gmra.mxu0 %v1215
    %v1351 = vpop.f32.mrf.mxu0
    %v1352 = vadd.f32 0.0, %v1351
    %v1353 = vpop.f32.mrf.mxu0
    %v1354 = vadd.f32 0.0, %v1353
    %1355 = vdwg.mxu0
    %1356 = vmatprep.subr.mxu0 %v1284
    %1357 = vmatpush1.msra.mxu0 %v1283
    %1358 = vmatprep.subr.mxu0 %v1280
    %1359 = vmatpush1.msra.mxu0 %v1279
    %1360 = vmatprep.subr.mxu0 %v1276
    %1361 = vmatpush1.msra.mxu0 %v1275
    %1362 = vmatprep.subr.mxu0 %v1272
    %1363 = vmatpush1.msra.mxu0 %v1271
    %1364 = vmatprep.subr.mxu0 %v1268
    %1365 = vmatpush1.msra.mxu0 %v1267
    %1366 = vmatprep.subr.mxu0 %v1264
    %1367 = vmatpush1.msra.mxu0 %v1263
    %1368 = vmatprep.subr.mxu0 %v1260
    %1369 = vmatpush1.msra.mxu0 %v1259
    %1370 = vmatprep.subr.mxu0 %v1256
    %1371 = vmatpush1.msra.mxu0 %v1255
    %1372 = vmatprep.subr.mxu0 %v1252
    %1373 = vmatpush1.msra.mxu0 %v1251
    %1374 = vmatprep.subr.mxu0 %v1248
    %1375 = vmatpush1.msra.mxu0 %v1247
    %1376 = vmatprep.subr.mxu0 %v1244
    %1377 = vmatpush1.msra.mxu0 %v1243
    %1378 = vmatprep.subr.mxu0 %v1240
    %1379 = vmatpush1.msra.mxu0 %v1239
    %1380 = vmatprep.subr.mxu0 %v1236
    %1381 = vmatpush1.msra.mxu0 %v1235
    %1382 = vmatprep.subr.mxu0 %v1232
    %1383 = vmatpush1.msra.mxu0 %v1231
    %1384 = vmatprep.subr.mxu0 %v1228
    %1385 = vmatpush1.msra.mxu0 %v1227
    %1386 = vmatprep.subr.mxu0 %v1224
    %1387 = vmatpush1.msra.mxu0 %v1223
    %1388 = vmatprep.subr.mxu0 0.0
    %1389 = vmatpush2.msra.mxu0 0.0
    %1390 = vmatprep.subr.mxu0 0.0
    %1391 = vmatpush2.msra.mxu0 0.0
    %1392 = vmatprep.subr.mxu0 0.0
    %1393 = vmatpush2.msra.mxu0 0.0
    %1394 = vmatprep.subr.mxu0 0.0
    %1395 = vmatpush2.msra.mxu0 0.0
    %1396 = vmatprep.subr.mxu0 0.0
    %1397 = vmatpush2.msra.mxu0 0.0
    %1398 = vmatprep.subr.mxu0 0.0
    %1399 = vmatpush2.msra.mxu0 0.0
    %1400 = vmatprep.subr.mxu0 0.0
    %1401 = vmatpush2.msra.mxu0 0.0
    %1402 = vmatprep.subr.mxu0 0.0
    %1403 = vmatpush2.msra.mxu0 0.0
    %1404 = vmatprep.subr.mxu0 0.0
    %1405 = vmatpush2.msra.mxu0 0.0
    %1406 = vmatprep.subr.mxu0 0.0
    %1407 = vmatpush2.msra.mxu0 0.0
    %1408 = vmatprep.subr.mxu0 0.0
    %1409 = vmatpush2.msra.mxu0 0.0
    %1410 = vmatprep.subr.mxu0 0.0
    %1411 = vmatpush2.msra.mxu0 0.0
    %1412 = vmatprep.subr.mxu0 0.0
    %1413 = vmatpush2.msra.mxu0 0.0
    %1414 = vmatprep.subr.mxu0 0.0
    %1415 = vmatpush2.msra.mxu0 0.0
    %1416 = vmatprep.subr.mxu0 0.0
    %1417 = vmatpush2.msra.mxu0 0.0
    %1418 = vmatprep.subr.mxu0 0.0
    %1419 = vmatpush2.msra.mxu0 0.0
    %1420 = vmatprep.mubr.f32.mxu0 0.0
    %1421 = vmatmul.mubr.f32.gmra.mxu0 %v1215
    %v1422 = vpop.f32.mrf.mxu0
    %v1423 = vadd.f32 0.0, %v1422
    %v1424 = vpop.f32.mrf.mxu0
    %v1425 = vadd.f32 0.0, %v1424
    %1426 = vdwg.mxu0
    %v1427 = vadd.f32 %v1217, %v1352
    %v1428 = vadd.f32 %v1218, %v1354
    %v1429 = vadd.f32 %v1219, %v1423
    %v1430 = vadd.f32 %v1220, %v1425
    %v1431 = vxor.u32 %v1427, 2147483648
    %v1432 = vmul.f32 %v1431, 1.442695
    %v1433 = vpow.pop %v1432
    %v1434 = vadd.f32 %v1433, 1.0
    %v1435 = vrcp.pop %v1434
    %v1436 = vmul.f32 1.0, %v1435
    %v1437 = vxor.u32 %v1428, 2147483648
    %v1438 = vmul.f32 %v1437, 1.442695
    %v1439 = vpow.pop %v1438
    %v1440 = vadd.f32 %v1439, 1.0
    %v1441 = vrcp.pop %v1440
    %v1442 = vmul.f32 1.0, %v1441
    %v1443 = vtanh.pop %v1429
    %v1444 = vxor.u32 %v1430, 2147483648
    %v1445 = vmul.f32 %v1444, 1.442695
    %v1446 = vpow.pop %v1445
    %v1447 = vadd.f32 %v1446, 1.0
    %v1448 = vrcp.pop %v1447
    %v1449 = vmul.f32 1.0, %v1448
    %v1450 = vmul.f32 %v1442, %v1213
    %v1451 = vmul.f32 %v1436, %v1443
    %v1452 = vadd.f32 %v1450, %v1451
    %v1453 = vtanh.pop %v1452
    %v1454 = vmul.f32 %v1449, %v1453
    %1455 = vst [vmem:[#allocation2 + $0x20] sm:$0xff] %v1454
    %v1456 = vld [vmem:[#allocation3 + $0xa0] sm:$0xff]
    %v1457 = vld [vmem:[#allocation3 + $0xa8] sm:$0xff]
    %v1458 = vld [vmem:[#allocation3 + $0xb0] sm:$0xff]
    %v1459 = vld [vmem:[#allocation3 + $0xb8] sm:$0xff]
    %v1460 = vld [vmem:[#allocation4] sm:$0xff]
    %v1461 = vld [vmem:[#allocation4 + $0x8] sm:$0xff]
    %v1462 = vld [vmem:[#allocation4 + $0x10] sm:$0xff]
    %v1463 = vld [vmem:[#allocation4 + $0x18] sm:$0xff]
    %v1464 = vld [vmem:[#allocation4 + $0x20] sm:$0xff]
    %v1465 = vld [vmem:[#allocation4 + $0x28] sm:$0xff]
    %v1466 = vld [vmem:[#allocation4 + $0x30] sm:$0xff]
    %v1467 = vld [vmem:[#allocation4 + $0x38] sm:$0xff]
    %v1468 = vld [vmem:[#allocation4 + $0x40] sm:$0xff]
    %v1469 = vld [vmem:[#allocation4 + $0x48] sm:$0xff]
    %v1470 = vld [vmem:[#allocation4 + $0x50] sm:$0xff]
    %v1471 = vld [vmem:[#allocation4 + $0x58] sm:$0xff]
    %v1472 = vld [vmem:[#allocation4 + $0x60] sm:$0xff]
    %v1473 = vld [vmem:[#allocation4 + $0x68] sm:$0xff]
    %v1474 = vld [vmem:[#allocation4 + $0x70] sm:$0xff]
    %v1475 = vld [vmem:[#allocation4 + $0x78] sm:$0xff]
    %v1476 = vld [vmem:[#allocation4 + $0x80] sm:$0xff]
    %v1477 = vld [vmem:[#allocation4 + $0x88] sm:$0xff]
    %v1478 = vld [vmem:[#allocation4 + $0x90] sm:$0xff]
    %v1479 = vld [vmem:[#allocation4 + $0x98] sm:$0xff]
    %v1480 = vld [vmem:[#allocation4 + $0xa0] sm:$0xff]
    %v1481 = vld [vmem:[#allocation4 + $0xa8] sm:$0xff]
    %v1482 = vld [vmem:[#allocation4 + $0xb0] sm:$0xff]
    %v1483 = vld [vmem:[#allocation4 + $0xb8] sm:$0xff]
    %v1484 = vld [vmem:[#allocation4 + $0xc0] sm:$0xff]
    %v1485 = vld [vmem:[#allocation4 + $0xc8] sm:$0xff]
    %v1486 = vld [vmem:[#allocation4 + $0xd0] sm:$0xff]
    %v1487 = vld [vmem:[#allocation4 + $0xd8] sm:$0xff]
    %v1488 = vld [vmem:[#allocation4 + $0xe0] sm:$0xff]
    %v1489 = vld [vmem:[#allocation4 + $0xe8] sm:$0xff]
    %v1490 = vld [vmem:[#allocation4 + $0xf0] sm:$0xff]
    %v1491 = vld [vmem:[#allocation4 + $0xf8] sm:$0xff]
    %v1492 = vld [vmem:[#allocation4 + $0x100] sm:$0xff]
    %v1493 = vld [vmem:[#allocation4 + $0x108] sm:$0xff]
    %v1494 = vld [vmem:[#allocation4 + $0x110] sm:$0xff]
    %v1495 = vld [vmem:[#allocation4 + $0x118] sm:$0xff]
    %v1496 = vld [vmem:[#allocation4 + $0x120] sm:$0xff]
    %v1497 = vld [vmem:[#allocation4 + $0x128] sm:$0xff]
    %v1498 = vld [vmem:[#allocation4 + $0x130] sm:$0xff]
    %v1499 = vld [vmem:[#allocation4 + $0x138] sm:$0xff]
    %v1500 = vld [vmem:[#allocation4 + $0x140] sm:$0xff]
    %v1501 = vld [vmem:[#allocation4 + $0x148] sm:$0xff]
    %v1502 = vld [vmem:[#allocation4 + $0x150] sm:$0xff]
    %v1503 = vld [vmem:[#allocation4 + $0x158] sm:$0xff]
    %v1504 = vld [vmem:[#allocation4 + $0x160] sm:$0xff]
    %v1505 = vld [vmem:[#allocation4 + $0x168] sm:$0xff]
    %v1506 = vld [vmem:[#allocation4 + $0x170] sm:$0xff]
    %v1507 = vld [vmem:[#allocation4 + $0x178] sm:$0xff]
    %v1508 = vld [vmem:[#allocation4 + $0x180] sm:$0xff]
    %v1509 = vld [vmem:[#allocation4 + $0x188] sm:$0xff]
    %v1510 = vld [vmem:[#allocation4 + $0x190] sm:$0xff]
    %v1511 = vld [vmem:[#allocation4 + $0x198] sm:$0xff]
    %v1512 = vld [vmem:[#allocation4 + $0x1a0] sm:$0xff]
    %v1513 = vld [vmem:[#allocation4 + $0x1a8] sm:$0xff]
    %v1514 = vld [vmem:[#allocation4 + $0x1b0] sm:$0xff]
    %v1515 = vld [vmem:[#allocation4 + $0x1b8] sm:$0xff]
    %v1516 = vld [vmem:[#allocation4 + $0x1c0] sm:$0xff]
    %v1517 = vld [vmem:[#allocation4 + $0x1c8] sm:$0xff]
    %v1518 = vld [vmem:[#allocation4 + $0x1d0] sm:$0xff]
    %v1519 = vld [vmem:[#allocation4 + $0x1d8] sm:$0xff]
    %v1520 = vld [vmem:[#allocation4 + $0x1e0] sm:$0xff]
    %v1521 = vld [vmem:[#allocation4 + $0x1e8] sm:$0xff]
    %v1522 = vld [vmem:[#allocation4 + $0x1f0] sm:$0xff]
    %v1523 = vld [vmem:[#allocation4 + $0x1f8] sm:$0xff]
    %1524 = vmatprep.subr.mxu0 %v1521
    %1525 = vmatpush1.msra.mxu0 %v1520
    %1526 = vmatprep.subr.mxu0 %v1517
    %1527 = vmatpush1.msra.mxu0 %v1516
    %1528 = vmatprep.subr.mxu0 %v1513
    %1529 = vmatpush1.msra.mxu0 %v1512
    %1530 = vmatprep.subr.mxu0 %v1509
    %1531 = vmatpush1.msra.mxu0 %v1508
    %1532 = vmatprep.subr.mxu0 %v1505
    %1533 = vmatpush1.msra.mxu0 %v1504
    %1534 = vmatprep.subr.mxu0 %v1501
    %1535 = vmatpush1.msra.mxu0 %v1500
    %1536 = vmatprep.subr.mxu0 %v1497
    %1537 = vmatpush1.msra.mxu0 %v1496
    %1538 = vmatprep.subr.mxu0 %v1493
    %1539 = vmatpush1.msra.mxu0 %v1492
    %1540 = vmatprep.subr.mxu0 %v1489
    %1541 = vmatpush1.msra.mxu0 %v1488
    %1542 = vmatprep.subr.mxu0 %v1485
    %1543 = vmatpush1.msra.mxu0 %v1484
    %1544 = vmatprep.subr.mxu0 %v1481
    %1545 = vmatpush1.msra.mxu0 %v1480
    %1546 = vmatprep.subr.mxu0 %v1477
    %1547 = vmatpush1.msra.mxu0 %v1476
    %1548 = vmatprep.subr.mxu0 %v1473
    %1549 = vmatpush1.msra.mxu0 %v1472
    %1550 = vmatprep.subr.mxu0 %v1469
    %1551 = vmatpush1.msra.mxu0 %v1468
    %1552 = vmatprep.subr.mxu0 %v1465
    %1553 = vmatpush1.msra.mxu0 %v1464
    %1554 = vmatprep.subr.mxu0 %v1461
    %1555 = vmatpush1.msra.mxu0 %v1460
    %1556 = vmatprep.subr.mxu0 0.0
    %1557 = vmatpush2.msra.mxu0 0.0
    %1558 = vmatprep.subr.mxu0 0.0
    %1559 = vmatpush2.msra.mxu0 0.0
    %1560 = vmatprep.subr.mxu0 0.0
    %1561 = vmatpush2.msra.mxu0 0.0
    %1562 = vmatprep.subr.mxu0 0.0
    %1563 = vmatpush2.msra.mxu0 0.0
    %1564 = vmatprep.subr.mxu0 0.0
    %1565 = vmatpush2.msra.mxu0 0.0
    %1566 = vmatprep.subr.mxu0 0.0
    %1567 = vmatpush2.msra.mxu0 0.0
    %1568 = vmatprep.subr.mxu0 0.0
    %1569 = vmatpush2.msra.mxu0 0.0
    %1570 = vmatprep.subr.mxu0 0.0
    %1571 = vmatpush2.msra.mxu0 0.0
    %1572 = vmatprep.subr.mxu0 0.0
    %1573 = vmatpush2.msra.mxu0 0.0
    %1574 = vmatprep.subr.mxu0 0.0
    %1575 = vmatpush2.msra.mxu0 0.0
    %1576 = vmatprep.subr.mxu0 0.0
    %1577 = vmatpush2.msra.mxu0 0.0
    %1578 = vmatprep.subr.mxu0 0.0
    %1579 = vmatpush2.msra.mxu0 0.0
    %1580 = vmatprep.subr.mxu0 0.0
    %1581 = vmatpush2.msra.mxu0 0.0
    %1582 = vmatprep.subr.mxu0 0.0
    %1583 = vmatpush2.msra.mxu0 0.0
    %1584 = vmatprep.subr.mxu0 0.0
    %1585 = vmatpush2.msra.mxu0 0.0
    %1586 = vmatprep.subr.mxu0 0.0
    %1587 = vmatpush2.msra.mxu0 0.0
    %1588 = vmatprep.mubr.f32.mxu0 0.0
    %1589 = vmatmul.mubr.f32.gmra.mxu0 %v1454
    %v1590 = vpop.f32.mrf.mxu0
    %v1591 = vadd.f32 0.0, %v1590
    %v1592 = vpop.f32.mrf.mxu0
    %v1593 = vadd.f32 0.0, %v1592
    %1594 = vdwg.mxu0
    %1595 = vmatprep.subr.mxu0 %v1523
    %1596 = vmatpush1.msra.mxu0 %v1522
    %1597 = vmatprep.subr.mxu0 %v1519
    %1598 = vmatpush1.msra.mxu0 %v1518
    %1599 = vmatprep.subr.mxu0 %v1515
    %1600 = vmatpush1.msra.mxu0 %v1514
    %1601 = vmatprep.subr.mxu0 %v1511
    %1602 = vmatpush1.msra.mxu0 %v1510
    %1603 = vmatprep.subr.mxu0 %v1507
    %1604 = vmatpush1.msra.mxu0 %v1506
    %1605 = vmatprep.subr.mxu0 %v1503
    %1606 = vmatpush1.msra.mxu0 %v1502
    %1607 = vmatprep.subr.mxu0 %v1499
    %1608 = vmatpush1.msra.mxu0 %v1498
    %1609 = vmatprep.subr.mxu0 %v1495
    %1610 = vmatpush1.msra.mxu0 %v1494
    %1611 = vmatprep.subr.mxu0 %v1491
    %1612 = vmatpush1.msra.mxu0 %v1490
    %1613 = vmatprep.subr.mxu0 %v1487
    %1614 = vmatpush1.msra.mxu0 %v1486
    %1615 = vmatprep.subr.mxu0 %v1483
    %1616 = vmatpush1.msra.mxu0 %v1482
    %1617 = vmatprep.subr.mxu0 %v1479
    %1618 = vmatpush1.msra.mxu0 %v1478
    %1619 = vmatprep.subr.mxu0 %v1475
    %1620 = vmatpush1.msra.mxu0 %v1474
    %1621 = vmatprep.subr.mxu0 %v1471
    %1622 = vmatpush1.msra.mxu0 %v1470
    %1623 = vmatprep.subr.mxu0 %v1467
    %1624 = vmatpush1.msra.mxu0 %v1466
    %1625 = vmatprep.subr.mxu0 %v1463
    %1626 = vmatpush1.msra.mxu0 %v1462
    %1627 = vmatprep.subr.mxu0 0.0
    %1628 = vmatpush2.msra.mxu0 0.0
    %1629 = vmatprep.subr.mxu0 0.0
    %1630 = vmatpush2.msra.mxu0 0.0
    %1631 = vmatprep.subr.mxu0 0.0
    %1632 = vmatpush2.msra.mxu0 0.0
    %1633 = vmatprep.subr.mxu0 0.0
    %1634 = vmatpush2.msra.mxu0 0.0
    %1635 = vmatprep.subr.mxu0 0.0
    %1636 = vmatpush2.msra.mxu0 0.0
    %1637 = vmatprep.subr.mxu0 0.0
    %1638 = vmatpush2.msra.mxu0 0.0
    %1639 = vmatprep.subr.mxu0 0.0
    %1640 = vmatpush2.msra.mxu0 0.0
    %1641 = vmatprep.subr.mxu0 0.0
    %1642 = vmatpush2.msra.mxu0 0.0
    %1643 = vmatprep.subr.mxu0 0.0
    %1644 = vmatpush2.msra.mxu0 0.0
    %1645 = vmatprep.subr.mxu0 0.0
    %1646 = vmatpush2.msra.mxu0 0.0
    %1647 = vmatprep.subr.mxu0 0.0
    %1648 = vmatpush2.msra.mxu0 0.0
    %1649 = vmatprep.subr.mxu0 0.0
    %1650 = vmatpush2.msra.mxu0 0.0
    %1651 = vmatprep.subr.mxu0 0.0
    %1652 = vmatpush2.msra.mxu0 0.0
    %1653 = vmatprep.subr.mxu0 0.0
    %1654 = vmatpush2.msra.mxu0 0.0
    %1655 = vmatprep.subr.mxu0 0.0
    %1656 = vmatpush2.msra.mxu0 0.0
    %1657 = vmatprep.subr.mxu0 0.0
    %1658 = vmatpush2.msra.mxu0 0.0
    %1659 = vmatprep.mubr.f32.mxu0 0.0
    %1660 = vmatmul.mubr.f32.gmra.mxu0 %v1454
    %v1661 = vpop.f32.mrf.mxu0
    %v1662 = vadd.f32 0.0, %v1661
    %v1663 = vpop.f32.mrf.mxu0
    %v1664 = vadd.f32 0.0, %v1663
    %1665 = vdwg.mxu0
    %v1666 = vadd.f32 %v1456, %v1591
    %v1667 = vadd.f32 %v1457, %v1593
    %v1668 = vadd.f32 %v1458, %v1662
    %v1669 = vadd.f32 %v1459, %v1664
    %v1670 = vxor.u32 %v1666, 2147483648
    %v1671 = vmul.f32 %v1670, 1.442695
    %v1672 = vpow.pop %v1671
    %v1673 = vadd.f32 %v1672, 1.0
    %v1674 = vrcp.pop %v1673
    %v1675 = vmul.f32 1.0, %v1674
    %v1676 = vxor.u32 %v1667, 2147483648
    %v1677 = vmul.f32 %v1676, 1.442695
    %v1678 = vpow.pop %v1677
    %v1679 = vadd.f32 %v1678, 1.0
    %v1680 = vrcp.pop %v1679
    %v1681 = vmul.f32 1.0, %v1680
    %v1682 = vtanh.pop %v1668
    %v1683 = vxor.u32 %v1669, 2147483648
    %v1684 = vmul.f32 %v1683, 1.442695
    %v1685 = vpow.pop %v1684
    %v1686 = vadd.f32 %v1685, 1.0
    %v1687 = vrcp.pop %v1686
    %v1688 = vmul.f32 1.0, %v1687
    %v1689 = vmul.f32 %v1681, %v1452
    %v1690 = vmul.f32 %v1675, %v1682
    %v1691 = vadd.f32 %v1689, %v1690
    %v1692 = vtanh.pop %v1691
    %v1693 = vmul.f32 %v1688, %v1692
    %1694 = vst [vmem:[#allocation2 + $0x28] sm:$0xff] %v1693
    %v1695 = vld [vmem:[#allocation3 + $0xc0] sm:$0xff]
    %v1696 = vld [vmem:[#allocation3 + $0xc8] sm:$0xff]
    %v1697 = vld [vmem:[#allocation3 + $0xd0] sm:$0xff]
    %v1698 = vld [vmem:[#allocation3 + $0xd8] sm:$0xff]
    %v1699 = vld [vmem:[#allocation4] sm:$0xff]
    %v1700 = vld [vmem:[#allocation4 + $0x8] sm:$0xff]
    %v1701 = vld [vmem:[#allocation4 + $0x10] sm:$0xff]
    %v1702 = vld [vmem:[#allocation4 + $0x18] sm:$0xff]
    %v1703 = vld [vmem:[#allocation4 + $0x20] sm:$0xff]
    %v1704 = vld [vmem:[#allocation4 + $0x28] sm:$0xff]
    %v1705 = vld [vmem:[#allocation4 + $0x30] sm:$0xff]
    %v1706 = vld [vmem:[#allocation4 + $0x38] sm:$0xff]
    %v1707 = vld [vmem:[#allocation4 + $0x40] sm:$0xff]
    %v1708 = vld [vmem:[#allocation4 + $0x48] sm:$0xff]
    %v1709 = vld [vmem:[#allocation4 + $0x50] sm:$0xff]
    %v1710 = vld [vmem:[#allocation4 + $0x58] sm:$0xff]
    %v1711 = vld [vmem:[#allocation4 + $0x60] sm:$0xff]
    %v1712 = vld [vmem:[#allocation4 + $0x68] sm:$0xff]
    %v1713 = vld [vmem:[#allocation4 + $0x70] sm:$0xff]
    %v1714 = vld [vmem:[#allocation4 + $0x78] sm:$0xff]
    %v1715 = vld [vmem:[#allocation4 + $0x80] sm:$0xff]
    %v1716 = vld [vmem:[#allocation4 + $0x88] sm:$0xff]
    %v1717 = vld [vmem:[#allocation4 + $0x90] sm:$0xff]
    %v1718 = vld [vmem:[#allocation4 + $0x98] sm:$0xff]
    %v1719 = vld [vmem:[#allocation4 + $0xa0] sm:$0xff]
    %v1720 = vld [vmem:[#allocation4 + $0xa8] sm:$0xff]
    %v1721 = vld [vmem:[#allocation4 + $0xb0] sm:$0xff]
    %v1722 = vld [vmem:[#allocation4 + $0xb8] sm:$0xff]
    %v1723 = vld [vmem:[#allocation4 + $0xc0] sm:$0xff]
    %v1724 = vld [vmem:[#allocation4 + $0xc8] sm:$0xff]
    %v1725 = vld [vmem:[#allocation4 + $0xd0] sm:$0xff]
    %v1726 = vld [vmem:[#allocation4 + $0xd8] sm:$0xff]
    %v1727 = vld [vmem:[#allocation4 + $0xe0] sm:$0xff]
    %v1728 = vld [vmem:[#allocation4 + $0xe8] sm:$0xff]
    %v1729 = vld [vmem:[#allocation4 + $0xf0] sm:$0xff]
    %v1730 = vld [vmem:[#allocation4 + $0xf8] sm:$0xff]
    %v1731 = vld [vmem:[#allocation4 + $0x100] sm:$0xff]
    %v1732 = vld [vmem:[#allocation4 + $0x108] sm:$0xff]
    %v1733 = vld [vmem:[#allocation4 + $0x110] sm:$0xff]
    %v1734 = vld [vmem:[#allocation4 + $0x118] sm:$0xff]
    %v1735 = vld [vmem:[#allocation4 + $0x120] sm:$0xff]
    %v1736 = vld [vmem:[#allocation4 + $0x128] sm:$0xff]
    %v1737 = vld [vmem:[#allocation4 + $0x130] sm:$0xff]
    %v1738 = vld [vmem:[#allocation4 + $0x138] sm:$0xff]
    %v1739 = vld [vmem:[#allocation4 + $0x140] sm:$0xff]
    %v1740 = vld [vmem:[#allocation4 + $0x148] sm:$0xff]
    %v1741 = vld [vmem:[#allocation4 + $0x150] sm:$0xff]
    %v1742 = vld [vmem:[#allocation4 + $0x158] sm:$0xff]
    %v1743 = vld [vmem:[#allocation4 + $0x160] sm:$0xff]
    %v1744 = vld [vmem:[#allocation4 + $0x168] sm:$0xff]
    %v1745 = vld [vmem:[#allocation4 + $0x170] sm:$0xff]
    %v1746 = vld [vmem:[#allocation4 + $0x178] sm:$0xff]
    %v1747 = vld [vmem:[#allocation4 + $0x180] sm:$0xff]
    %v1748 = vld [vmem:[#allocation4 + $0x188] sm:$0xff]
    %v1749 = vld [vmem:[#allocation4 + $0x190] sm:$0xff]
    %v1750 = vld [vmem:[#allocation4 + $0x198] sm:$0xff]
    %v1751 = vld [vmem:[#allocation4 + $0x1a0] sm:$0xff]
    %v1752 = vld [vmem:[#allocation4 + $0x1a8] sm:$0xff]
    %v1753 = vld [vmem:[#allocation4 + $0x1b0] sm:$0xff]
    %v1754 = vld [vmem:[#allocation4 + $0x1b8] sm:$0xff]
    %v1755 = vld [vmem:[#allocation4 + $0x1c0] sm:$0xff]
    %v1756 = vld [vmem:[#allocation4 + $0x1c8] sm:$0xff]
    %v1757 = vld [vmem:[#allocation4 + $0x1d0] sm:$0xff]
    %v1758 = vld [vmem:[#allocation4 + $0x1d8] sm:$0xff]
    %v1759 = vld [vmem:[#allocation4 + $0x1e0] sm:$0xff]
    %v1760 = vld [vmem:[#allocation4 + $0x1e8] sm:$0xff]
    %v1761 = vld [vmem:[#allocation4 + $0x1f0] sm:$0xff]
    %v1762 = vld [vmem:[#allocation4 + $0x1f8] sm:$0xff]
    %1763 = vmatprep.subr.mxu0 %v1760
    %1764 = vmatpush1.msra.mxu0 %v1759
    %1765 = vmatprep.subr.mxu0 %v1756
    %1766 = vmatpush1.msra.mxu0 %v1755
    %1767 = vmatprep.subr.mxu0 %v1752
    %1768 = vmatpush1.msra.mxu0 %v1751
    %1769 = vmatprep.subr.mxu0 %v1748
    %1770 = vmatpush1.msra.mxu0 %v1747
    %1771 = vmatprep.subr.mxu0 %v1744
    %1772 = vmatpush1.msra.mxu0 %v1743
    %1773 = vmatprep.subr.mxu0 %v1740
    %1774 = vmatpush1.msra.mxu0 %v1739
    %1775 = vmatprep.subr.mxu0 %v1736
    %1776 = vmatpush1.msra.mxu0 %v1735
    %1777 = vmatprep.subr.mxu0 %v1732
    %1778 = vmatpush1.msra.mxu0 %v1731
    %1779 = vmatprep.subr.mxu0 %v1728
    %1780 = vmatpush1.msra.mxu0 %v1727
    %1781 = vmatprep.subr.mxu0 %v1724
    %1782 = vmatpush1.msra.mxu0 %v1723
    %1783 = vmatprep.subr.mxu0 %v1720
    %1784 = vmatpush1.msra.mxu0 %v1719
    %1785 = vmatprep.subr.mxu0 %v1716
    %1786 = vmatpush1.msra.mxu0 %v1715
    %1787 = vmatprep.subr.mxu0 %v1712
    %1788 = vmatpush1.msra.mxu0 %v1711
    %1789 = vmatprep.subr.mxu0 %v1708
    %1790 = vmatpush1.msra.mxu0 %v1707
    %1791 = vmatprep.subr.mxu0 %v1704
    %1792 = vmatpush1.msra.mxu0 %v1703
    %1793 = vmatprep.subr.mxu0 %v1700
    %1794 = vmatpush1.msra.mxu0 %v1699
    %1795 = vmatprep.subr.mxu0 0.0
    %1796 = vmatpush2.msra.mxu0 0.0
    %1797 = vmatprep.subr.mxu0 0.0
    %1798 = vmatpush2.msra.mxu0 0.0
    %1799 = vmatprep.subr.mxu0 0.0
    %1800 = vmatpush2.msra.mxu0 0.0
    %1801 = vmatprep.subr.mxu0 0.0
    %1802 = vmatpush2.msra.mxu0 0.0
    %1803 = vmatprep.subr.mxu0 0.0
    %1804 = vmatpush2.msra.mxu0 0.0
    %1805 = vmatprep.subr.mxu0 0.0
    %1806 = vmatpush2.msra.mxu0 0.0
    %1807 = vmatprep.subr.mxu0 0.0
    %1808 = vmatpush2.msra.mxu0 0.0
    %1809 = vmatprep.subr.mxu0 0.0
    %1810 = vmatpush2.msra.mxu0 0.0
    %1811 = vmatprep.subr.mxu0 0.0
    %1812 = vmatpush2.msra.mxu0 0.0
    %1813 = vmatprep.subr.mxu0 0.0
    %1814 = vmatpush2.msra.mxu0 0.0
    %1815 = vmatprep.subr.mxu0 0.0
    %1816 = vmatpush2.msra.mxu0 0.0
    %1817 = vmatprep.subr.mxu0 0.0
    %1818 = vmatpush2.msra.mxu0 0.0
    %1819 = vmatprep.subr.mxu0 0.0
    %1820 = vmatpush2.msra.mxu0 0.0
    %1821 = vmatprep.subr.mxu0 0.0
    %1822 = vmatpush2.msra.mxu0 0.0
    %1823 = vmatprep.subr.mxu0 0.0
    %1824 = vmatpush2.msra.mxu0 0.0
    %1825 = vmatprep.subr.mxu0 0.0
    %1826 = vmatpush2.msra.mxu0 0.0
    %1827 = vmatprep.mubr.f32.mxu0 0.0
    %1828 = vmatmul.mubr.f32.gmra.mxu0 %v1693
    %v1829 = vpop.f32.mrf.mxu0
    %v1830 = vadd.f32 0.0, %v1829
    %v1831 = vpop.f32.mrf.mxu0
    %v1832 = vadd.f32 0.0, %v1831
    %1833 = vdwg.mxu0
    %1834 = vmatprep.subr.mxu0 %v1762
    %1835 = vmatpush1.msra.mxu0 %v1761
    %1836 = vmatprep.subr.mxu0 %v1758
    %1837 = vmatpush1.msra.mxu0 %v1757
    %1838 = vmatprep.subr.mxu0 %v1754
    %1839 = vmatpush1.msra.mxu0 %v1753
    %1840 = vmatprep.subr.mxu0 %v1750
    %1841 = vmatpush1.msra.mxu0 %v1749
    %1842 = vmatprep.subr.mxu0 %v1746
    %1843 = vmatpush1.msra.mxu0 %v1745
    %1844 = vmatprep.subr.mxu0 %v1742
    %1845 = vmatpush1.msra.mxu0 %v1741
    %1846 = vmatprep.subr.mxu0 %v1738
    %1847 = vmatpush1.msra.mxu0 %v1737
    %1848 = vmatprep.subr.mxu0 %v1734
    %1849 = vmatpush1.msra.mxu0 %v1733
    %1850 = vmatprep.subr.mxu0 %v1730
    %1851 = vmatpush1.msra.mxu0 %v1729
    %1852 = vmatprep.subr.mxu0 %v1726
    %1853 = vmatpush1.msra.mxu0 %v1725
    %1854 = vmatprep.subr.mxu0 %v1722
    %1855 = vmatpush1.msra.mxu0 %v1721
    %1856 = vmatprep.subr.mxu0 %v1718
    %1857 = vmatpush1.msra.mxu0 %v1717
    %1858 = vmatprep.subr.mxu0 %v1714
    %1859 = vmatpush1.msra.mxu0 %v1713
    %1860 = vmatprep.subr.mxu0 %v1710
    %1861 = vmatpush1.msra.mxu0 %v1709
    %1862 = vmatprep.subr.mxu0 %v1706
    %1863 = vmatpush1.msra.mxu0 %v1705
    %1864 = vmatprep.subr.mxu0 %v1702
    %1865 = vmatpush1.msra.mxu0 %v1701
    %1866 = vmatprep.subr.mxu0 0.0
    %1867 = vmatpush2.msra.mxu0 0.0
    %1868 = vmatprep.subr.mxu0 0.0
    %1869 = vmatpush2.msra.mxu0 0.0
    %1870 = vmatprep.subr.mxu0 0.0
    %1871 = vmatpush2.msra.mxu0 0.0
    %1872 = vmatprep.subr.mxu0 0.0
    %1873 = vmatpush2.msra.mxu0 0.0
    %1874 = vmatprep.subr.mxu0 0.0
    %1875 = vmatpush2.msra.mxu0 0.0
    %1876 = vmatprep.subr.mxu0 0.0
    %1877 = vmatpush2.msra.mxu0 0.0
    %1878 = vmatprep.subr.mxu0 0.0
    %1879 = vmatpush2.msra.mxu0 0.0
    %1880 = vmatprep.subr.mxu0 0.0
    %1881 = vmatpush2.msra.mxu0 0.0
    %1882 = vmatprep.subr.mxu0 0.0
    %1883 = vmatpush2.msra.mxu0 0.0
    %1884 = vmatprep.subr.mxu0 0.0
    %1885 = vmatpush2.msra.mxu0 0.0
    %1886 = vmatprep.subr.mxu0 0.0
    %1887 = vmatpush2.msra.mxu0 0.0
    %1888 = vmatprep.subr.mxu0 0.0
    %1889 = vmatpush2.msra.mxu0 0.0
    %1890 = vmatprep.subr.mxu0 0.0
    %1891 = vmatpush2.msra.mxu0 0.0
    %1892 = vmatprep.subr.mxu0 0.0
    %1893 = vmatpush2.msra.mxu0 0.0
    %1894 = vmatprep.subr.mxu0 0.0
    %1895 = vmatpush2.msra.mxu0 0.0
    %1896 = vmatprep.subr.mxu0 0.0
    %1897 = vmatpush2.msra.mxu0 0.0
    %1898 = vmatprep.mubr.f32.mxu0 0.0
    %1899 = vmatmul.mubr.f32.gmra.mxu0 %v1693
    %v1900 = vpop.f32.mrf.mxu0
    %v1901 = vadd.f32 0.0, %v1900
    %v1902 = vpop.f32.mrf.mxu0
    %v1903 = vadd.f32 0.0, %v1902
    %1904 = vdwg.mxu0
    %v1905 = vadd.f32 %v1695, %v1830
    %v1906 = vadd.f32 %v1696, %v1832
    %v1907 = vadd.f32 %v1697, %v1901
    %v1908 = vadd.f32 %v1698, %v1903
    %v1909 = vxor.u32 %v1905, 2147483648
    %v1910 = vmul.f32 %v1909, 1.442695
    %v1911 = vpow.pop %v1910
    %v1912 = vadd.f32 %v1911, 1.0
    %v1913 = vrcp.pop %v1912
    %v1914 = vmul.f32 1.0, %v1913
    %v1915 = vxor.u32 %v1906, 2147483648
    %v1916 = vmul.f32 %v1915, 1.442695
    %v1917 = vpow.pop %v1916
    %v1918 = vadd.f32 %v1917, 1.0
    %v1919 = vrcp.pop %v1918
    %v1920 = vmul.f32 1.0, %v1919
    %v1921 = vtanh.pop %v1907
    %v1922 = vxor.u32 %v1908, 2147483648
    %v1923 = vmul.f32 %v1922, 1.442695
    %v1924 = vpow.pop %v1923
    %v1925 = vadd.f32 %v1924, 1.0
    %v1926 = vrcp.pop %v1925
    %v1927 = vmul.f32 1.0, %v1926
    %v1928 = vmul.f32 %v1920, %v1691
    %v1929 = vmul.f32 %v1914, %v1921
    %v1930 = vadd.f32 %v1928, %v1929
    %v1931 = vtanh.pop %v1930
    %v1932 = vmul.f32 %v1927, %v1931
    %1933 = vst [vmem:[#allocation2 + $0x30] sm:$0xff] %v1932
    %v1934 = vld [vmem:[#allocation3 + $0xe0] sm:$0xff]
    %v1935 = vld [vmem:[#allocation3 + $0xe8] sm:$0xff]
    %v1936 = vld [vmem:[#allocation3 + $0xf0] sm:$0xff]
    %v1937 = vld [vmem:[#allocation3 + $0xf8] sm:$0xff]
    %v1938 = vld [vmem:[#allocation4] sm:$0xff]
    %v1939 = vld [vmem:[#allocation4 + $0x8] sm:$0xff]
    %v1940 = vld [vmem:[#allocation4 + $0x10] sm:$0xff]
    %v1941 = vld [vmem:[#allocation4 + $0x18] sm:$0xff]
    %v1942 = vld [vmem:[#allocation4 + $0x20] sm:$0xff]
    %v1943 = vld [vmem:[#allocation4 + $0x28] sm:$0xff]
    %v1944 = vld [vmem:[#allocation4 + $0x30] sm:$0xff]
    %v1945 = vld [vmem:[#allocation4 + $0x38] sm:$0xff]
    %v1946 = vld [vmem:[#allocation4 + $0x40] sm:$0xff]
    %v1947 = vld [vmem:[#allocation4 + $0x48] sm:$0xff]
    %v1948 = vld [vmem:[#allocation4 + $0x50] sm:$0xff]
    %v1949 = vld [vmem:[#allocation4 + $0x58] sm:$0xff]
    %v1950 = vld [vmem:[#allocation4 + $0x60] sm:$0xff]
    %v1951 = vld [vmem:[#allocation4 + $0x68] sm:$0xff]
    %v1952 = vld [vmem:[#allocation4 + $0x70] sm:$0xff]
    %v1953 = vld [vmem:[#allocation4 + $0x78] sm:$0xff]
    %v1954 = vld [vmem:[#allocation4 + $0x80] sm:$0xff]
    %v1955 = vld [vmem:[#allocation4 + $0x88] sm:$0xff]
    %v1956 = vld [vmem:[#allocation4 + $0x90] sm:$0xff]
    %v1957 = vld [vmem:[#allocation4 + $0x98] sm:$0xff]
    %v1958 = vld [vmem:[#allocation4 + $0xa0] sm:$0xff]
    %v1959 = vld [vmem:[#allocation4 + $0xa8] sm:$0xff]
    %v1960 = vld [vmem:[#allocation4 + $0xb0] sm:$0xff]
    %v1961 = vld [vmem:[#allocation4 + $0xb8] sm:$0xff]
    %v1962 = vld [vmem:[#allocation4 + $0xc0] sm:$0xff]
    %v1963 = vld [vmem:[#allocation4 + $0xc8] sm:$0xff]
    %v1964 = vld [vmem:[#allocation4 + $0xd0] sm:$0xff]
    %v1965 = vld [vmem:[#allocation4 + $0xd8] sm:$0xff]
    %v1966 = vld [vmem:[#allocation4 + $0xe0] sm:$0xff]
    %v1967 = vld [vmem:[#allocation4 + $0xe8] sm:$0xff]
    %v1968 = vld [vmem:[#allocation4 + $0xf0] sm:$0xff]
    %v1969 = vld [vmem:[#allocation4 + $0xf8] sm:$0xff]
    %v1970 = vld [vmem:[#allocation4 + $0x100] sm:$0xff]
    %v1971 = vld [vmem:[#allocation4 + $0x108] sm:$0xff]
    %v1972 = vld [vmem:[#allocation4 + $0x110] sm:$0xff]
    %v1973 = vld [vmem:[#allocation4 + $0x118] sm:$0xff]
    %v1974 = vld [vmem:[#allocation4 + $0x120] sm:$0xff]
    %v1975 = vld [vmem:[#allocation4 + $0x128] sm:$0xff]
    %v1976 = vld [vmem:[#allocation4 + $0x130] sm:$0xff]
    %v1977 = vld [vmem:[#allocation4 + $0x138] sm:$0xff]
    %v1978 = vld [vmem:[#allocation4 + $0x140] sm:$0xff]
    %v1979 = vld [vmem:[#allocation4 + $0x148] sm:$0xff]
    %v1980 = vld [vmem:[#allocation4 + $0x150] sm:$0xff]
    %v1981 = vld [vmem:[#allocation4 + $0x158] sm:$0xff]
    %v1982 = vld [vmem:[#allocation4 + $0x160] sm:$0xff]
    %v1983 = vld [vmem:[#allocation4 + $0x168] sm:$0xff]
    %v1984 = vld [vmem:[#allocation4 + $0x170] sm:$0xff]
    %v1985 = vld [vmem:[#allocation4 + $0x178] sm:$0xff]
    %v1986 = vld [vmem:[#allocation4 + $0x180] sm:$0xff]
    %v1987 = vld [vmem:[#allocation4 + $0x188] sm:$0xff]
    %v1988 = vld [vmem:[#allocation4 + $0x190] sm:$0xff]
    %v1989 = vld [vmem:[#allocation4 + $0x198] sm:$0xff]
    %v1990 = vld [vmem:[#allocation4 + $0x1a0] sm:$0xff]
    %v1991 = vld [vmem:[#allocation4 + $0x1a8] sm:$0xff]
    %v1992 = vld [vmem:[#allocation4 + $0x1b0] sm:$0xff]
    %v1993 = vld [vmem:[#allocation4 + $0x1b8] sm:$0xff]
    %v1994 = vld [vmem:[#allocation4 + $0x1c0] sm:$0xff]
    %v1995 = vld [vmem:[#allocation4 + $0x1c8] sm:$0xff]
    %v1996 = vld [vmem:[#allocation4 + $0x1d0] sm:$0xff]
    %v1997 = vld [vmem:[#allocation4 + $0x1d8] sm:$0xff]
    %v1998 = vld [vmem:[#allocation4 + $0x1e0] sm:$0xff]
    %v1999 = vld [vmem:[#allocation4 + $0x1e8] sm:$0xff]
    %v2000 = vld [vmem:[#allocation4 + $0x1f0] sm:$0xff]
    %v2001 = vld [vmem:[#allocation4 + $0x1f8] sm:$0xff]
    %2002 = vmatprep.subr.mxu0 %v1999
    %2003 = vmatpush1.msra.mxu0 %v1998
    %2004 = vmatprep.subr.mxu0 %v1995
    %2005 = vmatpush1.msra.mxu0 %v1994
    %2006 = vmatprep.subr.mxu0 %v1991
    %2007 = vmatpush1.msra.mxu0 %v1990
    %2008 = vmatprep.subr.mxu0 %v1987
    %2009 = vmatpush1.msra.mxu0 %v1986
    %2010 = vmatprep.subr.mxu0 %v1983
    %2011 = vmatpush1.msra.mxu0 %v1982
    %2012 = vmatprep.subr.mxu0 %v1979
    %2013 = vmatpush1.msra.mxu0 %v1978
    %2014 = vmatprep.subr.mxu0 %v1975
    %2015 = vmatpush1.msra.mxu0 %v1974
    %2016 = vmatprep.subr.mxu0 %v1971
    %2017 = vmatpush1.msra.mxu0 %v1970
    %2018 = vmatprep.subr.mxu0 %v1967
    %2019 = vmatpush1.msra.mxu0 %v1966
    %2020 = vmatprep.subr.mxu0 %v1963
    %2021 = vmatpush1.msra.mxu0 %v1962
    %2022 = vmatprep.subr.mxu0 %v1959
    %2023 = vmatpush1.msra.mxu0 %v1958
    %2024 = vmatprep.subr.mxu0 %v1955
    %2025 = vmatpush1.msra.mxu0 %v1954
    %2026 = vmatprep.subr.mxu0 %v1951
    %2027 = vmatpush1.msra.mxu0 %v1950
    %2028 = vmatprep.subr.mxu0 %v1947
    %2029 = vmatpush1.msra.mxu0 %v1946
    %2030 = vmatprep.subr.mxu0 %v1943
    %2031 = vmatpush1.msra.mxu0 %v1942
    %2032 = vmatprep.subr.mxu0 %v1939
    %2033 = vmatpush1.msra.mxu0 %v1938
    %2034 = vmatprep.subr.mxu0 0.0
    %2035 = vmatpush2.msra.mxu0 0.0
    %2036 = vmatprep.subr.mxu0 0.0
    %2037 = vmatpush2.msra.mxu0 0.0
    %2038 = vmatprep.subr.mxu0 0.0
    %2039 = vmatpush2.msra.mxu0 0.0
    %2040 = vmatprep.subr.mxu0 0.0
    %2041 = vmatpush2.msra.mxu0 0.0
    %2042 = vmatprep.subr.mxu0 0.0
    %2043 = vmatpush2.msra.mxu0 0.0
    %2044 = vmatprep.subr.mxu0 0.0
    %2045 = vmatpush2.msra.mxu0 0.0
    %2046 = vmatprep.subr.mxu0 0.0
    %2047 = vmatpush2.msra.mxu0 0.0
    %2048 = vmatprep.subr.mxu0 0.0
    %2049 = vmatpush2.msra.mxu0 0.0
    %2050 = vmatprep.subr.mxu0 0.0
    %2051 = vmatpush2.msra.mxu0 0.0
    %2052 = vmatprep.subr.mxu0 0.0
    %2053 = vmatpush2.msra.mxu0 0.0
    %2054 = vmatprep.subr.mxu0 0.0
    %2055 = vmatpush2.msra.mxu0 0.0
    %2056 = vmatprep.subr.mxu0 0.0
    %2057 = vmatpush2.msra.mxu0 0.0
    %2058 = vmatprep.subr.mxu0 0.0
    %2059 = vmatpush2.msra.mxu0 0.0
    %2060 = vmatprep.subr.mxu0 0.0
    %2061 = vmatpush2.msra.mxu0 0.0
    %2062 = vmatprep.subr.mxu0 0.0
    %2063 = vmatpush2.msra.mxu0 0.0
    %2064 = vmatprep.subr.mxu0 0.0
    %2065 = vmatpush2.msra.mxu0 0.0
    %2066 = vmatprep.mubr.f32.mxu0 0.0
    %2067 = vmatmul.mubr.f32.gmra.mxu0 %v1932
    %v2068 = vpop.f32.mrf.mxu0
    %v2069 = vadd.f32 0.0, %v2068
    %v2070 = vpop.f32.mrf.mxu0
    %v2071 = vadd.f32 0.0, %v2070
    %2072 = vdwg.mxu0
    %2073 = vmatprep.subr.mxu0 %v2001
    %2074 = vmatpush1.msra.mxu0 %v2000
    %2075 = vmatprep.subr.mxu0 %v1997
    %2076 = vmatpush1.msra.mxu0 %v1996
    %2077 = vmatprep.subr.mxu0 %v1993
    %2078 = vmatpush1.msra.mxu0 %v1992
    %2079 = vmatprep.subr.mxu0 %v1989
    %2080 = vmatpush1.msra.mxu0 %v1988
    %2081 = vmatprep.subr.mxu0 %v1985
    %2082 = vmatpush1.msra.mxu0 %v1984
    %2083 = vmatprep.subr.mxu0 %v1981
    %2084 = vmatpush1.msra.mxu0 %v1980
    %2085 = vmatprep.subr.mxu0 %v1977
    %2086 = vmatpush1.msra.mxu0 %v1976
    %2087 = vmatprep.subr.mxu0 %v1973
    %2088 = vmatpush1.msra.mxu0 %v1972
    %2089 = vmatprep.subr.mxu0 %v1969
    %2090 = vmatpush1.msra.mxu0 %v1968
    %2091 = vmatprep.subr.mxu0 %v1965
    %2092 = vmatpush1.msra.mxu0 %v1964
    %2093 = vmatprep.subr.mxu0 %v1961
    %2094 = vmatpush1.msra.mxu0 %v1960
    %2095 = vmatprep.subr.mxu0 %v1957
    %2096 = vmatpush1.msra.mxu0 %v1956
    %2097 = vmatprep.subr.mxu0 %v1953
    %2098 = vmatpush1.msra.mxu0 %v1952
    %2099 = vmatprep.subr.mxu0 %v1949
    %2100 = vmatpush1.msra.mxu0 %v1948
    %2101 = vmatprep.subr.mxu0 %v1945
    %2102 = vmatpush1.msra.mxu0 %v1944
    %2103 = vmatprep.subr.mxu0 %v1941
    %2104 = vmatpush1.msra.mxu0 %v1940
    %2105 = vmatprep.subr.mxu0 0.0
    %2106 = vmatpush2.msra.mxu0 0.0
    %2107 = vmatprep.subr.mxu0 0.0
    %2108 = vmatpush2.msra.mxu0 0.0
    %2109 = vmatprep.subr.mxu0 0.0
    %2110 = vmatpush2.msra.mxu0 0.0
    %2111 = vmatprep.subr.mxu0 0.0
    %2112 = vmatpush2.msra.mxu0 0.0
    %2113 = vmatprep.subr.mxu0 0.0
    %2114 = vmatpush2.msra.mxu0 0.0
    %2115 = vmatprep.subr.mxu0 0.0
    %2116 = vmatpush2.msra.mxu0 0.0
    %2117 = vmatprep.subr.mxu0 0.0
    %2118 = vmatpush2.msra.mxu0 0.0
    %2119 = vmatprep.subr.mxu0 0.0
    %2120 = vmatpush2.msra.mxu0 0.0
    %2121 = vmatprep.subr.mxu0 0.0
    %2122 = vmatpush2.msra.mxu0 0.0
    %2123 = vmatprep.subr.mxu0 0.0
    %2124 = vmatpush2.msra.mxu0 0.0
    %2125 = vmatprep.subr.mxu0 0.0
    %2126 = vmatpush2.msra.mxu0 0.0
    %2127 = vmatprep.subr.mxu0 0.0
    %2128 = vmatpush2.msra.mxu0 0.0
    %2129 = vmatprep.subr.mxu0 0.0
    %2130 = vmatpush2.msra.mxu0 0.0
    %2131 = vmatprep.subr.mxu0 0.0
    %2132 = vmatpush2.msra.mxu0 0.0
    %2133 = vmatprep.subr.mxu0 0.0
    %2134 = vmatpush2.msra.mxu0 0.0
    %2135 = vmatprep.subr.mxu0 0.0
    %2136 = vmatpush2.msra.mxu0 0.0
    %2137 = vmatprep.mubr.f32.mxu0 0.0
    %2138 = vmatmul.mubr.f32.gmra.mxu0 %v1932
    %v2139 = vpop.f32.mrf.mxu0
    %v2140 = vadd.f32 0.0, %v2139
    %v2141 = vpop.f32.mrf.mxu0
    %v2142 = vadd.f32 0.0, %v2141
    %2143 = vdwg.mxu0
    %v2144 = vadd.f32 %v1934, %v2069
    %v2145 = vadd.f32 %v1935, %v2071
    %v2146 = vadd.f32 %v1936, %v2140
    %v2147 = vadd.f32 %v1937, %v2142
    %v2148 = vxor.u32 %v2144, 2147483648
    %v2149 = vmul.f32 %v2148, 1.442695
    %v2150 = vpow.pop %v2149
    %v2151 = vadd.f32 %v2150, 1.0
    %v2152 = vrcp.pop %v2151
    %v2153 = vmul.f32 1.0, %v2152
    %v2154 = vxor.u32 %v2145, 2147483648
    %v2155 = vmul.f32 %v2154, 1.442695
    %v2156 = vpow.pop %v2155
    %v2157 = vadd.f32 %v2156, 1.0
    %v2158 = vrcp.pop %v2157
    %v2159 = vmul.f32 1.0, %v2158
    %v2160 = vtanh.pop %v2146
    %v2161 = vxor.u32 %v2147, 2147483648
    %v2162 = vmul.f32 %v2161, 1.442695
    %v2163 = vpow.pop %v2162
    %v2164 = vadd.f32 %v2163, 1.0
    %v2165 = vrcp.pop %v2164
    %v2166 = vmul.f32 1.0, %v2165
    %v2167 = vmul.f32 %v2159, %v1930
    %v2168 = vmul.f32 %v2153, %v2160
    %v2169 = vadd.f32 %v2167, %v2168
    %v2170 = vtanh.pop %v2169
    %v2171 = vmul.f32 %v2166, %v2170
    %2172 = vst [vmem:[#allocation2 + $0x38] sm:$0xff] %v2171
    %v2173 = vld [vmem:[#allocation2] sm:$0xff]
    %v2174 = vld [vmem:[#allocation2 + $0x8] sm:$0xff]
    %v2175 = vld [vmem:[#allocation2 + $0x10] sm:$0xff]
    %v2176 = vld [vmem:[#allocation2 + $0x18] sm:$0xff]
    %v2177 = vld [vmem:[#allocation2 + $0x20] sm:$0xff]
    %v2178 = vld [vmem:[#allocation2 + $0x28] sm:$0xff]
    %v2179 = vld [vmem:[#allocation2 + $0x30] sm:$0xff]
    %v2180 = vld [vmem:[#allocation2 + $0x38] sm:$0xff]
    %v2181 = vld [vmem:[#allocation6] sm:$0xff]
    %v2182 = vld [vmem:[#allocation6 + $0x8] sm:$0xff]
    %v2183 = vld [vmem:[#allocation6 + $0x10] sm:$0xff]
    %v2184 = vld [vmem:[#allocation6 + $0x18] sm:$0xff]
    %v2185 = vld [vmem:[#allocation6 + $0x20] sm:$0xff]
    %v2186 = vld [vmem:[#allocation6 + $0x28] sm:$0xff]
    %v2187 = vld [vmem:[#allocation6 + $0x30] sm:$0xff]
    %v2188 = vld [vmem:[#allocation6 + $0x38] sm:$0xff]
    %v2189 = vld [vmem:[#allocation6 + $0x40] sm:$0xff]
    %v2190 = vld [vmem:[#allocation6 + $0x48] sm:$0xff]
    %v2191 = vld [vmem:[#allocation6 + $0x50] sm:$0xff]
    %v2192 = vld [vmem:[#allocation6 + $0x58] sm:$0xff]
    %v2193 = vld [vmem:[#allocation6 + $0x60] sm:$0xff]
    %v2194 = vld [vmem:[#allocation6 + $0x68] sm:$0xff]
    %v2195 = vld [vmem:[#allocation6 + $0x70] sm:$0xff]
    %v2196 = vld [vmem:[#allocation6 + $0x78] sm:$0xff]
    %v2197 = vld [vmem:[#allocation6 + $0x80] sm:$0xff]
    %v2198 = vld [vmem:[#allocation6 + $0x88] sm:$0xff]
    %v2199 = vld [vmem:[#allocation6 + $0x90] sm:$0xff]
    %v2200 = vld [vmem:[#allocation6 + $0x98] sm:$0xff]
    %v2201 = vld [vmem:[#allocation6 + $0xa0] sm:$0xff]
    %v2202 = vld [vmem:[#allocation6 + $0xa8] sm:$0xff]
    %v2203 = vld [vmem:[#allocation6 + $0xb0] sm:$0xff]
    %v2204 = vld [vmem:[#allocation6 + $0xb8] sm:$0xff]
    %v2205 = vld [vmem:[#allocation6 + $0xc0] sm:$0xff]
    %v2206 = vld [vmem:[#allocation6 + $0xc8] sm:$0xff]
    %v2207 = vld [vmem:[#allocation6 + $0xd0] sm:$0xff]
    %v2208 = vld [vmem:[#allocation6 + $0xd8] sm:$0xff]
    %v2209 = vld [vmem:[#allocation6 + $0xe0] sm:$0xff]
    %v2210 = vld [vmem:[#allocation6 + $0xe8] sm:$0xff]
    %v2211 = vld [vmem:[#allocation6 + $0xf0] sm:$0xff]
    %v2212 = vld [vmem:[#allocation6 + $0xf8] sm:$0xff]
    %v2213 = vld [vmem:[#allocation6 + $0x100] sm:$0xff]
    %v2214 = vld [vmem:[#allocation6 + $0x108] sm:$0xff]
    %v2215 = vld [vmem:[#allocation6 + $0x110] sm:$0xff]
    %v2216 = vld [vmem:[#allocation6 + $0x118] sm:$0xff]
    %v2217 = vld [vmem:[#allocation6 + $0x120] sm:$0xff]
    %v2218 = vld [vmem:[#allocation6 + $0x128] sm:$0xff]
    %v2219 = vld [vmem:[#allocation6 + $0x130] sm:$0xff]
    %v2220 = vld [vmem:[#allocation6 + $0x138] sm:$0xff]
    %v2221 = vld [vmem:[#allocation6 + $0x140] sm:$0xff]
    %v2222 = vld [vmem:[#allocation6 + $0x148] sm:$0xff]
    %v2223 = vld [vmem:[#allocation6 + $0x150] sm:$0xff]
    %v2224 = vld [vmem:[#allocation6 + $0x158] sm:$0xff]
    %v2225 = vld [vmem:[#allocation6 + $0x160] sm:$0xff]
    %v2226 = vld [vmem:[#allocation6 + $0x168] sm:$0xff]
    %v2227 = vld [vmem:[#allocation6 + $0x170] sm:$0xff]
    %v2228 = vld [vmem:[#allocation6 + $0x178] sm:$0xff]
    %v2229 = vld [vmem:[#allocation6 + $0x180] sm:$0xff]
    %v2230 = vld [vmem:[#allocation6 + $0x188] sm:$0xff]
    %v2231 = vld [vmem:[#allocation6 + $0x190] sm:$0xff]
    %v2232 = vld [vmem:[#allocation6 + $0x198] sm:$0xff]
    %v2233 = vld [vmem:[#allocation6 + $0x1a0] sm:$0xff]
    %v2234 = vld [vmem:[#allocation6 + $0x1a8] sm:$0xff]
    %v2235 = vld [vmem:[#allocation6 + $0x1b0] sm:$0xff]
    %v2236 = vld [vmem:[#allocation6 + $0x1b8] sm:$0xff]
    %v2237 = vld [vmem:[#allocation6 + $0x1c0] sm:$0xff]
    %v2238 = vld [vmem:[#allocation6 + $0x1c8] sm:$0xff]
    %v2239 = vld [vmem:[#allocation6 + $0x1d0] sm:$0xff]
    %v2240 = vld [vmem:[#allocation6 + $0x1d8] sm:$0xff]
    %v2241 = vld [vmem:[#allocation6 + $0x1e0] sm:$0xff]
    %v2242 = vld [vmem:[#allocation6 + $0x1e8] sm:$0xff]
    %v2243 = vld [vmem:[#allocation6 + $0x1f0] sm:$0xff]
    %v2244 = vld [vmem:[#allocation6 + $0x1f8] sm:$0xff]
    %v2245 = vld [vmem:[%s6] sm:$0xf]
    %v2247 = vlaneseq
    %v2248 = vshrl.u32 %v2247, 7
    %v2249 = vsub.s32 0, %v2248
    %v2250 = vrot.slane %v2245, %v2249
    %v2251 = vlaneseq
    %v2252 = vshrl.u32 %v2251, 7
    %v2253 = vsub.s32 1, %v2252
    %v2254 = vrot.slane %v2245, %v2253
    %v2255 = vlaneseq
    %v2256 = vshrl.u32 %v2255, 7
    %v2257 = vsub.s32 2, %v2256
    %v2258 = vrot.slane %v2245, %v2257
    %v2259 = vlaneseq
    %v2260 = vshrl.u32 %v2259, 7
    %v2261 = vsub.s32 3, %v2260
    %v2262 = vrot.slane %v2245, %v2261
    %2267 = vmatprep.subr.mxu0 %v2242
    %2268 = vmatpush1.msra.mxu0 %v2241
    %2269 = vmatprep.subr.mxu0 %v2238
    %2270 = vmatpush1.msra.mxu0 %v2237
    %2271 = vmatprep.subr.mxu0 %v2234
    %2272 = vmatpush1.msra.mxu0 %v2233
    %2273 = vmatprep.subr.mxu0 %v2230
    %2274 = vmatpush1.msra.mxu0 %v2229
    %2275 = vmatprep.subr.mxu0 %v2226
    %2276 = vmatpush1.msra.mxu0 %v2225
    %2277 = vmatprep.subr.mxu0 %v2222
    %2278 = vmatpush1.msra.mxu0 %v2221
    %2279 = vmatprep.subr.mxu0 %v2218
    %2280 = vmatpush1.msra.mxu0 %v2217
    %2281 = vmatprep.subr.mxu0 %v2214
    %2282 = vmatpush1.msra.mxu0 %v2213
    %2283 = vmatprep.subr.mxu0 %v2210
    %2284 = vmatpush1.msra.mxu0 %v2209
    %2285 = vmatprep.subr.mxu0 %v2206
    %2286 = vmatpush1.msra.mxu0 %v2205
    %2287 = vmatprep.subr.mxu0 %v2202
    %2288 = vmatpush1.msra.mxu0 %v2201
    %2289 = vmatprep.subr.mxu0 %v2198
    %2290 = vmatpush1.msra.mxu0 %v2197
    %2291 = vmatprep.subr.mxu0 %v2194
    %2292 = vmatpush1.msra.mxu0 %v2193
    %2293 = vmatprep.subr.mxu0 %v2190
    %2294 = vmatpush1.msra.mxu0 %v2189
    %2295 = vmatprep.subr.mxu0 %v2186
    %2296 = vmatpush1.msra.mxu0 %v2185
    %2297 = vmatprep.subr.mxu0 %v2182
    %2298 = vmatpush1.msra.mxu0 %v2181
    %2299 = vmatprep.subr.mxu0 0.0
    %2300 = vmatpush2.msra.mxu0 0.0
    %2301 = vmatprep.subr.mxu0 0.0
    %2302 = vmatpush2.msra.mxu0 0.0
    %2303 = vmatprep.subr.mxu0 0.0
    %2304 = vmatpush2.msra.mxu0 0.0
    %2305 = vmatprep.subr.mxu0 0.0
    %2306 = vmatpush2.msra.mxu0 0.0
    %2307 = vmatprep.subr.mxu0 0.0
    %2308 = vmatpush2.msra.mxu0 0.0
    %2309 = vmatprep.subr.mxu0 0.0
    %2310 = vmatpush2.msra.mxu0 0.0
    %2311 = vmatprep.subr.mxu0 0.0
    %2312 = vmatpush2.msra.mxu0 0.0
    %2313 = vmatprep.subr.mxu0 0.0
    %2314 = vmatpush2.msra.mxu0 0.0
    %2315 = vmatprep.subr.mxu0 0.0
    %2316 = vmatpush2.msra.mxu0 0.0
    %2317 = vmatprep.subr.mxu0 0.0
    %2318 = vmatpush2.msra.mxu0 0.0
    %2319 = vmatprep.subr.mxu0 0.0
    %2320 = vmatpush2.msra.mxu0 0.0
    %2321 = vmatprep.subr.mxu0 0.0
    %2322 = vmatpush2.msra.mxu0 0.0
    %2323 = vmatprep.subr.mxu0 0.0
    %2324 = vmatpush2.msra.mxu0 0.0
    %2325 = vmatprep.subr.mxu0 0.0
    %2326 = vmatpush2.msra.mxu0 0.0
    %2327 = vmatprep.subr.mxu0 0.0
    %2328 = vmatpush2.msra.mxu0 0.0
    %2329 = vmatprep.subr.mxu0 0.0
    %2330 = vmatpush2.msra.mxu0 0.0
    %2331 = vmatprep.mubr.f32.mxu0 0.0
    %2332 = vmatmul.mubr.f32.gmra.mxu0 %v2173
    %v2333 = vpop.f32.mrf.mxu0
    %v2334 = vadd.f32 %v2250, %v2333
    %v2335 = vpop.f32.mrf.mxu0
    %v2336 = vadd.f32 %v2254, %v2335
    %2337 = vmatprep.mubr.f32.mxu0 0.0
    %2338 = vmatmul.mubr.f32.gmra.mxu0 %v2174
    %v2339 = vpop.f32.mrf.mxu0
    %v2340 = vadd.f32 %v2250, %v2339
    %v2341 = vpop.f32.mrf.mxu0
    %v2342 = vadd.f32 %v2254, %v2341
    %2343 = vmatprep.mubr.f32.mxu0 0.0
    %2344 = vmatmul.mubr.f32.gmra.mxu0 %v2175
    %v2345 = vpop.f32.mrf.mxu0
    %v2346 = vadd.f32 %v2250, %v2345
    %v2347 = vpop.f32.mrf.mxu0
    %v2348 = vadd.f32 %v2254, %v2347
    %2349 = vmatprep.mubr.f32.mxu0 0.0
    %2350 = vmatmul.mubr.f32.gmra.mxu0 %v2176
    %v2351 = vpop.f32.mrf.mxu0
    %v2352 = vadd.f32 %v2250, %v2351
    %v2353 = vpop.f32.mrf.mxu0
    %v2354 = vadd.f32 %v2254, %v2353
    %2355 = vmatprep.mubr.f32.mxu0 0.0
    %2356 = vmatmul.mubr.f32.gmra.mxu0 %v2177
    %v2357 = vpop.f32.mrf.mxu0
    %v2358 = vadd.f32 %v2250, %v2357
    %v2359 = vpop.f32.mrf.mxu0
    %v2360 = vadd.f32 %v2254, %v2359
    %2361 = vmatprep.mubr.f32.mxu0 0.0
    %2362 = vmatmul.mubr.f32.gmra.mxu0 %v2178
    %v2363 = vpop.f32.mrf.mxu0
    %v2364 = vadd.f32 %v2250, %v2363
    %v2365 = vpop.f32.mrf.mxu0
    %v2366 = vadd.f32 %v2254, %v2365
    %2367 = vmatprep.mubr.f32.mxu0 0.0
    %2368 = vmatmul.mubr.f32.gmra.mxu0 %v2179
    %v2369 = vpop.f32.mrf.mxu0
    %v2370 = vadd.f32 %v2250, %v2369
    %v2371 = vpop.f32.mrf.mxu0
    %v2372 = vadd.f32 %v2254, %v2371
    %2373 = vmatprep.mubr.f32.mxu0 0.0
    %2374 = vmatmul.mubr.f32.gmra.mxu0 %v2180
    %v2375 = vpop.f32.mrf.mxu0
    %v2376 = vadd.f32 %v2250, %v2375
    %v2377 = vpop.f32.mrf.mxu0
    %v2378 = vadd.f32 %v2254, %v2377
    %2379 = vdwg.mxu0
    %2380 = vmatprep.subr.mxu0 %v2244
    %2381 = vmatpush1.msra.mxu0 %v2243
    %2382 = vmatprep.subr.mxu0 %v2240
    %2383 = vmatpush1.msra.mxu0 %v2239
    %2384 = vmatprep.subr.mxu0 %v2236
    %2385 = vmatpush1.msra.mxu0 %v2235
    %2386 = vmatprep.subr.mxu0 %v2232
    %2387 = vmatpush1.msra.mxu0 %v2231
    %2388 = vmatprep.subr.mxu0 %v2228
    %2389 = vmatpush1.msra.mxu0 %v2227
    %2390 = vmatprep.subr.mxu0 %v2224
    %2391 = vmatpush1.msra.mxu0 %v2223
    %2392 = vmatprep.subr.mxu0 %v2220
    %2393 = vmatpush1.msra.mxu0 %v2219
    %2394 = vmatprep.subr.mxu0 %v2216
    %2395 = vmatpush1.msra.mxu0 %v2215
    %2396 = vmatprep.subr.mxu0 %v2212
    %2397 = vmatpush1.msra.mxu0 %v2211
    %2398 = vmatprep.subr.mxu0 %v2208
    %2399 = vmatpush1.msra.mxu0 %v2207
    %2400 = vmatprep.subr.mxu0 %v2204
    %2401 = vmatpush1.msra.mxu0 %v2203
    %2402 = vmatprep.subr.mxu0 %v2200
    %2403 = vmatpush1.msra.mxu0 %v2199
    %2404 = vmatprep.subr.mxu0 %v2196
    %2405 = vmatpush1.msra.mxu0 %v2195
    %2406 = vmatprep.subr.mxu0 %v2192
    %2407 = vmatpush1.msra.mxu0 %v2191
    %2408 = vmatprep.subr.mxu0 %v2188
    %2409 = vmatpush1.msra.mxu0 %v2187
    %2410 = vmatprep.subr.mxu0 %v2184
    %2411 = vmatpush1.msra.mxu0 %v2183
    %2412 = vmatprep.subr.mxu0 0.0
    %2413 = vmatpush2.msra.mxu0 0.0
    %2414 = vmatprep.subr.mxu0 0.0
    %2415 = vmatpush2.msra.mxu0 0.0
    %2416 = vmatprep.subr.mxu0 0.0
    %2417 = vmatpush2.msra.mxu0 0.0
    %2418 = vmatprep.subr.mxu0 0.0
    %2419 = vmatpush2.msra.mxu0 0.0
    %2420 = vmatprep.subr.mxu0 0.0
    %2421 = vmatpush2.msra.mxu0 0.0
    %2422 = vmatprep.subr.mxu0 0.0
    %2423 = vmatpush2.msra.mxu0 0.0
    %2424 = vmatprep.subr.mxu0 0.0
    %2425 = vmatpush2.msra.mxu0 0.0
    %2426 = vmatprep.subr.mxu0 0.0
    %2427 = vmatpush2.msra.mxu0 0.0
    %2428 = vmatprep.subr.mxu0 0.0
    %2429 = vmatpush2.msra.mxu0 0.0
    %2430 = vmatprep.subr.mxu0 0.0
    %2431 = vmatpush2.msra.mxu0 0.0
    %2432 = vmatprep.subr.mxu0 0.0
    %2433 = vmatpush2.msra.mxu0 0.0
    %2434 = vmatprep.subr.mxu0 0.0
    %2435 = vmatpush2.msra.mxu0 0.0
    %2436 = vmatprep.subr.mxu0 0.0
    %2437 = vmatpush2.msra.mxu0 0.0
    %2438 = vmatprep.subr.mxu0 0.0
    %2439 = vmatpush2.msra.mxu0 0.0
    %2440 = vmatprep.subr.mxu0 0.0
    %2441 = vmatpush2.msra.mxu0 0.0
    %2442 = vmatprep.subr.mxu0 0.0
    %2443 = vmatpush2.msra.mxu0 0.0
    %2444 = vmatprep.mubr.f32.mxu0 0.0
    %2445 = vmatmul.mubr.f32.gmra.mxu0 %v2173
    %v2446 = vpop.f32.mrf.mxu0
    %v2447 = vadd.f32 %v2258, %v2446
    %v2448 = vpop.f32.mrf.mxu0
    %v2449 = vadd.f32 %v2262, %v2448
    %2450 = vmatprep.mubr.f32.mxu0 0.0
    %2451 = vmatmul.mubr.f32.gmra.mxu0 %v2174
    %v2452 = vpop.f32.mrf.mxu0
    %v2453 = vadd.f32 %v2258, %v2452
    %v2454 = vpop.f32.mrf.mxu0
    %v2455 = vadd.f32 %v2262, %v2454
    %2456 = vmatprep.mubr.f32.mxu0 0.0
    %2457 = vmatmul.mubr.f32.gmra.mxu0 %v2175
    %v2458 = vpop.f32.mrf.mxu0
    %v2459 = vadd.f32 %v2258, %v2458
    %v2460 = vpop.f32.mrf.mxu0
    %v2461 = vadd.f32 %v2262, %v2460
    %2462 = vmatprep.mubr.f32.mxu0 0.0
    %2463 = vmatmul.mubr.f32.gmra.mxu0 %v2176
    %v2464 = vpop.f32.mrf.mxu0
    %v2465 = vadd.f32 %v2258, %v2464
    %v2466 = vpop.f32.mrf.mxu0
    %v2467 = vadd.f32 %v2262, %v2466
    %2468 = vmatprep.mubr.f32.mxu0 0.0
    %2469 = vmatmul.mubr.f32.gmra.mxu0 %v2177
    %v2470 = vpop.f32.mrf.mxu0
    %v2471 = vadd.f32 %v2258, %v2470
    %v2472 = vpop.f32.mrf.mxu0
    %v2473 = vadd.f32 %v2262, %v2472
    %2474 = vmatprep.mubr.f32.mxu0 0.0
    %2475 = vmatmul.mubr.f32.gmra.mxu0 %v2178
    %v2476 = vpop.f32.mrf.mxu0
    %v2477 = vadd.f32 %v2258, %v2476
    %v2478 = vpop.f32.mrf.mxu0
    %v2479 = vadd.f32 %v2262, %v2478
    %2480 = vmatprep.mubr.f32.mxu0 0.0
    %2481 = vmatmul.mubr.f32.gmra.mxu0 %v2179
    %v2482 = vpop.f32.mrf.mxu0
    %v2483 = vadd.f32 %v2258, %v2482
    %v2484 = vpop.f32.mrf.mxu0
    %v2485 = vadd.f32 %v2262, %v2484
    %2486 = vmatprep.mubr.f32.mxu0 0.0
    %2487 = vmatmul.mubr.f32.gmra.mxu0 %v2180
    %v2488 = vpop.f32.mrf.mxu0
    %v2489 = vadd.f32 %v2258, %v2488
    %v2490 = vpop.f32.mrf.mxu0
    %v2491 = vadd.f32 %v2262, %v2490
    %2492 = vdwg.mxu0
    %2493 = vst [vmem:[#allocation3] sm:$0xff] %v2334
    %2494 = vst [vmem:[#allocation3 + $0x8] sm:$0xff] %v2336
    %2495 = vst [vmem:[#allocation3 + $0x10] sm:$0xff] %v2447
    %2496 = vst [vmem:[#allocation3 + $0x18] sm:$0xff] %v2449
    %2497 = vst [vmem:[#allocation3 + $0x20] sm:$0xff] %v2340
    %2498 = vst [vmem:[#allocation3 + $0x28] sm:$0xff] %v2342
    %2499 = vst [vmem:[#allocation3 + $0x30] sm:$0xff] %v2453
    %2500 = vst [vmem:[#allocation3 + $0x38] sm:$0xff] %v2455
    %2501 = vst [vmem:[#allocation3 + $0x40] sm:$0xff] %v2346
    %2502 = vst [vmem:[#allocation3 + $0x48] sm:$0xff] %v2348
    %2503 = vst [vmem:[#allocation3 + $0x50] sm:$0xff] %v2459
    %2504 = vst [vmem:[#allocation3 + $0x58] sm:$0xff] %v2461
    %2505 = vst [vmem:[#allocation3 + $0x60] sm:$0xff] %v2352
    %2506 = vst [vmem:[#allocation3 + $0x68] sm:$0xff] %v2354
    %2507 = vst [vmem:[#allocation3 + $0x70] sm:$0xff] %v2465
    %2508 = vst [vmem:[#allocation3 + $0x78] sm:$0xff] %v2467
    %2509 = vst [vmem:[#allocation3 + $0x80] sm:$0xff] %v2358
    %2510 = vst [vmem:[#allocation3 + $0x88] sm:$0xff] %v2360
    %2511 = vst [vmem:[#allocation3 + $0x90] sm:$0xff] %v2471
    %2512 = vst [vmem:[#allocation3 + $0x98] sm:$0xff] %v2473
    %2513 = vst [vmem:[#allocation3 + $0xa0] sm:$0xff] %v2364
    %2514 = vst [vmem:[#allocation3 + $0xa8] sm:$0xff] %v2366
    %2515 = vst [vmem:[#allocation3 + $0xb0] sm:$0xff] %v2477
    %2516 = vst [vmem:[#allocation3 + $0xb8] sm:$0xff] %v2479
    %2517 = vst [vmem:[#allocation3 + $0xc0] sm:$0xff] %v2370
    %2518 = vst [vmem:[#allocation3 + $0xc8] sm:$0xff] %v2372
    %2519 = vst [vmem:[#allocation3 + $0xd0] sm:$0xff] %v2483
    %2520 = vst [vmem:[#allocation3 + $0xd8] sm:$0xff] %v2485
    %2521 = vst [vmem:[#allocation3 + $0xe0] sm:$0xff] %v2376
    %2522 = vst [vmem:[#allocation3 + $0xe8] sm:$0xff] %v2378
    %2523 = vst [vmem:[#allocation3 + $0xf0] sm:$0xff] %v2489
    %2524 = vst [vmem:[#allocation3 + $0xf8] sm:$0xff] %v2491
    %v2525 = vld [vmem:[#allocation3] sm:$0xff]
    %v2526 = vld [vmem:[#allocation3 + $0x8] sm:$0xff]
    %v2527 = vld [vmem:[#allocation3 + $0x10] sm:$0xff]
    %v2528 = vld [vmem:[#allocation3 + $0x18] sm:$0xff]
    %v2529 = vld [vmem:[#allocation8] sm:$0xff]
    %v2530 = vld [vmem:[#allocation8 + $0x8] sm:$0xff]
    %v2531 = vld [vmem:[#allocation8 + $0x10] sm:$0xff]
    %v2532 = vld [vmem:[#allocation8 + $0x18] sm:$0xff]
    %v2533 = vld [vmem:[#allocation8 + $0x20] sm:$0xff]
    %v2534 = vld [vmem:[#allocation8 + $0x28] sm:$0xff]
    %v2535 = vld [vmem:[#allocation8 + $0x30] sm:$0xff]
    %v2536 = vld [vmem:[#allocation8 + $0x38] sm:$0xff]
    %v2537 = vld [vmem:[#allocation8 + $0x40] sm:$0xff]
    %v2538 = vld [vmem:[#allocation8 + $0x48] sm:$0xff]
    %v2539 = vld [vmem:[#allocation8 + $0x50] sm:$0xff]
    %v2540 = vld [vmem:[#allocation8 + $0x58] sm:$0xff]
    %v2541 = vld [vmem:[#allocation8 + $0x60] sm:$0xff]
    %v2542 = vld [vmem:[#allocation8 + $0x68] sm:$0xff]
    %v2543 = vld [vmem:[#allocation8 + $0x70] sm:$0xff]
    %v2544 = vld [vmem:[#allocation8 + $0x78] sm:$0xff]
    %v2545 = vld [vmem:[#allocation8 + $0x80] sm:$0xff]
    %v2546 = vld [vmem:[#allocation8 + $0x88] sm:$0xff]
    %v2547 = vld [vmem:[#allocation8 + $0x90] sm:$0xff]
    %v2548 = vld [vmem:[#allocation8 + $0x98] sm:$0xff]
    %v2549 = vld [vmem:[#allocation8 + $0xa0] sm:$0xff]
    %v2550 = vld [vmem:[#allocation8 + $0xa8] sm:$0xff]
    %v2551 = vld [vmem:[#allocation8 + $0xb0] sm:$0xff]
    %v2552 = vld [vmem:[#allocation8 + $0xb8] sm:$0xff]
    %v2553 = vld [vmem:[#allocation8 + $0xc0] sm:$0xff]
    %v2554 = vld [vmem:[#allocation8 + $0xc8] sm:$0xff]
    %v2555 = vld [vmem:[#allocation8 + $0xd0] sm:$0xff]
    %v2556 = vld [vmem:[#allocation8 + $0xd8] sm:$0xff]
    %v2557 = vld [vmem:[#allocation8 + $0xe0] sm:$0xff]
    %v2558 = vld [vmem:[#allocation8 + $0xe8] sm:$0xff]
    %v2559 = vld [vmem:[#allocation8 + $0xf0] sm:$0xff]
    %v2560 = vld [vmem:[#allocation8 + $0xf8] sm:$0xff]
    %v2561 = vld [vmem:[#allocation8 + $0x100] sm:$0xff]
    %v2562 = vld [vmem:[#allocation8 + $0x108] sm:$0xff]
    %v2563 = vld [vmem:[#allocation8 + $0x110] sm:$0xff]
    %v2564 = vld [vmem:[#allocation8 + $0x118] sm:$0xff]
    %v2565 = vld [vmem:[#allocation8 + $0x120] sm:$0xff]
    %v2566 = vld [vmem:[#allocation8 + $0x128] sm:$0xff]
    %v2567 = vld [vmem:[#allocation8 + $0x130] sm:$0xff]
    %v2568 = vld [vmem:[#allocation8 + $0x138] sm:$0xff]
    %v2569 = vld [vmem:[#allocation8 + $0x140] sm:$0xff]
    %v2570 = vld [vmem:[#allocation8 + $0x148] sm:$0xff]
    %v2571 = vld [vmem:[#allocation8 + $0x150] sm:$0xff]
    %v2572 = vld [vmem:[#allocation8 + $0x158] sm:$0xff]
    %v2573 = vld [vmem:[#allocation8 + $0x160] sm:$0xff]
    %v2574 = vld [vmem:[#allocation8 + $0x168] sm:$0xff]
    %v2575 = vld [vmem:[#allocation8 + $0x170] sm:$0xff]
    %v2576 = vld [vmem:[#allocation8 + $0x178] sm:$0xff]
    %v2577 = vld [vmem:[#allocation8 + $0x180] sm:$0xff]
    %v2578 = vld [vmem:[#allocation8 + $0x188] sm:$0xff]
    %v2579 = vld [vmem:[#allocation8 + $0x190] sm:$0xff]
    %v2580 = vld [vmem:[#allocation8 + $0x198] sm:$0xff]
    %v2581 = vld [vmem:[#allocation8 + $0x1a0] sm:$0xff]
    %v2582 = vld [vmem:[#allocation8 + $0x1a8] sm:$0xff]
    %v2583 = vld [vmem:[#allocation8 + $0x1b0] sm:$0xff]
    %v2584 = vld [vmem:[#allocation8 + $0x1b8] sm:$0xff]
    %v2585 = vld [vmem:[#allocation8 + $0x1c0] sm:$0xff]
    %v2586 = vld [vmem:[#allocation8 + $0x1c8] sm:$0xff]
    %v2587 = vld [vmem:[#allocation8 + $0x1d0] sm:$0xff]
    %v2588 = vld [vmem:[#allocation8 + $0x1d8] sm:$0xff]
    %v2589 = vld [vmem:[#allocation8 + $0x1e0] sm:$0xff]
    %v2590 = vld [vmem:[#allocation8 + $0x1e8] sm:$0xff]
    %v2591 = vld [vmem:[#allocation8 + $0x1f0] sm:$0xff]
    %v2592 = vld [vmem:[#allocation8 + $0x1f8] sm:$0xff]
    %2593 = vmatprep.subr.mxu0 %v2590
    %2594 = vmatpush1.msra.mxu0 %v2589
    %2595 = vmatprep.subr.mxu0 %v2586
    %2596 = vmatpush1.msra.mxu0 %v2585
    %2597 = vmatprep.subr.mxu0 %v2582
    %2598 = vmatpush1.msra.mxu0 %v2581
    %2599 = vmatprep.subr.mxu0 %v2578
    %2600 = vmatpush1.msra.mxu0 %v2577
    %2601 = vmatprep.subr.mxu0 %v2574
    %2602 = vmatpush1.msra.mxu0 %v2573
    %2603 = vmatprep.subr.mxu0 %v2570
    %2604 = vmatpush1.msra.mxu0 %v2569
    %2605 = vmatprep.subr.mxu0 %v2566
    %2606 = vmatpush1.msra.mxu0 %v2565
    %2607 = vmatprep.subr.mxu0 %v2562
    %2608 = vmatpush1.msra.mxu0 %v2561
    %2609 = vmatprep.subr.mxu0 %v2558
    %2610 = vmatpush1.msra.mxu0 %v2557
    %2611 = vmatprep.subr.mxu0 %v2554
    %2612 = vmatpush1.msra.mxu0 %v2553
    %2613 = vmatprep.subr.mxu0 %v2550
    %2614 = vmatpush1.msra.mxu0 %v2549
    %2615 = vmatprep.subr.mxu0 %v2546
    %2616 = vmatpush1.msra.mxu0 %v2545
    %2617 = vmatprep.subr.mxu0 %v2542
    %2618 = vmatpush1.msra.mxu0 %v2541
    %2619 = vmatprep.subr.mxu0 %v2538
    %2620 = vmatpush1.msra.mxu0 %v2537
    %2621 = vmatprep.subr.mxu0 %v2534
    %2622 = vmatpush1.msra.mxu0 %v2533
    %2623 = vmatprep.subr.mxu0 %v2530
    %2624 = vmatpush1.msra.mxu0 %v2529
    %2625 = vmatprep.subr.mxu0 0.0
    %2626 = vmatpush2.msra.mxu0 0.0
    %2627 = vmatprep.subr.mxu0 0.0
    %2628 = vmatpush2.msra.mxu0 0.0
    %2629 = vmatprep.subr.mxu0 0.0
    %2630 = vmatpush2.msra.mxu0 0.0
    %2631 = vmatprep.subr.mxu0 0.0
    %2632 = vmatpush2.msra.mxu0 0.0
    %2633 = vmatprep.subr.mxu0 0.0
    %2634 = vmatpush2.msra.mxu0 0.0
    %2635 = vmatprep.subr.mxu0 0.0
    %2636 = vmatpush2.msra.mxu0 0.0
    %2637 = vmatprep.subr.mxu0 0.0
    %2638 = vmatpush2.msra.mxu0 0.0
    %2639 = vmatprep.subr.mxu0 0.0
    %2640 = vmatpush2.msra.mxu0 0.0
    %2641 = vmatprep.subr.mxu0 0.0
    %2642 = vmatpush2.msra.mxu0 0.0
    %2643 = vmatprep.subr.mxu0 0.0
    %2644 = vmatpush2.msra.mxu0 0.0
    %2645 = vmatprep.subr.mxu0 0.0
    %2646 = vmatpush2.msra.mxu0 0.0
    %2647 = vmatprep.subr.mxu0 0.0
    %2648 = vmatpush2.msra.mxu0 0.0
    %2649 = vmatprep.subr.mxu0 0.0
    %2650 = vmatpush2.msra.mxu0 0.0
    %2651 = vmatprep.subr.mxu0 0.0
    %2652 = vmatpush2.msra.mxu0 0.0
    %2653 = vmatprep.subr.mxu0 0.0
    %2654 = vmatpush2.msra.mxu0 0.0
    %2655 = vmatprep.subr.mxu0 0.0
    %2656 = vmatpush2.msra.mxu0 0.0
    %2657 = vmatprep.mubr.f32.mxu0 0.0
    %2658 = vmatmul.mubr.f32.gmra.mxu0 0.0
    %v2659 = vpop.f32.mrf.mxu0
    %v2660 = vadd.f32 0.0, %v2659
    %v2661 = vpop.f32.mrf.mxu0
    %v2662 = vadd.f32 0.0, %v2661
    %2663 = vdwg.mxu0
    %2664 = vmatprep.subr.mxu0 %v2592
    %2665 = vmatpush1.msra.mxu0 %v2591
    %2666 = vmatprep.subr.mxu0 %v2588
    %2667 = vmatpush1.msra.mxu0 %v2587
    %2668 = vmatprep.subr.mxu0 %v2584
    %2669 = vmatpush1.msra.mxu0 %v2583
    %2670 = vmatprep.subr.mxu0 %v2580
    %2671 = vmatpush1.msra.mxu0 %v2579
    %2672 = vmatprep.subr.mxu0 %v2576
    %2673 = vmatpush1.msra.mxu0 %v2575
    %2674 = vmatprep.subr.mxu0 %v2572
    %2675 = vmatpush1.msra.mxu0 %v2571
    %2676 = vmatprep.subr.mxu0 %v2568
    %2677 = vmatpush1.msra.mxu0 %v2567
    %2678 = vmatprep.subr.mxu0 %v2564
    %2679 = vmatpush1.msra.mxu0 %v2563
    %2680 = vmatprep.subr.mxu0 %v2560
    %2681 = vmatpush1.msra.mxu0 %v2559
    %2682 = vmatprep.subr.mxu0 %v2556
    %2683 = vmatpush1.msra.mxu0 %v2555
    %2684 = vmatprep.subr.mxu0 %v2552
    %2685 = vmatpush1.msra.mxu0 %v2551
    %2686 = vmatprep.subr.mxu0 %v2548
    %2687 = vmatpush1.msra.mxu0 %v2547
    %2688 = vmatprep.subr.mxu0 %v2544
    %2689 = vmatpush1.msra.mxu0 %v2543
    %2690 = vmatprep.subr.mxu0 %v2540
    %2691 = vmatpush1.msra.mxu0 %v2539
    %2692 = vmatprep.subr.mxu0 %v2536
    %2693 = vmatpush1.msra.mxu0 %v2535
    %2694 = vmatprep.subr.mxu0 %v2532
    %2695 = vmatpush1.msra.mxu0 %v2531
    %2696 = vmatprep.subr.mxu0 0.0
    %2697 = vmatpush2.msra.mxu0 0.0
    %2698 = vmatprep.subr.mxu0 0.0
    %2699 = vmatpush2.msra.mxu0 0.0
    %2700 = vmatprep.subr.mxu0 0.0
    %2701 = vmatpush2.msra.mxu0 0.0
    %2702 = vmatprep.subr.mxu0 0.0
    %2703 = vmatpush2.msra.mxu0 0.0
    %2704 = vmatprep.subr.mxu0 0.0
    %2705 = vmatpush2.msra.mxu0 0.0
    %2706 = vmatprep.subr.mxu0 0.0
    %2707 = vmatpush2.msra.mxu0 0.0
    %2708 = vmatprep.subr.mxu0 0.0
    %2709 = vmatpush2.msra.mxu0 0.0
    %2710 = vmatprep.subr.mxu0 0.0
    %2711 = vmatpush2.msra.mxu0 0.0
    %2712 = vmatprep.subr.mxu0 0.0
    %2713 = vmatpush2.msra.mxu0 0.0
    %2714 = vmatprep.subr.mxu0 0.0
    %2715 = vmatpush2.msra.mxu0 0.0
    %2716 = vmatprep.subr.mxu0 0.0
    %2717 = vmatpush2.msra.mxu0 0.0
    %2718 = vmatprep.subr.mxu0 0.0
    %2719 = vmatpush2.msra.mxu0 0.0
    %2720 = vmatprep.subr.mxu0 0.0
    %2721 = vmatpush2.msra.mxu0 0.0
    %2722 = vmatprep.subr.mxu0 0.0
    %2723 = vmatpush2.msra.mxu0 0.0
    %2724 = vmatprep.subr.mxu0 0.0
    %2725 = vmatpush2.msra.mxu0 0.0
    %2726 = vmatprep.subr.mxu0 0.0
    %2727 = vmatpush2.msra.mxu0 0.0
    %2728 = vmatprep.mubr.f32.mxu0 0.0
    %2729 = vmatmul.mubr.f32.gmra.mxu0 0.0
    %v2730 = vpop.f32.mrf.mxu0
    %v2731 = vadd.f32 0.0, %v2730
    %v2732 = vpop.f32.mrf.mxu0
    %v2733 = vadd.f32 0.0, %v2732
    %2734 = vdwg.mxu0
    %v2735 = vadd.f32 %v2525, %v2660
    %v2736 = vadd.f32 %v2526, %v2662
    %v2737 = vadd.f32 %v2527, %v2731
    %v2738 = vadd.f32 %v2528, %v2733
    %v2739 = vxor.u32 %v2735, 2147483648
    %v2740 = vmul.f32 %v2739, 1.442695
    %v2741 = vpow.pop %v2740
    %v2742 = vadd.f32 %v2741, 1.0
    %v2743 = vrcp.pop %v2742
    %v2744 = vmul.f32 1.0, %v2743
    %v2745 = vxor.u32 %v2736, 2147483648
    %v2746 = vmul.f32 %v2745, 1.442695
    %v2747 = vpow.pop %v2746
    %v2748 = vadd.f32 %v2747, 1.0
    %v2749 = vrcp.pop %v2748
    %v2750 = vmul.f32 1.0, %v2749
    %v2751 = vtanh.pop %v2737
    %v2752 = vxor.u32 %v2738, 2147483648
    %v2753 = vmul.f32 %v2752, 1.442695
    %v2754 = vpow.pop %v2753
    %v2755 = vadd.f32 %v2754, 1.0
    %v2756 = vrcp.pop %v2755
    %v2757 = vmul.f32 1.0, %v2756
    %v2758 = vmul.f32 %v2750, 0.0
    %v2759 = vmul.f32 %v2744, %v2751
    %v2760 = vadd.f32 %v2758, %v2759
    %v2761 = vtanh.pop %v2760
    %v2762 = vmul.f32 %v2757, %v2761
    %v2763 = vld [vmem:[#allocation3 + $0x20] sm:$0xff]
    %v2764 = vld [vmem:[#allocation3 + $0x28] sm:$0xff]
    %v2765 = vld [vmem:[#allocation3 + $0x30] sm:$0xff]
    %v2766 = vld [vmem:[#allocation3 + $0x38] sm:$0xff]
    %2767 = vmatprep.subr.mxu0 %v2590
    %2768 = vmatpush1.msra.mxu0 %v2589
    %2769 = vmatprep.subr.mxu0 %v2586
    %2770 = vmatpush1.msra.mxu0 %v2585
    %2771 = vmatprep.subr.mxu0 %v2582
    %2772 = vmatpush1.msra.mxu0 %v2581
    %2773 = vmatprep.subr.mxu0 %v2578
    %2774 = vmatpush1.msra.mxu0 %v2577
    %2775 = vmatprep.subr.mxu0 %v2574
    %2776 = vmatpush1.msra.mxu0 %v2573
    %2777 = vmatprep.subr.mxu0 %v2570
    %2778 = vmatpush1.msra.mxu0 %v2569
    %2779 = vmatprep.subr.mxu0 %v2566
    %2780 = vmatpush1.msra.mxu0 %v2565
    %2781 = vmatprep.subr.mxu0 %v2562
    %2782 = vmatpush1.msra.mxu0 %v2561
    %2783 = vmatprep.subr.mxu0 %v2558
    %2784 = vmatpush1.msra.mxu0 %v2557
    %2785 = vmatprep.subr.mxu0 %v2554
    %2786 = vmatpush1.msra.mxu0 %v2553
    %2787 = vmatprep.subr.mxu0 %v2550
    %2788 = vmatpush1.msra.mxu0 %v2549
    %2789 = vmatprep.subr.mxu0 %v2546
    %2790 = vmatpush1.msra.mxu0 %v2545
    %2791 = vmatprep.subr.mxu0 %v2542
    %2792 = vmatpush1.msra.mxu0 %v2541
    %2793 = vmatprep.subr.mxu0 %v2538
    %2794 = vmatpush1.msra.mxu0 %v2537
    %2795 = vmatprep.subr.mxu0 %v2534
    %2796 = vmatpush1.msra.mxu0 %v2533
    %2797 = vmatprep.subr.mxu0 %v2530
    %2798 = vmatpush1.msra.mxu0 %v2529
    %2799 = vmatprep.subr.mxu0 0.0
    %2800 = vmatpush2.msra.mxu0 0.0
    %2801 = vmatprep.subr.mxu0 0.0
    %2802 = vmatpush2.msra.mxu0 0.0
    %2803 = vmatprep.subr.mxu0 0.0
    %2804 = vmatpush2.msra.mxu0 0.0
    %2805 = vmatprep.subr.mxu0 0.0
    %2806 = vmatpush2.msra.mxu0 0.0
    %2807 = vmatprep.subr.mxu0 0.0
    %2808 = vmatpush2.msra.mxu0 0.0
    %2809 = vmatprep.subr.mxu0 0.0
    %2810 = vmatpush2.msra.mxu0 0.0
    %2811 = vmatprep.subr.mxu0 0.0
    %2812 = vmatpush2.msra.mxu0 0.0
    %2813 = vmatprep.subr.mxu0 0.0
    %2814 = vmatpush2.msra.mxu0 0.0
    %2815 = vmatprep.subr.mxu0 0.0
    %2816 = vmatpush2.msra.mxu0 0.0
    %2817 = vmatprep.subr.mxu0 0.0
    %2818 = vmatpush2.msra.mxu0 0.0
    %2819 = vmatprep.subr.mxu0 0.0
    %2820 = vmatpush2.msra.mxu0 0.0
    %2821 = vmatprep.subr.mxu0 0.0
    %2822 = vmatpush2.msra.mxu0 0.0
    %2823 = vmatprep.subr.mxu0 0.0
    %2824 = vmatpush2.msra.mxu0 0.0
    %2825 = vmatprep.subr.mxu0 0.0
    %2826 = vmatpush2.msra.mxu0 0.0
    %2827 = vmatprep.subr.mxu0 0.0
    %2828 = vmatpush2.msra.mxu0 0.0
    %2829 = vmatprep.subr.mxu0 0.0
    %2830 = vmatpush2.msra.mxu0 0.0
    %2831 = vmatprep.mubr.f32.mxu0 0.0
    %2832 = vmatmul.mubr.f32.gmra.mxu0 %v2762
    %v2833 = vpop.f32.mrf.mxu0
    %v2834 = vadd.f32 0.0, %v2833
    %v2835 = vpop.f32.mrf.mxu0
    %v2836 = vadd.f32 0.0, %v2835
    %2837 = vdwg.mxu0
    %2838 = vmatprep.subr.mxu0 %v2592
    %2839 = vmatpush1.msra.mxu0 %v2591
    %2840 = vmatprep.subr.mxu0 %v2588
    %2841 = vmatpush1.msra.mxu0 %v2587
    %2842 = vmatprep.subr.mxu0 %v2584
    %2843 = vmatpush1.msra.mxu0 %v2583
    %2844 = vmatprep.subr.mxu0 %v2580
    %2845 = vmatpush1.msra.mxu0 %v2579
    %2846 = vmatprep.subr.mxu0 %v2576
    %2847 = vmatpush1.msra.mxu0 %v2575
    %2848 = vmatprep.subr.mxu0 %v2572
    %2849 = vmatpush1.msra.mxu0 %v2571
    %2850 = vmatprep.subr.mxu0 %v2568
    %2851 = vmatpush1.msra.mxu0 %v2567
    %2852 = vmatprep.subr.mxu0 %v2564
    %2853 = vmatpush1.msra.mxu0 %v2563
    %2854 = vmatprep.subr.mxu0 %v2560
    %2855 = vmatpush1.msra.mxu0 %v2559
    %2856 = vmatprep.subr.mxu0 %v2556
    %2857 = vmatpush1.msra.mxu0 %v2555
    %2858 = vmatprep.subr.mxu0 %v2552
    %2859 = vmatpush1.msra.mxu0 %v2551
    %2860 = vmatprep.subr.mxu0 %v2548
    %2861 = vmatpush1.msra.mxu0 %v2547
    %2862 = vmatprep.subr.mxu0 %v2544
    %2863 = vmatpush1.msra.mxu0 %v2543
    %2864 = vmatprep.subr.mxu0 %v2540
    %2865 = vmatpush1.msra.mxu0 %v2539
    %2866 = vmatprep.subr.mxu0 %v2536
    %2867 = vmatpush1.msra.mxu0 %v2535
    %2868 = vmatprep.subr.mxu0 %v2532
    %2869 = vmatpush1.msra.mxu0 %v2531
    %2870 = vmatprep.subr.mxu0 0.0
    %2871 = vmatpush2.msra.mxu0 0.0
    %2872 = vmatprep.subr.mxu0 0.0
    %2873 = vmatpush2.msra.mxu0 0.0
    %2874 = vmatprep.subr.mxu0 0.0
    %2875 = vmatpush2.msra.mxu0 0.0
    %2876 = vmatprep.subr.mxu0 0.0
    %2877 = vmatpush2.msra.mxu0 0.0
    %2878 = vmatprep.subr.mxu0 0.0
    %2879 = vmatpush2.msra.mxu0 0.0
    %2880 = vmatprep.subr.mxu0 0.0
    %2881 = vmatpush2.msra.mxu0 0.0
    %2882 = vmatprep.subr.mxu0 0.0
    %2883 = vmatpush2.msra.mxu0 0.0
    %2884 = vmatprep.subr.mxu0 0.0
    %2885 = vmatpush2.msra.mxu0 0.0
    %2886 = vmatprep.subr.mxu0 0.0
    %2887 = vmatpush2.msra.mxu0 0.0
    %2888 = vmatprep.subr.mxu0 0.0
    %2889 = vmatpush2.msra.mxu0 0.0
    %2890 = vmatprep.subr.mxu0 0.0
    %2891 = vmatpush2.msra.mxu0 0.0
    %2892 = vmatprep.subr.mxu0 0.0
    %2893 = vmatpush2.msra.mxu0 0.0
    %2894 = vmatprep.subr.mxu0 0.0
    %2895 = vmatpush2.msra.mxu0 0.0
    %2896 = vmatprep.subr.mxu0 0.0
    %2897 = vmatpush2.msra.mxu0 0.0
    %2898 = vmatprep.subr.mxu0 0.0
    %2899 = vmatpush2.msra.mxu0 0.0
    %2900 = vmatprep.subr.mxu0 0.0
    %2901 = vmatpush2.msra.mxu0 0.0
    %2902 = vmatprep.mubr.f32.mxu0 0.0
    %2903 = vmatmul.mubr.f32.gmra.mxu0 %v2762
    %v2904 = vpop.f32.mrf.mxu0
    %v2905 = vadd.f32 0.0, %v2904
    %v2906 = vpop.f32.mrf.mxu0
    %v2907 = vadd.f32 0.0, %v2906
    %2908 = vdwg.mxu0
    %v2909 = vadd.f32 %v2763, %v2834
    %v2910 = vadd.f32 %v2764, %v2836
    %v2911 = vadd.f32 %v2765, %v2905
    %v2912 = vadd.f32 %v2766, %v2907
    %v2913 = vxor.u32 %v2909, 2147483648
    %v2914 = vmul.f32 %v2913, 1.442695
    %v2915 = vpow.pop %v2914
    %v2916 = vadd.f32 %v2915, 1.0
    %v2917 = vrcp.pop %v2916
    %v2918 = vmul.f32 1.0, %v2917
    %v2919 = vxor.u32 %v2910, 2147483648
    %v2920 = vmul.f32 %v2919, 1.442695
    %v2921 = vpow.pop %v2920
    %v2922 = vadd.f32 %v2921, 1.0
    %v2923 = vrcp.pop %v2922
    %v2924 = vmul.f32 1.0, %v2923
    %v2925 = vtanh.pop %v2911
    %v2926 = vxor.u32 %v2912, 2147483648
    %v2927 = vmul.f32 %v2926, 1.442695
    %v2928 = vpow.pop %v2927
    %v2929 = vadd.f32 %v2928, 1.0
    %v2930 = vrcp.pop %v2929
    %v2931 = vmul.f32 1.0, %v2930
    %v2932 = vmul.f32 %v2924, %v2760
    %v2933 = vmul.f32 %v2918, %v2925
    %v2934 = vadd.f32 %v2932, %v2933
    %v2935 = vtanh.pop %v2934
    %v2936 = vmul.f32 %v2931, %v2935
    %v2937 = vld [vmem:[#allocation3 + $0x40] sm:$0xff]
    %v2938 = vld [vmem:[#allocation3 + $0x48] sm:$0xff]
    %v2939 = vld [vmem:[#allocation3 + $0x50] sm:$0xff]
    %v2940 = vld [vmem:[#allocation3 + $0x58] sm:$0xff]
    %2941 = vmatprep.subr.mxu0 %v2590
    %2942 = vmatpush1.msra.mxu0 %v2589
    %2943 = vmatprep.subr.mxu0 %v2586
    %2944 = vmatpush1.msra.mxu0 %v2585
    %2945 = vmatprep.subr.mxu0 %v2582
    %2946 = vmatpush1.msra.mxu0 %v2581
    %2947 = vmatprep.subr.mxu0 %v2578
    %2948 = vmatpush1.msra.mxu0 %v2577
    %2949 = vmatprep.subr.mxu0 %v2574
    %2950 = vmatpush1.msra.mxu0 %v2573
    %2951 = vmatprep.subr.mxu0 %v2570
    %2952 = vmatpush1.msra.mxu0 %v2569
    %2953 = vmatprep.subr.mxu0 %v2566
    %2954 = vmatpush1.msra.mxu0 %v2565
    %2955 = vmatprep.subr.mxu0 %v2562
    %2956 = vmatpush1.msra.mxu0 %v2561
    %2957 = vmatprep.subr.mxu0 %v2558
    %2958 = vmatpush1.msra.mxu0 %v2557
    %2959 = vmatprep.subr.mxu0 %v2554
    %2960 = vmatpush1.msra.mxu0 %v2553
    %2961 = vmatprep.subr.mxu0 %v2550
    %2962 = vmatpush1.msra.mxu0 %v2549
    %2963 = vmatprep.subr.mxu0 %v2546
    %2964 = vmatpush1.msra.mxu0 %v2545
    %2965 = vmatprep.subr.mxu0 %v2542
    %2966 = vmatpush1.msra.mxu0 %v2541
    %2967 = vmatprep.subr.mxu0 %v2538
    %2968 = vmatpush1.msra.mxu0 %v2537
    %2969 = vmatprep.subr.mxu0 %v2534
    %2970 = vmatpush1.msra.mxu0 %v2533
    %2971 = vmatprep.subr.mxu0 %v2530
    %2972 = vmatpush1.msra.mxu0 %v2529
    %2973 = vmatprep.subr.mxu0 0.0
    %2974 = vmatpush2.msra.mxu0 0.0
    %2975 = vmatprep.subr.mxu0 0.0
    %2976 = vmatpush2.msra.mxu0 0.0
    %2977 = vmatprep.subr.mxu0 0.0
    %2978 = vmatpush2.msra.mxu0 0.0
    %2979 = vmatprep.subr.mxu0 0.0
    %2980 = vmatpush2.msra.mxu0 0.0
    %2981 = vmatprep.subr.mxu0 0.0
    %2982 = vmatpush2.msra.mxu0 0.0
    %2983 = vmatprep.subr.mxu0 0.0
    %2984 = vmatpush2.msra.mxu0 0.0
    %2985 = vmatprep.subr.mxu0 0.0
    %2986 = vmatpush2.msra.mxu0 0.0
    %2987 = vmatprep.subr.mxu0 0.0
    %2988 = vmatpush2.msra.mxu0 0.0
    %2989 = vmatprep.subr.mxu0 0.0
    %2990 = vmatpush2.msra.mxu0 0.0
    %2991 = vmatprep.subr.mxu0 0.0
    %2992 = vmatpush2.msra.mxu0 0.0
    %2993 = vmatprep.subr.mxu0 0.0
    %2994 = vmatpush2.msra.mxu0 0.0
    %2995 = vmatprep.subr.mxu0 0.0
    %2996 = vmatpush2.msra.mxu0 0.0
    %2997 = vmatprep.subr.mxu0 0.0
    %2998 = vmatpush2.msra.mxu0 0.0
    %2999 = vmatprep.subr.mxu0 0.0
    %3000 = vmatpush2.msra.mxu0 0.0
    %3001 = vmatprep.subr.mxu0 0.0
    %3002 = vmatpush2.msra.mxu0 0.0
    %3003 = vmatprep.subr.mxu0 0.0
    %3004 = vmatpush2.msra.mxu0 0.0
    %3005 = vmatprep.mubr.f32.mxu0 0.0
    %3006 = vmatmul.mubr.f32.gmra.mxu0 %v2936
    %v3007 = vpop.f32.mrf.mxu0
    %v3008 = vadd.f32 0.0, %v3007
    %v3009 = vpop.f32.mrf.mxu0
    %v3010 = vadd.f32 0.0, %v3009
    %3011 = vdwg.mxu0
    %3012 = vmatprep.subr.mxu0 %v2592
    %3013 = vmatpush1.msra.mxu0 %v2591
    %3014 = vmatprep.subr.mxu0 %v2588
    %3015 = vmatpush1.msra.mxu0 %v2587
    %3016 = vmatprep.subr.mxu0 %v2584
    %3017 = vmatpush1.msra.mxu0 %v2583
    %3018 = vmatprep.subr.mxu0 %v2580
    %3019 = vmatpush1.msra.mxu0 %v2579
    %3020 = vmatprep.subr.mxu0 %v2576
    %3021 = vmatpush1.msra.mxu0 %v2575
    %3022 = vmatprep.subr.mxu0 %v2572
    %3023 = vmatpush1.msra.mxu0 %v2571
    %3024 = vmatprep.subr.mxu0 %v2568
    %3025 = vmatpush1.msra.mxu0 %v2567
    %3026 = vmatprep.subr.mxu0 %v2564
    %3027 = vmatpush1.msra.mxu0 %v2563
    %3028 = vmatprep.subr.mxu0 %v2560
    %3029 = vmatpush1.msra.mxu0 %v2559
    %3030 = vmatprep.subr.mxu0 %v2556
    %3031 = vmatpush1.msra.mxu0 %v2555
    %3032 = vmatprep.subr.mxu0 %v2552
    %3033 = vmatpush1.msra.mxu0 %v2551
    %3034 = vmatprep.subr.mxu0 %v2548
    %3035 = vmatpush1.msra.mxu0 %v2547
    %3036 = vmatprep.subr.mxu0 %v2544
    %3037 = vmatpush1.msra.mxu0 %v2543
    %3038 = vmatprep.subr.mxu0 %v2540
    %3039 = vmatpush1.msra.mxu0 %v2539
    %3040 = vmatprep.subr.mxu0 %v2536
    %3041 = vmatpush1.msra.mxu0 %v2535
    %3042 = vmatprep.subr.mxu0 %v2532
    %3043 = vmatpush1.msra.mxu0 %v2531
    %3044 = vmatprep.subr.mxu0 0.0
    %3045 = vmatpush2.msra.mxu0 0.0
    %3046 = vmatprep.subr.mxu0 0.0
    %3047 = vmatpush2.msra.mxu0 0.0
    %3048 = vmatprep.subr.mxu0 0.0
    %3049 = vmatpush2.msra.mxu0 0.0
    %3050 = vmatprep.subr.mxu0 0.0
    %3051 = vmatpush2.msra.mxu0 0.0
    %3052 = vmatprep.subr.mxu0 0.0
    %3053 = vmatpush2.msra.mxu0 0.0
    %3054 = vmatprep.subr.mxu0 0.0
    %3055 = vmatpush2.msra.mxu0 0.0
    %3056 = vmatprep.subr.mxu0 0.0
    %3057 = vmatpush2.msra.mxu0 0.0
    %3058 = vmatprep.subr.mxu0 0.0
    %3059 = vmatpush2.msra.mxu0 0.0
    %3060 = vmatprep.subr.mxu0 0.0
    %3061 = vmatpush2.msra.mxu0 0.0
    %3062 = vmatprep.subr.mxu0 0.0
    %3063 = vmatpush2.msra.mxu0 0.0
    %3064 = vmatprep.subr.mxu0 0.0
    %3065 = vmatpush2.msra.mxu0 0.0
    %3066 = vmatprep.subr.mxu0 0.0
    %3067 = vmatpush2.msra.mxu0 0.0
    %3068 = vmatprep.subr.mxu0 0.0
    %3069 = vmatpush2.msra.mxu0 0.0
    %3070 = vmatprep.subr.mxu0 0.0
    %3071 = vmatpush2.msra.mxu0 0.0
    %3072 = vmatprep.subr.mxu0 0.0
    %3073 = vmatpush2.msra.mxu0 0.0
    %3074 = vmatprep.subr.mxu0 0.0
    %3075 = vmatpush2.msra.mxu0 0.0
    %3076 = vmatprep.mubr.f32.mxu0 0.0
    %3077 = vmatmul.mubr.f32.gmra.mxu0 %v2936
    %v3078 = vpop.f32.mrf.mxu0
    %v3079 = vadd.f32 0.0, %v3078
    %v3080 = vpop.f32.mrf.mxu0
    %v3081 = vadd.f32 0.0, %v3080
    %3082 = vdwg.mxu0
    %v3083 = vadd.f32 %v2937, %v3008
    %v3084 = vadd.f32 %v2938, %v3010
    %v3085 = vadd.f32 %v2939, %v3079
    %v3086 = vadd.f32 %v2940, %v3081
    %v3087 = vxor.u32 %v3083, 2147483648
    %v3088 = vmul.f32 %v3087, 1.442695
    %v3089 = vpow.pop %v3088
    %v3090 = vadd.f32 %v3089, 1.0
    %v3091 = vrcp.pop %v3090
    %v3092 = vmul.f32 1.0, %v3091
    %v3093 = vxor.u32 %v3084, 2147483648
    %v3094 = vmul.f32 %v3093, 1.442695
    %v3095 = vpow.pop %v3094
    %v3096 = vadd.f32 %v3095, 1.0
    %v3097 = vrcp.pop %v3096
    %v3098 = vmul.f32 1.0, %v3097
    %v3099 = vtanh.pop %v3085
    %v3100 = vxor.u32 %v3086, 2147483648
    %v3101 = vmul.f32 %v3100, 1.442695
    %v3102 = vpow.pop %v3101
    %v3103 = vadd.f32 %v3102, 1.0
    %v3104 = vrcp.pop %v3103
    %v3105 = vmul.f32 1.0, %v3104
    %v3106 = vmul.f32 %v3098, %v2934
    %v3107 = vmul.f32 %v3092, %v3099
    %v3108 = vadd.f32 %v3106, %v3107
    %v3109 = vtanh.pop %v3108
    %v3110 = vmul.f32 %v3105, %v3109
    %v3111 = vld [vmem:[#allocation3 + $0x60] sm:$0xff]
    %v3112 = vld [vmem:[#allocation3 + $0x68] sm:$0xff]
    %v3113 = vld [vmem:[#allocation3 + $0x70] sm:$0xff]
    %v3114 = vld [vmem:[#allocation3 + $0x78] sm:$0xff]
    %3115 = vmatprep.subr.mxu0 %v2590
    %3116 = vmatpush1.msra.mxu0 %v2589
    %3117 = vmatprep.subr.mxu0 %v2586
    %3118 = vmatpush1.msra.mxu0 %v2585
    %3119 = vmatprep.subr.mxu0 %v2582
    %3120 = vmatpush1.msra.mxu0 %v2581
    %3121 = vmatprep.subr.mxu0 %v2578
    %3122 = vmatpush1.msra.mxu0 %v2577
    %3123 = vmatprep.subr.mxu0 %v2574
    %3124 = vmatpush1.msra.mxu0 %v2573
    %3125 = vmatprep.subr.mxu0 %v2570
    %3126 = vmatpush1.msra.mxu0 %v2569
    %3127 = vmatprep.subr.mxu0 %v2566
    %3128 = vmatpush1.msra.mxu0 %v2565
    %3129 = vmatprep.subr.mxu0 %v2562
    %3130 = vmatpush1.msra.mxu0 %v2561
    %3131 = vmatprep.subr.mxu0 %v2558
    %3132 = vmatpush1.msra.mxu0 %v2557
    %3133 = vmatprep.subr.mxu0 %v2554
    %3134 = vmatpush1.msra.mxu0 %v2553
    %3135 = vmatprep.subr.mxu0 %v2550
    %3136 = vmatpush1.msra.mxu0 %v2549
    %3137 = vmatprep.subr.mxu0 %v2546
    %3138 = vmatpush1.msra.mxu0 %v2545
    %3139 = vmatprep.subr.mxu0 %v2542
    %3140 = vmatpush1.msra.mxu0 %v2541
    %3141 = vmatprep.subr.mxu0 %v2538
    %3142 = vmatpush1.msra.mxu0 %v2537
    %3143 = vmatprep.subr.mxu0 %v2534
    %3144 = vmatpush1.msra.mxu0 %v2533
    %3145 = vmatprep.subr.mxu0 %v2530
    %3146 = vmatpush1.msra.mxu0 %v2529
    %3147 = vmatprep.subr.mxu0 0.0
    %3148 = vmatpush2.msra.mxu0 0.0
    %3149 = vmatprep.subr.mxu0 0.0
    %3150 = vmatpush2.msra.mxu0 0.0
    %3151 = vmatprep.subr.mxu0 0.0
    %3152 = vmatpush2.msra.mxu0 0.0
    %3153 = vmatprep.subr.mxu0 0.0
    %3154 = vmatpush2.msra.mxu0 0.0
    %3155 = vmatprep.subr.mxu0 0.0
    %3156 = vmatpush2.msra.mxu0 0.0
    %3157 = vmatprep.subr.mxu0 0.0
    %3158 = vmatpush2.msra.mxu0 0.0
    %3159 = vmatprep.subr.mxu0 0.0
    %3160 = vmatpush2.msra.mxu0 0.0
    %3161 = vmatprep.subr.mxu0 0.0
    %3162 = vmatpush2.msra.mxu0 0.0
    %3163 = vmatprep.subr.mxu0 0.0
    %3164 = vmatpush2.msra.mxu0 0.0
    %3165 = vmatprep.subr.mxu0 0.0
    %3166 = vmatpush2.msra.mxu0 0.0
    %3167 = vmatprep.subr.mxu0 0.0
    %3168 = vmatpush2.msra.mxu0 0.0
    %3169 = vmatprep.subr.mxu0 0.0
    %3170 = vmatpush2.msra.mxu0 0.0
    %3171 = vmatprep.subr.mxu0 0.0
    %3172 = vmatpush2.msra.mxu0 0.0
    %3173 = vmatprep.subr.mxu0 0.0
    %3174 = vmatpush2.msra.mxu0 0.0
    %3175 = vmatprep.subr.mxu0 0.0
    %3176 = vmatpush2.msra.mxu0 0.0
    %3177 = vmatprep.subr.mxu0 0.0
    %3178 = vmatpush2.msra.mxu0 0.0
    %3179 = vmatprep.mubr.f32.mxu0 0.0
    %3180 = vmatmul.mubr.f32.gmra.mxu0 %v3110
    %v3181 = vpop.f32.mrf.mxu0
    %v3182 = vadd.f32 0.0, %v3181
    %v3183 = vpop.f32.mrf.mxu0
    %v3184 = vadd.f32 0.0, %v3183
    %3185 = vdwg.mxu0
    %3186 = vmatprep.subr.mxu0 %v2592
    %3187 = vmatpush1.msra.mxu0 %v2591
    %3188 = vmatprep.subr.mxu0 %v2588
    %3189 = vmatpush1.msra.mxu0 %v2587
    %3190 = vmatprep.subr.mxu0 %v2584
    %3191 = vmatpush1.msra.mxu0 %v2583
    %3192 = vmatprep.subr.mxu0 %v2580
    %3193 = vmatpush1.msra.mxu0 %v2579
    %3194 = vmatprep.subr.mxu0 %v2576
    %3195 = vmatpush1.msra.mxu0 %v2575
    %3196 = vmatprep.subr.mxu0 %v2572
    %3197 = vmatpush1.msra.mxu0 %v2571
    %3198 = vmatprep.subr.mxu0 %v2568
    %3199 = vmatpush1.msra.mxu0 %v2567
    %3200 = vmatprep.subr.mxu0 %v2564
    %3201 = vmatpush1.msra.mxu0 %v2563
    %3202 = vmatprep.subr.mxu0 %v2560
    %3203 = vmatpush1.msra.mxu0 %v2559
    %3204 = vmatprep.subr.mxu0 %v2556
    %3205 = vmatpush1.msra.mxu0 %v2555
    %3206 = vmatprep.subr.mxu0 %v2552
    %3207 = vmatpush1.msra.mxu0 %v2551
    %3208 = vmatprep.subr.mxu0 %v2548
    %3209 = vmatpush1.msra.mxu0 %v2547
    %3210 = vmatprep.subr.mxu0 %v2544
    %3211 = vmatpush1.msra.mxu0 %v2543
    %3212 = vmatprep.subr.mxu0 %v2540
    %3213 = vmatpush1.msra.mxu0 %v2539
    %3214 = vmatprep.subr.mxu0 %v2536
    %3215 = vmatpush1.msra.mxu0 %v2535
    %3216 = vmatprep.subr.mxu0 %v2532
    %3217 = vmatpush1.msra.mxu0 %v2531
    %3218 = vmatprep.subr.mxu0 0.0
    %3219 = vmatpush2.msra.mxu0 0.0
    %3220 = vmatprep.subr.mxu0 0.0
    %3221 = vmatpush2.msra.mxu0 0.0
    %3222 = vmatprep.subr.mxu0 0.0
    %3223 = vmatpush2.msra.mxu0 0.0
    %3224 = vmatprep.subr.mxu0 0.0
    %3225 = vmatpush2.msra.mxu0 0.0
    %3226 = vmatprep.subr.mxu0 0.0
    %3227 = vmatpush2.msra.mxu0 0.0
    %3228 = vmatprep.subr.mxu0 0.0
    %3229 = vmatpush2.msra.mxu0 0.0
    %3230 = vmatprep.subr.mxu0 0.0
    %3231 = vmatpush2.msra.mxu0 0.0
    %3232 = vmatprep.subr.mxu0 0.0
    %3233 = vmatpush2.msra.mxu0 0.0
    %3234 = vmatprep.subr.mxu0 0.0
    %3235 = vmatpush2.msra.mxu0 0.0
    %3236 = vmatprep.subr.mxu0 0.0
    %3237 = vmatpush2.msra.mxu0 0.0
    %3238 = vmatprep.subr.mxu0 0.0
    %3239 = vmatpush2.msra.mxu0 0.0
    %3240 = vmatprep.subr.mxu0 0.0
    %3241 = vmatpush2.msra.mxu0 0.0
    %3242 = vmatprep.subr.mxu0 0.0
    %3243 = vmatpush2.msra.mxu0 0.0
    %3244 = vmatprep.subr.mxu0 0.0
    %3245 = vmatpush2.msra.mxu0 0.0
    %3246 = vmatprep.subr.mxu0 0.0
    %3247 = vmatpush2.msra.mxu0 0.0
    %3248 = vmatprep.subr.mxu0 0.0
    %3249 = vmatpush2.msra.mxu0 0.0
    %3250 = vmatprep.mubr.f32.mxu0 0.0
    %3251 = vmatmul.mubr.f32.gmra.mxu0 %v3110
    %v3252 = vpop.f32.mrf.mxu0
    %v3253 = vadd.f32 0.0, %v3252
    %v3254 = vpop.f32.mrf.mxu0
    %v3255 = vadd.f32 0.0, %v3254
    %3256 = vdwg.mxu0
    %v3257 = vadd.f32 %v3111, %v3182
    %v3258 = vadd.f32 %v3112, %v3184
    %v3259 = vadd.f32 %v3113, %v3253
    %v3260 = vadd.f32 %v3114, %v3255
    %v3261 = vxor.u32 %v3257, 2147483648
    %v3262 = vmul.f32 %v3261, 1.442695
    %v3263 = vpow.pop %v3262
    %v3264 = vadd.f32 %v3263, 1.0
    %v3265 = vrcp.pop %v3264
    %v3266 = vmul.f32 1.0, %v3265
    %v3267 = vxor.u32 %v3258, 2147483648
    %v3268 = vmul.f32 %v3267, 1.442695
    %v3269 = vpow.pop %v3268
    %v3270 = vadd.f32 %v3269, 1.0
    %v3271 = vrcp.pop %v3270
    %v3272 = vmul.f32 1.0, %v3271
    %v3273 = vtanh.pop %v3259
    %v3274 = vxor.u32 %v3260, 2147483648
    %v3275 = vmul.f32 %v3274, 1.442695
    %v3276 = vpow.pop %v3275
    %v3277 = vadd.f32 %v3276, 1.0
    %v3278 = vrcp.pop %v3277
    %v3279 = vmul.f32 1.0, %v3278
    %v3280 = vmul.f32 %v3272, %v3108
    %v3281 = vmul.f32 %v3266, %v3273
    %v3282 = vadd.f32 %v3280, %v3281
    %v3283 = vtanh.pop %v3282
    %v3284 = vmul.f32 %v3279, %v3283
    %v3285 = vld [vmem:[#allocation3 + $0x80] sm:$0xff]
    %v3286 = vld [vmem:[#allocation3 + $0x88] sm:$0xff]
    %v3287 = vld [vmem:[#allocation3 + $0x90] sm:$0xff]
    %v3288 = vld [vmem:[#allocation3 + $0x98] sm:$0xff]
    %3289 = vmatprep.subr.mxu0 %v2590
    %3290 = vmatpush1.msra.mxu0 %v2589
    %3291 = vmatprep.subr.mxu0 %v2586
    %3292 = vmatpush1.msra.mxu0 %v2585
    %3293 = vmatprep.subr.mxu0 %v2582
    %3294 = vmatpush1.msra.mxu0 %v2581
    %3295 = vmatprep.subr.mxu0 %v2578
    %3296 = vmatpush1.msra.mxu0 %v2577
    %3297 = vmatprep.subr.mxu0 %v2574
    %3298 = vmatpush1.msra.mxu0 %v2573
    %3299 = vmatprep.subr.mxu0 %v2570
    %3300 = vmatpush1.msra.mxu0 %v2569
    %3301 = vmatprep.subr.mxu0 %v2566
    %3302 = vmatpush1.msra.mxu0 %v2565
    %3303 = vmatprep.subr.mxu0 %v2562
    %3304 = vmatpush1.msra.mxu0 %v2561
    %3305 = vmatprep.subr.mxu0 %v2558
    %3306 = vmatpush1.msra.mxu0 %v2557
    %3307 = vmatprep.subr.mxu0 %v2554
    %3308 = vmatpush1.msra.mxu0 %v2553
    %3309 = vmatprep.subr.mxu0 %v2550
    %3310 = vmatpush1.msra.mxu0 %v2549
    %3311 = vmatprep.subr.mxu0 %v2546
    %3312 = vmatpush1.msra.mxu0 %v2545
    %3313 = vmatprep.subr.mxu0 %v2542
    %3314 = vmatpush1.msra.mxu0 %v2541
    %3315 = vmatprep.subr.mxu0 %v2538
    %3316 = vmatpush1.msra.mxu0 %v2537
    %3317 = vmatprep.subr.mxu0 %v2534
    %3318 = vmatpush1.msra.mxu0 %v2533
    %3319 = vmatprep.subr.mxu0 %v2530
    %3320 = vmatpush1.msra.mxu0 %v2529
    %3321 = vmatprep.subr.mxu0 0.0
    %3322 = vmatpush2.msra.mxu0 0.0
    %3323 = vmatprep.subr.mxu0 0.0
    %3324 = vmatpush2.msra.mxu0 0.0
    %3325 = vmatprep.subr.mxu0 0.0
    %3326 = vmatpush2.msra.mxu0 0.0
    %3327 = vmatprep.subr.mxu0 0.0
    %3328 = vmatpush2.msra.mxu0 0.0
    %3329 = vmatprep.subr.mxu0 0.0
    %3330 = vmatpush2.msra.mxu0 0.0
    %3331 = vmatprep.subr.mxu0 0.0
    %3332 = vmatpush2.msra.mxu0 0.0
    %3333 = vmatprep.subr.mxu0 0.0
    %3334 = vmatpush2.msra.mxu0 0.0
    %3335 = vmatprep.subr.mxu0 0.0
    %3336 = vmatpush2.msra.mxu0 0.0
    %3337 = vmatprep.subr.mxu0 0.0
    %3338 = vmatpush2.msra.mxu0 0.0
    %3339 = vmatprep.subr.mxu0 0.0
    %3340 = vmatpush2.msra.mxu0 0.0
    %3341 = vmatprep.subr.mxu0 0.0
    %3342 = vmatpush2.msra.mxu0 0.0
    %3343 = vmatprep.subr.mxu0 0.0
    %3344 = vmatpush2.msra.mxu0 0.0
    %3345 = vmatprep.subr.mxu0 0.0
    %3346 = vmatpush2.msra.mxu0 0.0
    %3347 = vmatprep.subr.mxu0 0.0
    %3348 = vmatpush2.msra.mxu0 0.0
    %3349 = vmatprep.subr.mxu0 0.0
    %3350 = vmatpush2.msra.mxu0 0.0
    %3351 = vmatprep.subr.mxu0 0.0
    %3352 = vmatpush2.msra.mxu0 0.0
    %3353 = vmatprep.mubr.f32.mxu0 0.0
    %3354 = vmatmul.mubr.f32.gmra.mxu0 %v3284
    %v3355 = vpop.f32.mrf.mxu0
    %v3356 = vadd.f32 0.0, %v3355
    %v3357 = vpop.f32.mrf.mxu0
    %v3358 = vadd.f32 0.0, %v3357
    %3359 = vdwg.mxu0
    %3360 = vmatprep.subr.mxu0 %v2592
    %3361 = vmatpush1.msra.mxu0 %v2591
    %3362 = vmatprep.subr.mxu0 %v2588
    %3363 = vmatpush1.msra.mxu0 %v2587
    %3364 = vmatprep.subr.mxu0 %v2584
    %3365 = vmatpush1.msra.mxu0 %v2583
    %3366 = vmatprep.subr.mxu0 %v2580
    %3367 = vmatpush1.msra.mxu0 %v2579
    %3368 = vmatprep.subr.mxu0 %v2576
    %3369 = vmatpush1.msra.mxu0 %v2575
    %3370 = vmatprep.subr.mxu0 %v2572
    %3371 = vmatpush1.msra.mxu0 %v2571
    %3372 = vmatprep.subr.mxu0 %v2568
    %3373 = vmatpush1.msra.mxu0 %v2567
    %3374 = vmatprep.subr.mxu0 %v2564
    %3375 = vmatpush1.msra.mxu0 %v2563
    %3376 = vmatprep.subr.mxu0 %v2560
    %3377 = vmatpush1.msra.mxu0 %v2559
    %3378 = vmatprep.subr.mxu0 %v2556
    %3379 = vmatpush1.msra.mxu0 %v2555
    %3380 = vmatprep.subr.mxu0 %v2552
    %3381 = vmatpush1.msra.mxu0 %v2551
    %3382 = vmatprep.subr.mxu0 %v2548
    %3383 = vmatpush1.msra.mxu0 %v2547
    %3384 = vmatprep.subr.mxu0 %v2544
    %3385 = vmatpush1.msra.mxu0 %v2543
    %3386 = vmatprep.subr.mxu0 %v2540
    %3387 = vmatpush1.msra.mxu0 %v2539
    %3388 = vmatprep.subr.mxu0 %v2536
    %3389 = vmatpush1.msra.mxu0 %v2535
    %3390 = vmatprep.subr.mxu0 %v2532
    %3391 = vmatpush1.msra.mxu0 %v2531
    %3392 = vmatprep.subr.mxu0 0.0
    %3393 = vmatpush2.msra.mxu0 0.0
    %3394 = vmatprep.subr.mxu0 0.0
    %3395 = vmatpush2.msra.mxu0 0.0
    %3396 = vmatprep.subr.mxu0 0.0
    %3397 = vmatpush2.msra.mxu0 0.0
    %3398 = vmatprep.subr.mxu0 0.0
    %3399 = vmatpush2.msra.mxu0 0.0
    %3400 = vmatprep.subr.mxu0 0.0
    %3401 = vmatpush2.msra.mxu0 0.0
    %3402 = vmatprep.subr.mxu0 0.0
    %3403 = vmatpush2.msra.mxu0 0.0
    %3404 = vmatprep.subr.mxu0 0.0
    %3405 = vmatpush2.msra.mxu0 0.0
    %3406 = vmatprep.subr.mxu0 0.0
    %3407 = vmatpush2.msra.mxu0 0.0
    %3408 = vmatprep.subr.mxu0 0.0
    %3409 = vmatpush2.msra.mxu0 0.0
    %3410 = vmatprep.subr.mxu0 0.0
    %3411 = vmatpush2.msra.mxu0 0.0
    %3412 = vmatprep.subr.mxu0 0.0
    %3413 = vmatpush2.msra.mxu0 0.0
    %3414 = vmatprep.subr.mxu0 0.0
    %3415 = vmatpush2.msra.mxu0 0.0
    %3416 = vmatprep.subr.mxu0 0.0
    %3417 = vmatpush2.msra.mxu0 0.0
    %3418 = vmatprep.subr.mxu0 0.0
    %3419 = vmatpush2.msra.mxu0 0.0
    %3420 = vmatprep.subr.mxu0 0.0
    %3421 = vmatpush2.msra.mxu0 0.0
    %3422 = vmatprep.subr.mxu0 0.0
    %3423 = vmatpush2.msra.mxu0 0.0
    %3424 = vmatprep.mubr.f32.mxu0 0.0
    %3425 = vmatmul.mubr.f32.gmra.mxu0 %v3284
    %v3426 = vpop.f32.mrf.mxu0
    %v3427 = vadd.f32 0.0, %v3426
    %v3428 = vpop.f32.mrf.mxu0
    %v3429 = vadd.f32 0.0, %v3428
    %3430 = vdwg.mxu0
    %v3431 = vadd.f32 %v3285, %v3356
    %v3432 = vadd.f32 %v3286, %v3358
    %v3433 = vadd.f32 %v3287, %v3427
    %v3434 = vadd.f32 %v3288, %v3429
    %v3435 = vxor.u32 %v3431, 2147483648
    %v3436 = vmul.f32 %v3435, 1.442695
    %v3437 = vpow.pop %v3436
    %v3438 = vadd.f32 %v3437, 1.0
    %v3439 = vrcp.pop %v3438
    %v3440 = vmul.f32 1.0, %v3439
    %v3441 = vxor.u32 %v3432, 2147483648
    %v3442 = vmul.f32 %v3441, 1.442695
    %v3443 = vpow.pop %v3442
    %v3444 = vadd.f32 %v3443, 1.0
    %v3445 = vrcp.pop %v3444
    %v3446 = vmul.f32 1.0, %v3445
    %v3447 = vtanh.pop %v3433
    %v3448 = vxor.u32 %v3434, 2147483648
    %v3449 = vmul.f32 %v3448, 1.442695
    %v3450 = vpow.pop %v3449
    %v3451 = vadd.f32 %v3450, 1.0
    %v3452 = vrcp.pop %v3451
    %v3453 = vmul.f32 1.0, %v3452
    %v3454 = vmul.f32 %v3446, %v3282
    %v3455 = vmul.f32 %v3440, %v3447
    %v3456 = vadd.f32 %v3454, %v3455
    %v3457 = vtanh.pop %v3456
    %v3458 = vmul.f32 %v3453, %v3457
    %v3459 = vld [vmem:[#allocation3 + $0xa0] sm:$0xff]
    %v3460 = vld [vmem:[#allocation3 + $0xa8] sm:$0xff]
    %v3461 = vld [vmem:[#allocation3 + $0xb0] sm:$0xff]
    %v3462 = vld [vmem:[#allocation3 + $0xb8] sm:$0xff]
    %3463 = vmatprep.subr.mxu0 %v2590
    %3464 = vmatpush1.msra.mxu0 %v2589
    %3465 = vmatprep.subr.mxu0 %v2586
    %3466 = vmatpush1.msra.mxu0 %v2585
    %3467 = vmatprep.subr.mxu0 %v2582
    %3468 = vmatpush1.msra.mxu0 %v2581
    %3469 = vmatprep.subr.mxu0 %v2578
    %3470 = vmatpush1.msra.mxu0 %v2577
    %3471 = vmatprep.subr.mxu0 %v2574
    %3472 = vmatpush1.msra.mxu0 %v2573
    %3473 = vmatprep.subr.mxu0 %v2570
    %3474 = vmatpush1.msra.mxu0 %v2569
    %3475 = vmatprep.subr.mxu0 %v2566
    %3476 = vmatpush1.msra.mxu0 %v2565
    %3477 = vmatprep.subr.mxu0 %v2562
    %3478 = vmatpush1.msra.mxu0 %v2561
    %3479 = vmatprep.subr.mxu0 %v2558
    %3480 = vmatpush1.msra.mxu0 %v2557
    %3481 = vmatprep.subr.mxu0 %v2554
    %3482 = vmatpush1.msra.mxu0 %v2553
    %3483 = vmatprep.subr.mxu0 %v2550
    %3484 = vmatpush1.msra.mxu0 %v2549
    %3485 = vmatprep.subr.mxu0 %v2546
    %3486 = vmatpush1.msra.mxu0 %v2545
    %3487 = vmatprep.subr.mxu0 %v2542
    %3488 = vmatpush1.msra.mxu0 %v2541
    %3489 = vmatprep.subr.mxu0 %v2538
    %3490 = vmatpush1.msra.mxu0 %v2537
    %3491 = vmatprep.subr.mxu0 %v2534
    %3492 = vmatpush1.msra.mxu0 %v2533
    %3493 = vmatprep.subr.mxu0 %v2530
    %3494 = vmatpush1.msra.mxu0 %v2529
    %3495 = vmatprep.subr.mxu0 0.0
    %3496 = vmatpush2.msra.mxu0 0.0
    %3497 = vmatprep.subr.mxu0 0.0
    %3498 = vmatpush2.msra.mxu0 0.0
    %3499 = vmatprep.subr.mxu0 0.0
    %3500 = vmatpush2.msra.mxu0 0.0
    %3501 = vmatprep.subr.mxu0 0.0
    %3502 = vmatpush2.msra.mxu0 0.0
    %3503 = vmatprep.subr.mxu0 0.0
    %3504 = vmatpush2.msra.mxu0 0.0
    %3505 = vmatprep.subr.mxu0 0.0
    %3506 = vmatpush2.msra.mxu0 0.0
    %3507 = vmatprep.subr.mxu0 0.0
    %3508 = vmatpush2.msra.mxu0 0.0
    %3509 = vmatprep.subr.mxu0 0.0
    %3510 = vmatpush2.msra.mxu0 0.0
    %3511 = vmatprep.subr.mxu0 0.0
    %3512 = vmatpush2.msra.mxu0 0.0
    %3513 = vmatprep.subr.mxu0 0.0
    %3514 = vmatpush2.msra.mxu0 0.0
    %3515 = vmatprep.subr.mxu0 0.0
    %3516 = vmatpush2.msra.mxu0 0.0
    %3517 = vmatprep.subr.mxu0 0.0
    %3518 = vmatpush2.msra.mxu0 0.0
    %3519 = vmatprep.subr.mxu0 0.0
    %3520 = vmatpush2.msra.mxu0 0.0
    %3521 = vmatprep.subr.mxu0 0.0
    %3522 = vmatpush2.msra.mxu0 0.0
    %3523 = vmatprep.subr.mxu0 0.0
    %3524 = vmatpush2.msra.mxu0 0.0
    %3525 = vmatprep.subr.mxu0 0.0
    %3526 = vmatpush2.msra.mxu0 0.0
    %3527 = vmatprep.mubr.f32.mxu0 0.0
    %3528 = vmatmul.mubr.f32.gmra.mxu0 %v3458
    %v3529 = vpop.f32.mrf.mxu0
    %v3530 = vadd.f32 0.0, %v3529
    %v3531 = vpop.f32.mrf.mxu0
    %v3532 = vadd.f32 0.0, %v3531
    %3533 = vdwg.mxu0
    %3534 = vmatprep.subr.mxu0 %v2592
    %3535 = vmatpush1.msra.mxu0 %v2591
    %3536 = vmatprep.subr.mxu0 %v2588
    %3537 = vmatpush1.msra.mxu0 %v2587
    %3538 = vmatprep.subr.mxu0 %v2584
    %3539 = vmatpush1.msra.mxu0 %v2583
    %3540 = vmatprep.subr.mxu0 %v2580
    %3541 = vmatpush1.msra.mxu0 %v2579
    %3542 = vmatprep.subr.mxu0 %v2576
    %3543 = vmatpush1.msra.mxu0 %v2575
    %3544 = vmatprep.subr.mxu0 %v2572
    %3545 = vmatpush1.msra.mxu0 %v2571
    %3546 = vmatprep.subr.mxu0 %v2568
    %3547 = vmatpush1.msra.mxu0 %v2567
    %3548 = vmatprep.subr.mxu0 %v2564
    %3549 = vmatpush1.msra.mxu0 %v2563
    %3550 = vmatprep.subr.mxu0 %v2560
    %3551 = vmatpush1.msra.mxu0 %v2559
    %3552 = vmatprep.subr.mxu0 %v2556
    %3553 = vmatpush1.msra.mxu0 %v2555
    %3554 = vmatprep.subr.mxu0 %v2552
    %3555 = vmatpush1.msra.mxu0 %v2551
    %3556 = vmatprep.subr.mxu0 %v2548
    %3557 = vmatpush1.msra.mxu0 %v2547
    %3558 = vmatprep.subr.mxu0 %v2544
    %3559 = vmatpush1.msra.mxu0 %v2543
    %3560 = vmatprep.subr.mxu0 %v2540
    %3561 = vmatpush1.msra.mxu0 %v2539
    %3562 = vmatprep.subr.mxu0 %v2536
    %3563 = vmatpush1.msra.mxu0 %v2535
    %3564 = vmatprep.subr.mxu0 %v2532
    %3565 = vmatpush1.msra.mxu0 %v2531
    %3566 = vmatprep.subr.mxu0 0.0
    %3567 = vmatpush2.msra.mxu0 0.0
    %3568 = vmatprep.subr.mxu0 0.0
    %3569 = vmatpush2.msra.mxu0 0.0
    %3570 = vmatprep.subr.mxu0 0.0
    %3571 = vmatpush2.msra.mxu0 0.0
    %3572 = vmatprep.subr.mxu0 0.0
    %3573 = vmatpush2.msra.mxu0 0.0
    %3574 = vmatprep.subr.mxu0 0.0
    %3575 = vmatpush2.msra.mxu0 0.0
    %3576 = vmatprep.subr.mxu0 0.0
    %3577 = vmatpush2.msra.mxu0 0.0
    %3578 = vmatprep.subr.mxu0 0.0
    %3579 = vmatpush2.msra.mxu0 0.0
    %3580 = vmatprep.subr.mxu0 0.0
    %3581 = vmatpush2.msra.mxu0 0.0
    %3582 = vmatprep.subr.mxu0 0.0
    %3583 = vmatpush2.msra.mxu0 0.0
    %3584 = vmatprep.subr.mxu0 0.0
    %3585 = vmatpush2.msra.mxu0 0.0
    %3586 = vmatprep.subr.mxu0 0.0
    %3587 = vmatpush2.msra.mxu0 0.0
    %3588 = vmatprep.subr.mxu0 0.0
    %3589 = vmatpush2.msra.mxu0 0.0
    %3590 = vmatprep.subr.mxu0 0.0
    %3591 = vmatpush2.msra.mxu0 0.0
    %3592 = vmatprep.subr.mxu0 0.0
    %3593 = vmatpush2.msra.mxu0 0.0
    %3594 = vmatprep.subr.mxu0 0.0
    %3595 = vmatpush2.msra.mxu0 0.0
    %3596 = vmatprep.subr.mxu0 0.0
    %3597 = vmatpush2.msra.mxu0 0.0
    %3598 = vmatprep.mubr.f32.mxu0 0.0
    %3599 = vmatmul.mubr.f32.gmra.mxu0 %v3458
    %v3600 = vpop.f32.mrf.mxu0
    %v3601 = vadd.f32 0.0, %v3600
    %v3602 = vpop.f32.mrf.mxu0
    %v3603 = vadd.f32 0.0, %v3602
    %3604 = vdwg.mxu0
    %v3605 = vadd.f32 %v3459, %v3530
    %v3606 = vadd.f32 %v3460, %v3532
    %v3607 = vadd.f32 %v3461, %v3601
    %v3608 = vadd.f32 %v3462, %v3603
    %v3609 = vxor.u32 %v3605, 2147483648
    %v3610 = vmul.f32 %v3609, 1.442695
    %v3611 = vpow.pop %v3610
    %v3612 = vadd.f32 %v3611, 1.0
    %v3613 = vrcp.pop %v3612
    %v3614 = vmul.f32 1.0, %v3613
    %v3615 = vxor.u32 %v3606, 2147483648
    %v3616 = vmul.f32 %v3615, 1.442695
    %v3617 = vpow.pop %v3616
    %v3618 = vadd.f32 %v3617, 1.0
    %v3619 = vrcp.pop %v3618
    %v3620 = vmul.f32 1.0, %v3619
    %v3621 = vtanh.pop %v3607
    %v3622 = vxor.u32 %v3608, 2147483648
    %v3623 = vmul.f32 %v3622, 1.442695
    %v3624 = vpow.pop %v3623
    %v3625 = vadd.f32 %v3624, 1.0
    %v3626 = vrcp.pop %v3625
    %v3627 = vmul.f32 1.0, %v3626
    %v3628 = vmul.f32 %v3620, %v3456
    %v3629 = vmul.f32 %v3614, %v3621
    %v3630 = vadd.f32 %v3628, %v3629
    %v3631 = vtanh.pop %v3630
    %v3632 = vmul.f32 %v3627, %v3631
    %v3633 = vld [vmem:[#allocation3 + $0xc0] sm:$0xff]
    %v3634 = vld [vmem:[#allocation3 + $0xc8] sm:$0xff]
    %v3635 = vld [vmem:[#allocation3 + $0xd0] sm:$0xff]
    %v3636 = vld [vmem:[#allocation3 + $0xd8] sm:$0xff]
    %3637 = vmatprep.subr.mxu0 %v2590
    %3638 = vmatpush1.msra.mxu0 %v2589
    %3639 = vmatprep.subr.mxu0 %v2586
    %3640 = vmatpush1.msra.mxu0 %v2585
    %3641 = vmatprep.subr.mxu0 %v2582
    %3642 = vmatpush1.msra.mxu0 %v2581
    %3643 = vmatprep.subr.mxu0 %v2578
    %3644 = vmatpush1.msra.mxu0 %v2577
    %3645 = vmatprep.subr.mxu0 %v2574
    %3646 = vmatpush1.msra.mxu0 %v2573
    %3647 = vmatprep.subr.mxu0 %v2570
    %3648 = vmatpush1.msra.mxu0 %v2569
    %3649 = vmatprep.subr.mxu0 %v2566
    %3650 = vmatpush1.msra.mxu0 %v2565
    %3651 = vmatprep.subr.mxu0 %v2562
    %3652 = vmatpush1.msra.mxu0 %v2561
    %3653 = vmatprep.subr.mxu0 %v2558
    %3654 = vmatpush1.msra.mxu0 %v2557
    %3655 = vmatprep.subr.mxu0 %v2554
    %3656 = vmatpush1.msra.mxu0 %v2553
    %3657 = vmatprep.subr.mxu0 %v2550
    %3658 = vmatpush1.msra.mxu0 %v2549
    %3659 = vmatprep.subr.mxu0 %v2546
    %3660 = vmatpush1.msra.mxu0 %v2545
    %3661 = vmatprep.subr.mxu0 %v2542
    %3662 = vmatpush1.msra.mxu0 %v2541
    %3663 = vmatprep.subr.mxu0 %v2538
    %3664 = vmatpush1.msra.mxu0 %v2537
    %3665 = vmatprep.subr.mxu0 %v2534
    %3666 = vmatpush1.msra.mxu0 %v2533
    %3667 = vmatprep.subr.mxu0 %v2530
    %3668 = vmatpush1.msra.mxu0 %v2529
    %3669 = vmatprep.subr.mxu0 0.0
    %3670 = vmatpush2.msra.mxu0 0.0
    %3671 = vmatprep.subr.mxu0 0.0
    %3672 = vmatpush2.msra.mxu0 0.0
    %3673 = vmatprep.subr.mxu0 0.0
    %3674 = vmatpush2.msra.mxu0 0.0
    %3675 = vmatprep.subr.mxu0 0.0
    %3676 = vmatpush2.msra.mxu0 0.0
    %3677 = vmatprep.subr.mxu0 0.0
    %3678 = vmatpush2.msra.mxu0 0.0
    %3679 = vmatprep.subr.mxu0 0.0
    %3680 = vmatpush2.msra.mxu0 0.0
    %3681 = vmatprep.subr.mxu0 0.0
    %3682 = vmatpush2.msra.mxu0 0.0
    %3683 = vmatprep.subr.mxu0 0.0
    %3684 = vmatpush2.msra.mxu0 0.0
    %3685 = vmatprep.subr.mxu0 0.0
    %3686 = vmatpush2.msra.mxu0 0.0
    %3687 = vmatprep.subr.mxu0 0.0
    %3688 = vmatpush2.msra.mxu0 0.0
    %3689 = vmatprep.subr.mxu0 0.0
    %3690 = vmatpush2.msra.mxu0 0.0
    %3691 = vmatprep.subr.mxu0 0.0
    %3692 = vmatpush2.msra.mxu0 0.0
    %3693 = vmatprep.subr.mxu0 0.0
    %3694 = vmatpush2.msra.mxu0 0.0
    %3695 = vmatprep.subr.mxu0 0.0
    %3696 = vmatpush2.msra.mxu0 0.0
    %3697 = vmatprep.subr.mxu0 0.0
    %3698 = vmatpush2.msra.mxu0 0.0
    %3699 = vmatprep.subr.mxu0 0.0
    %3700 = vmatpush2.msra.mxu0 0.0
    %3701 = vmatprep.mubr.f32.mxu0 0.0
    %3702 = vmatmul.mubr.f32.gmra.mxu0 %v3632
    %v3703 = vpop.f32.mrf.mxu0
    %v3704 = vadd.f32 0.0, %v3703
    %v3705 = vpop.f32.mrf.mxu0
    %v3706 = vadd.f32 0.0, %v3705
    %3707 = vdwg.mxu0
    %3708 = vmatprep.subr.mxu0 %v2592
    %3709 = vmatpush1.msra.mxu0 %v2591
    %3710 = vmatprep.subr.mxu0 %v2588
    %3711 = vmatpush1.msra.mxu0 %v2587
    %3712 = vmatprep.subr.mxu0 %v2584
    %3713 = vmatpush1.msra.mxu0 %v2583
    %3714 = vmatprep.subr.mxu0 %v2580
    %3715 = vmatpush1.msra.mxu0 %v2579
    %3716 = vmatprep.subr.mxu0 %v2576
    %3717 = vmatpush1.msra.mxu0 %v2575
    %3718 = vmatprep.subr.mxu0 %v2572
    %3719 = vmatpush1.msra.mxu0 %v2571
    %3720 = vmatprep.subr.mxu0 %v2568
    %3721 = vmatpush1.msra.mxu0 %v2567
    %3722 = vmatprep.subr.mxu0 %v2564
    %3723 = vmatpush1.msra.mxu0 %v2563
    %3724 = vmatprep.subr.mxu0 %v2560
    %3725 = vmatpush1.msra.mxu0 %v2559
    %3726 = vmatprep.subr.mxu0 %v2556
    %3727 = vmatpush1.msra.mxu0 %v2555
    %3728 = vmatprep.subr.mxu0 %v2552
    %3729 = vmatpush1.msra.mxu0 %v2551
    %3730 = vmatprep.subr.mxu0 %v2548
    %3731 = vmatpush1.msra.mxu0 %v2547
    %3732 = vmatprep.subr.mxu0 %v2544
    %3733 = vmatpush1.msra.mxu0 %v2543
    %3734 = vmatprep.subr.mxu0 %v2540
    %3735 = vmatpush1.msra.mxu0 %v2539
    %3736 = vmatprep.subr.mxu0 %v2536
    %3737 = vmatpush1.msra.mxu0 %v2535
    %3738 = vmatprep.subr.mxu0 %v2532
    %3739 = vmatpush1.msra.mxu0 %v2531
    %3740 = vmatprep.subr.mxu0 0.0
    %3741 = vmatpush2.msra.mxu0 0.0
    %3742 = vmatprep.subr.mxu0 0.0
    %3743 = vmatpush2.msra.mxu0 0.0
    %3744 = vmatprep.subr.mxu0 0.0
    %3745 = vmatpush2.msra.mxu0 0.0
    %3746 = vmatprep.subr.mxu0 0.0
    %3747 = vmatpush2.msra.mxu0 0.0
    %3748 = vmatprep.subr.mxu0 0.0
    %3749 = vmatpush2.msra.mxu0 0.0
    %3750 = vmatprep.subr.mxu0 0.0
    %3751 = vmatpush2.msra.mxu0 0.0
    %3752 = vmatprep.subr.mxu0 0.0
    %3753 = vmatpush2.msra.mxu0 0.0
    %3754 = vmatprep.subr.mxu0 0.0
    %3755 = vmatpush2.msra.mxu0 0.0
    %3756 = vmatprep.subr.mxu0 0.0
    %3757 = vmatpush2.msra.mxu0 0.0
    %3758 = vmatprep.subr.mxu0 0.0
    %3759 = vmatpush2.msra.mxu0 0.0
    %3760 = vmatprep.subr.mxu0 0.0
    %3761 = vmatpush2.msra.mxu0 0.0
    %3762 = vmatprep.subr.mxu0 0.0
    %3763 = vmatpush2.msra.mxu0 0.0
    %3764 = vmatprep.subr.mxu0 0.0
    %3765 = vmatpush2.msra.mxu0 0.0
    %3766 = vmatprep.subr.mxu0 0.0
    %3767 = vmatpush2.msra.mxu0 0.0
    %3768 = vmatprep.subr.mxu0 0.0
    %3769 = vmatpush2.msra.mxu0 0.0
    %3770 = vmatprep.subr.mxu0 0.0
    %3771 = vmatpush2.msra.mxu0 0.0
    %3772 = vmatprep.mubr.f32.mxu0 0.0
    %3773 = vmatmul.mubr.f32.gmra.mxu0 %v3632
    %v3774 = vpop.f32.mrf.mxu0
    %v3775 = vadd.f32 0.0, %v3774
    %v3776 = vpop.f32.mrf.mxu0
    %v3777 = vadd.f32 0.0, %v3776
    %3778 = vdwg.mxu0
    %v3779 = vadd.f32 %v3633, %v3704
    %v3780 = vadd.f32 %v3634, %v3706
    %v3781 = vadd.f32 %v3635, %v3775
    %v3782 = vadd.f32 %v3636, %v3777
    %v3783 = vxor.u32 %v3779, 2147483648
    %v3784 = vmul.f32 %v3783, 1.442695
    %v3785 = vpow.pop %v3784
    %v3786 = vadd.f32 %v3785, 1.0
    %v3787 = vrcp.pop %v3786
    %v3788 = vmul.f32 1.0, %v3787
    %v3789 = vxor.u32 %v3780, 2147483648
    %v3790 = vmul.f32 %v3789, 1.442695
    %v3791 = vpow.pop %v3790
    %v3792 = vadd.f32 %v3791, 1.0
    %v3793 = vrcp.pop %v3792
    %v3794 = vmul.f32 1.0, %v3793
    %v3795 = vtanh.pop %v3781
    %v3796 = vxor.u32 %v3782, 2147483648
    %v3797 = vmul.f32 %v3796, 1.442695
    %v3798 = vpow.pop %v3797
    %v3799 = vadd.f32 %v3798, 1.0
    %v3800 = vrcp.pop %v3799
    %v3801 = vmul.f32 1.0, %v3800
    %v3802 = vmul.f32 %v3794, %v3630
    %v3803 = vmul.f32 %v3788, %v3795
    %v3804 = vadd.f32 %v3802, %v3803
    %v3805 = vtanh.pop %v3804
    %v3806 = vmul.f32 %v3801, %v3805
    %v3807 = vld [vmem:[#allocation3 + $0xe0] sm:$0xff]
    %v3808 = vld [vmem:[#allocation3 + $0xe8] sm:$0xff]
    %v3809 = vld [vmem:[#allocation3 + $0xf0] sm:$0xff]
    %v3810 = vld [vmem:[#allocation3 + $0xf8] sm:$0xff]
    %3811 = vmatprep.subr.mxu0 %v2590
    %3812 = vmatpush1.msra.mxu0 %v2589
    %3813 = vmatprep.subr.mxu0 %v2586
    %3814 = vmatpush1.msra.mxu0 %v2585
    %3815 = vmatprep.subr.mxu0 %v2582
    %3816 = vmatpush1.msra.mxu0 %v2581
    %3817 = vmatprep.subr.mxu0 %v2578
    %3818 = vmatpush1.msra.mxu0 %v2577
    %3819 = vmatprep.subr.mxu0 %v2574
    %3820 = vmatpush1.msra.mxu0 %v2573
    %3821 = vmatprep.subr.mxu0 %v2570
    %3822 = vmatpush1.msra.mxu0 %v2569
    %3823 = vmatprep.subr.mxu0 %v2566
    %3824 = vmatpush1.msra.mxu0 %v2565
    %3825 = vmatprep.subr.mxu0 %v2562
    %3826 = vmatpush1.msra.mxu0 %v2561
    %3827 = vmatprep.subr.mxu0 %v2558
    %3828 = vmatpush1.msra.mxu0 %v2557
    %3829 = vmatprep.subr.mxu0 %v2554
    %3830 = vmatpush1.msra.mxu0 %v2553
    %3831 = vmatprep.subr.mxu0 %v2550
    %3832 = vmatpush1.msra.mxu0 %v2549
    %3833 = vmatprep.subr.mxu0 %v2546
    %3834 = vmatpush1.msra.mxu0 %v2545
    %3835 = vmatprep.subr.mxu0 %v2542
    %3836 = vmatpush1.msra.mxu0 %v2541
    %3837 = vmatprep.subr.mxu0 %v2538
    %3838 = vmatpush1.msra.mxu0 %v2537
    %3839 = vmatprep.subr.mxu0 %v2534
    %3840 = vmatpush1.msra.mxu0 %v2533
    %3841 = vmatprep.subr.mxu0 %v2530
    %3842 = vmatpush1.msra.mxu0 %v2529
    %3843 = vmatprep.subr.mxu0 0.0
    %3844 = vmatpush2.msra.mxu0 0.0
    %3845 = vmatprep.subr.mxu0 0.0
    %3846 = vmatpush2.msra.mxu0 0.0
    %3847 = vmatprep.subr.mxu0 0.0
    %3848 = vmatpush2.msra.mxu0 0.0
    %3849 = vmatprep.subr.mxu0 0.0
    %3850 = vmatpush2.msra.mxu0 0.0
    %3851 = vmatprep.subr.mxu0 0.0
    %3852 = vmatpush2.msra.mxu0 0.0
    %3853 = vmatprep.subr.mxu0 0.0
    %3854 = vmatpush2.msra.mxu0 0.0
    %3855 = vmatprep.subr.mxu0 0.0
    %3856 = vmatpush2.msra.mxu0 0.0
    %3857 = vmatprep.subr.mxu0 0.0
    %3858 = vmatpush2.msra.mxu0 0.0
    %3859 = vmatprep.subr.mxu0 0.0
    %3860 = vmatpush2.msra.mxu0 0.0
    %3861 = vmatprep.subr.mxu0 0.0
    %3862 = vmatpush2.msra.mxu0 0.0
    %3863 = vmatprep.subr.mxu0 0.0
    %3864 = vmatpush2.msra.mxu0 0.0
    %3865 = vmatprep.subr.mxu0 0.0
    %3866 = vmatpush2.msra.mxu0 0.0
    %3867 = vmatprep.subr.mxu0 0.0
    %3868 = vmatpush2.msra.mxu0 0.0
    %3869 = vmatprep.subr.mxu0 0.0
    %3870 = vmatpush2.msra.mxu0 0.0
    %3871 = vmatprep.subr.mxu0 0.0
    %3872 = vmatpush2.msra.mxu0 0.0
    %3873 = vmatprep.subr.mxu0 0.0
    %3874 = vmatpush2.msra.mxu0 0.0
    %3875 = vmatprep.mubr.f32.mxu0 0.0
    %3876 = vmatmul.mubr.f32.gmra.mxu0 %v3806
    %v3877 = vpop.f32.mrf.mxu0
    %v3878 = vadd.f32 0.0, %v3877
    %v3879 = vpop.f32.mrf.mxu0
    %v3880 = vadd.f32 0.0, %v3879
    %3881 = vdwg.mxu0
    %3882 = vmatprep.subr.mxu0 %v2592
    %3883 = vmatpush1.msra.mxu0 %v2591
    %3884 = vmatprep.subr.mxu0 %v2588
    %3885 = vmatpush1.msra.mxu0 %v2587
    %3886 = vmatprep.subr.mxu0 %v2584
    %3887 = vmatpush1.msra.mxu0 %v2583
    %3888 = vmatprep.subr.mxu0 %v2580
    %3889 = vmatpush1.msra.mxu0 %v2579
    %3890 = vmatprep.subr.mxu0 %v2576
    %3891 = vmatpush1.msra.mxu0 %v2575
    %3892 = vmatprep.subr.mxu0 %v2572
    %3893 = vmatpush1.msra.mxu0 %v2571
    %3894 = vmatprep.subr.mxu0 %v2568
    %3895 = vmatpush1.msra.mxu0 %v2567
    %3896 = vmatprep.subr.mxu0 %v2564
    %3897 = vmatpush1.msra.mxu0 %v2563
    %3898 = vmatprep.subr.mxu0 %v2560
    %3899 = vmatpush1.msra.mxu0 %v2559
    %3900 = vmatprep.subr.mxu0 %v2556
    %3901 = vmatpush1.msra.mxu0 %v2555
    %3902 = vmatprep.subr.mxu0 %v2552
    %3903 = vmatpush1.msra.mxu0 %v2551
    %3904 = vmatprep.subr.mxu0 %v2548
    %3905 = vmatpush1.msra.mxu0 %v2547
    %3906 = vmatprep.subr.mxu0 %v2544
    %3907 = vmatpush1.msra.mxu0 %v2543
    %3908 = vmatprep.subr.mxu0 %v2540
    %3909 = vmatpush1.msra.mxu0 %v2539
    %3910 = vmatprep.subr.mxu0 %v2536
    %3911 = vmatpush1.msra.mxu0 %v2535
    %3912 = vmatprep.subr.mxu0 %v2532
    %3913 = vmatpush1.msra.mxu0 %v2531
    %3914 = vmatprep.subr.mxu0 0.0
    %3915 = vmatpush2.msra.mxu0 0.0
    %3916 = vmatprep.subr.mxu0 0.0
    %3917 = vmatpush2.msra.mxu0 0.0
    %3918 = vmatprep.subr.mxu0 0.0
    %3919 = vmatpush2.msra.mxu0 0.0
    %3920 = vmatprep.subr.mxu0 0.0
    %3921 = vmatpush2.msra.mxu0 0.0
    %3922 = vmatprep.subr.mxu0 0.0
    %3923 = vmatpush2.msra.mxu0 0.0
    %3924 = vmatprep.subr.mxu0 0.0
    %3925 = vmatpush2.msra.mxu0 0.0
    %3926 = vmatprep.subr.mxu0 0.0
    %3927 = vmatpush2.msra.mxu0 0.0
    %3928 = vmatprep.subr.mxu0 0.0
    %3929 = vmatpush2.msra.mxu0 0.0
    %3930 = vmatprep.subr.mxu0 0.0
    %3931 = vmatpush2.msra.mxu0 0.0
    %3932 = vmatprep.subr.mxu0 0.0
    %3933 = vmatpush2.msra.mxu0 0.0
    %3934 = vmatprep.subr.mxu0 0.0
    %3935 = vmatpush2.msra.mxu0 0.0
    %3936 = vmatprep.subr.mxu0 0.0
    %3937 = vmatpush2.msra.mxu0 0.0
    %3938 = vmatprep.subr.mxu0 0.0
    %3939 = vmatpush2.msra.mxu0 0.0
    %3940 = vmatprep.subr.mxu0 0.0
    %3941 = vmatpush2.msra.mxu0 0.0
    %3942 = vmatprep.subr.mxu0 0.0
    %3943 = vmatpush2.msra.mxu0 0.0
    %3944 = vmatprep.subr.mxu0 0.0
    %3945 = vmatpush2.msra.mxu0 0.0
    %3946 = vmatprep.mubr.f32.mxu0 0.0
    %3947 = vmatmul.mubr.f32.gmra.mxu0 %v3806
    %v3948 = vpop.f32.mrf.mxu0
    %v3949 = vadd.f32 0.0, %v3948
    %v3950 = vpop.f32.mrf.mxu0
    %v3951 = vadd.f32 0.0, %v3950
    %3952 = vdwg.mxu0
    %v3953 = vadd.f32 %v3807, %v3878
    %v3954 = vadd.f32 %v3808, %v3880
    %v3955 = vadd.f32 %v3809, %v3949
    %v3956 = vadd.f32 %v3810, %v3951
    %v3957 = vxor.u32 %v3953, 2147483648
    %v3958 = vmul.f32 %v3957, 1.442695
    %v3959 = vpow.pop %v3958
    %v3960 = vadd.f32 %v3959, 1.0
    %v3961 = vrcp.pop %v3960
    %v3962 = vmul.f32 1.0, %v3961
    %v3963 = vxor.u32 %v3954, 2147483648
    %v3964 = vmul.f32 %v3963, 1.442695
    %v3965 = vpow.pop %v3964
    %v3966 = vadd.f32 %v3965, 1.0
    %v3967 = vrcp.pop %v3966
    %v3968 = vmul.f32 1.0, %v3967
    %v3969 = vtanh.pop %v3955
    %v3970 = vxor.u32 %v3956, 2147483648
    %v3971 = vmul.f32 %v3970, 1.442695
    %v3972 = vpow.pop %v3971
    %v3973 = vadd.f32 %v3972, 1.0
    %v3974 = vrcp.pop %v3973
    %v3975 = vmul.f32 1.0, %v3974
    %v3976 = vmul.f32 %v3968, %v3804
    %v3977 = vmul.f32 %v3962, %v3969
    %v3978 = vadd.f32 %v3976, %v3977
    %v3979 = vtanh.pop %v3978
    %v3980 = vmul.f32 %v3975, %v3979
    %v3981 = vld [vmem:[%s7] sm:$0xff]
    %v3982 = vld [vmem:[%s7 + $0x8] sm:$0xff]
    %v3983 = vld [vmem:[%s7 + $0x10] sm:$0xff]
    %v3984 = vld [vmem:[%s7 + $0x18] sm:$0xff]
    %v3985 = vld [vmem:[%s7 + $0x20] sm:$0xff]
    %v3986 = vld [vmem:[%s7 + $0x28] sm:$0xff]
    %v3987 = vld [vmem:[%s7 + $0x30] sm:$0xff]
    %v3988 = vld [vmem:[%s7 + $0x38] sm:$0xff]
    %v3989 = vld [vmem:[%s7 + $0x40] sm:$0xff]
    %v3990 = vld [vmem:[%s7 + $0x48] sm:$0xff]
    %v3991 = vld [vmem:[%s7 + $0x50] sm:$0xff]
    %v3992 = vld [vmem:[%s7 + $0x58] sm:$0xff]
    %v3993 = vld [vmem:[%s7 + $0x60] sm:$0xff]
    %v3994 = vld [vmem:[%s7 + $0x68] sm:$0xff]
    %v3995 = vld [vmem:[%s7 + $0x70] sm:$0xff]
    %v3996 = vld [vmem:[%s7 + $0x78] sm:$0xff]
    %v3997 = vld [vmem:[%s8] sm:$0x1]
    %v3999 = vlaneseq
    %v4000 = vshrl.u32 %v3999, 7
    %v4001 = vsub.s32 0, %v4000
    %v4002 = vrot.slane %v3997, %v4001
    %4004 = vmatprep.subr.mxu0 0.0
    %4005 = vmatpush1.msra.mxu0 %v3996
    %4006 = vmatprep.subr.mxu0 0.0
    %4007 = vmatpush1.msra.mxu0 %v3995
    %4008 = vmatprep.subr.mxu0 0.0
    %4009 = vmatpush1.msra.mxu0 %v3994
    %4010 = vmatprep.subr.mxu0 0.0
    %4011 = vmatpush1.msra.mxu0 %v3993
    %4012 = vmatprep.subr.mxu0 0.0
    %4013 = vmatpush1.msra.mxu0 %v3992
    %4014 = vmatprep.subr.mxu0 0.0
    %4015 = vmatpush1.msra.mxu0 %v3991
    %4016 = vmatprep.subr.mxu0 0.0
    %4017 = vmatpush1.msra.mxu0 %v3990
    %4018 = vmatprep.subr.mxu0 0.0
    %4019 = vmatpush1.msra.mxu0 %v3989
    %4020 = vmatprep.subr.mxu0 0.0
    %4021 = vmatpush1.msra.mxu0 %v3988
    %4022 = vmatprep.subr.mxu0 0.0
    %4023 = vmatpush1.msra.mxu0 %v3987
    %4024 = vmatprep.subr.mxu0 0.0
    %4025 = vmatpush1.msra.mxu0 %v3986
    %4026 = vmatprep.subr.mxu0 0.0
    %4027 = vmatpush1.msra.mxu0 %v3985
    %4028 = vmatprep.subr.mxu0 0.0
    %4029 = vmatpush1.msra.mxu0 %v3984
    %4030 = vmatprep.subr.mxu0 0.0
    %4031 = vmatpush1.msra.mxu0 %v3983
    %4032 = vmatprep.subr.mxu0 0.0
    %4033 = vmatpush1.msra.mxu0 %v3982
    %4034 = vmatprep.subr.mxu0 0.0
    %4035 = vmatpush1.msra.mxu0 %v3981
    %4036 = vmatprep.subr.mxu0 0.0
    %4037 = vmatpush2.msra.mxu0 0.0
    %4038 = vmatprep.subr.mxu0 0.0
    %4039 = vmatpush2.msra.mxu0 0.0
    %4040 = vmatprep.subr.mxu0 0.0
    %4041 = vmatpush2.msra.mxu0 0.0
    %4042 = vmatprep.subr.mxu0 0.0
    %4043 = vmatpush2.msra.mxu0 0.0
    %4044 = vmatprep.subr.mxu0 0.0
    %4045 = vmatpush2.msra.mxu0 0.0
    %4046 = vmatprep.subr.mxu0 0.0
    %4047 = vmatpush2.msra.mxu0 0.0
    %4048 = vmatprep.subr.mxu0 0.0
    %4049 = vmatpush2.msra.mxu0 0.0
    %4050 = vmatprep.subr.mxu0 0.0
    %4051 = vmatpush2.msra.mxu0 0.0
    %4052 = vmatprep.subr.mxu0 0.0
    %4053 = vmatpush2.msra.mxu0 0.0
    %4054 = vmatprep.subr.mxu0 0.0
    %4055 = vmatpush2.msra.mxu0 0.0
    %4056 = vmatprep.subr.mxu0 0.0
    %4057 = vmatpush2.msra.mxu0 0.0
    %4058 = vmatprep.subr.mxu0 0.0
    %4059 = vmatpush2.msra.mxu0 0.0
    %4060 = vmatprep.subr.mxu0 0.0
    %4061 = vmatpush2.msra.mxu0 0.0
    %4062 = vmatprep.subr.mxu0 0.0
    %4063 = vmatpush2.msra.mxu0 0.0
    %4064 = vmatprep.subr.mxu0 0.0
    %4065 = vmatpush2.msra.mxu0 0.0
    %4066 = vmatprep.subr.mxu0 0.0
    %4067 = vmatpush2.msra.mxu0 0.0
    %4068 = vmatprep.mubr.f32.mxu0 0.0
    %4069 = vmatmul.mubr.f32.gmra.mxu0 %v3980
    %v4070 = vpop.f32.mrf.mxu0
    %v4071 = vadd.f32 %v4002, %v4070
    %v4072 = vpop.f32.mrf.mxu0
    %4073 = vdwg.mxu0
    %vm4074 = vcmask 23552
    %v4075 = vsel %vm4074, %v4071, -inf
    %4076 = vmax.xlane.f32.xlu0 %v4075
    %v4077 = vpop.xlane.xlu0 %4076
    %v4078 = vsub.f32 %v4071, %v4077
    %v4079 = vmul.f32 %v4078, 1.442695
    %v4080 = vpow.pop %v4079
    %v4081 = vsel %vm4074, %v4080, 0.0
    %4082 = vadd.xlane.f32.xlu0 %v4081
    %v4083 = vpop.xlane.xlu0 %4082
    %v4084 = vlog2.pop %v4083
    %v4085 = vmul.f32 %v4084, 0.6931472
    %v4086 = vsub.f32 %v4078, %v4085
    %4087 = vst.msk [vmem:[%s9] sm:$0xff] %vm4074, %v4086
    // Predicated region
    $region50: #{lstm_classifier_forward.1} parent=1 // pred_check
      _
    $region51: #{lstm_classifier_forward.1} parent=1 // pred_check_branch
      %4089 = sbr.rel (0) target = $region53
    $region52: #{lstm_classifier_forward.1} parent=1 // pred_region
      _
    $region53: #{lstm_classifier_forward.1} parent=1 // pred_fallthru
      _
    // Predicated region
    $region54: #{lstm_classifier_forward.1} parent=1 // pred_check
      _
    $region55: #{lstm_classifier_forward.1} parent=1 // pred_check_branch
      %4091 = sbr.rel (0) target = $region57
    $region56: #{lstm_classifier_forward.1} parent=1 // pred_region
      _
    $region57: #{lstm_classifier_forward.1} parent=1 // pred_fallthru
      _
    %4092 = vsyncpa [#allocation5], 1
    %4093 = vsyncpa [#allocation7], 1

</llo_original>
